<compile_context>
chip_gen: v7x
topology: tpu7x:2x2x1
jax: 0.10.0
libtpu: 0.0.40
codegen_flags: <defaults>
</compile_context>

<pallas_src>
import functools

import numpy as np

import jax
import jax.numpy as jnp
from jax.experimental import pallas as pl
from jax.experimental.pallas import tpu as pltpu

KH = KW = 7
PAD = 3
BN_EPS = 1e-5


def _spatial_attention_kernel(x_ref, mask_ref, wv_ref, o_ref, *, W):
    """x_ref:    (Bt, C, HWp)          VMEM block (lane-dense, 128-padded spatial axis)
       mask_ref: (KH*KW, 1, HWp)       VMEM per-tap row*col validity masks (resident)
       wv_ref:   (KH*KW, 2, 4*Bt, 1)   VMEM per-tap / per-out-channel sublane weights
       o_ref:    (Bt, 2, HWp)          VMEM block"""
    Bt, C, HWp = x_ref.shape
    half = C // 2

    x = x_ref[...]
    real = x[:, :half, :]
    imag = x[:, half:, :]

    # Channel pooling (mean / max over channels, per complex part).
    avg_real = jnp.mean(real, axis=1)                     # (Bt, HWp)
    max_real = jnp.max(real, axis=1)
    avg_imag = jnp.mean(imag, axis=1)
    max_imag = jnp.max(imag, axis=1)

    # Pack the 4 pooled planes along the sublane axis (ci-major) so every tap
    # below is a single full-vreg roll + a handful of full-vreg VPU ops.
    slab = jnp.concatenate([avg_real, max_real, avg_imag, max_imag], axis=0)  # (4*Bt, HWp)

    acc0 = jnp.zeros_like(slab)
    acc1 = jnp.zeros_like(slab)

    # 7x7 tap loop: one static lane-roll of the packed slab per tap (XLU slot);
    # the precomputed mask zeroes taps whose source pixel falls outside the
    # image (column cross-over, row wrap-around, and the 128-pad region).
    for ky in range(KH):
        for kx in range(KW):
            t = ky * KW + kx
            s = ((PAD - ky) * W + (PAD - kx)) % HWp        # jnp.roll-style shift
            rolled = slab if s == 0 else pltpu.roll(slab, s, 1)
            tmp = mask_ref[t] * rolled                      # (1,HWp) * (4*Bt,HWp)
            w = wv_ref[t]                                   # (2, 4*Bt, 1)
            acc0 = acc0 + w[0] * tmp
            acc1 = acc1 + w[1] * tmp

    # Reduce over the 4 input-channel groups (Bt sublanes each).
    y0 = (acc0[0 * Bt:1 * Bt] + acc0[1 * Bt:2 * Bt]
          + acc0[2 * Bt:3 * Bt] + acc0[3 * Bt:4 * Bt])
    y1 = (acc1[0 * Bt:1 * Bt] + acc1[1 * Bt:2 * Bt]
          + acc1[2 * Bt:3 * Bt] + acc1[3 * Bt:4 * Bt])

    # BN scale is already folded into the weights; only ReLU + sigmoid remain.
    o_ref[:, 0, :] = jax.nn.sigmoid(jnp.maximum(y0, 0.0))
    o_ref[:, 1, :] = jax.nn.sigmoid(jnp.maximum(y1, 0.0))


def _tpu_config():
    try:
        dk = jax.devices()[0].device_kind.lower()
    except Exception:
        dk = ""
    dual_tc = ("v7" in dk) or ("v4" in dk) or ("v5p" in dk)   # dual-TensorCore chips
    small_vmem = "v7" in dk                                   # 64 MiB physical VMEM
    return dual_tc, small_vmem


def _pick_block_b(B, C, HWp, block_b):
    dual_tc, small_vmem = _tpu_config()
    if block_b is not None:
        bb = max(2, block_b + (block_b % 2))                  # even (full sublane tiles)
    else:
        bb = min(8, max(2, B + (B % 2)))
    budget = (24 << 20) if small_vmem else (48 << 20)

    def live_bytes(b):
        return (2 * b * C * HWp * 4          # double-buffered input block
                + 2 * b * 2 * HWp * 4        # double-buffered output block
                + 8 * 4 * b * HWp * 4)       # ~8 live packed f32 temporaries

    while bb > 2 and live_bytes(bb) > budget:
        bb -= 2
    if dual_tc and block_b is None:
        # keep >= 2 grid steps so both TensorCores get work from the 'parallel' axis
        while bb > 2 and pl.cdiv(B, bb) < 2:
            bb -= 2
    cap = (48 << 20) if small_vmem else (100 << 20)
    vmem_limit = int(max(32 << 20, min(live_bytes(bb) + (16 << 20), cap)))
    return bb, vmem_limit


def spatial_attention(x, w_real, w_imag, *, block_b=None):
    """x: (B, C, H, W) with C = 2*Cc (real channels first, imag channels last).
    w_real / w_imag: (1, 2, 7, 7) weights of the two real convs in ComplexConv2d."""
    B, C, H, W = x.shape
    assert C % 2 == 0
    HW = H * W
    HWp = pl.cdiv(HW, 128) * 128          # lane-dense spatial axis (unmasked vld/vst)

    bb, vmem_limit = _pick_block_b(B, C, HWp, block_b)
    assert bb % 2 == 0                    # packed slab has 4*bb (multiple of 8) sublanes
    Bp = pl.cdiv(B, bb) * bb

    # Fold the complex conv into one real conv with 4 input / 2 output channels.
    w_eff = jnp.concatenate(
        [
            jnp.concatenate([w_real[0], -w_imag[0]], axis=0)[None],  # (1, 4, 7, 7)
            jnp.concatenate([w_imag[0], w_real[0]], axis=0)[None],   # (1, 4, 7, 7)
        ],
        axis=0,
    ).astype(jnp.float32)                                            # (2, 4, 7, 7)

    # Fold eval-mode BN (running stats (0,1), identity affine) into the weights and
    # pre-broadcast per-tap / per-out-channel sublane vectors matching the ci-major
    # packed slab layout (rows: [avg_re]*bb, [max_re]*bb, [avg_im]*bb, [max_im]*bb).
    inv_std = (1.0 + BN_EPS) ** -0.5
    w_taps = (w_eff * inv_std).transpose(2, 3, 0, 1).reshape(KH * KW, 2, 4)
    wvec = jnp.repeat(w_taps, bb, axis=2)[..., None]                 # (49, 2, 4*bb, 1)

    # Per-tap validity masks (row mask * col mask * in-image mask), built once.
    idx = np.arange(HWp)
    yy, xx = idx // W, idx % W
    in_img = idx < HW
    masks_np = np.zeros((KH * KW, 1, HWp), np.float32)
    for ky in range(KH):
        for kx in range(KW):
            sy, sx = yy + (ky - PAD), xx + (kx - PAD)
            ok = in_img & (sy >= 0) & (sy < H) & (sx >= 0) & (sx < W)
            masks_np[ky * KW + kx, 0] = ok.astype(np.float32)
    masks = jnp.asarray(masks_np)

    xf = x.reshape(B, C, HW)
    xf = jnp.pad(xf, ((0, Bp - B), (0, 0), (0, HWp - HW)))

    kernel = functools.partial(_spatial_attention_kernel, W=W)
    out = pl.pallas_call(
        kernel,
        out_shape=jax.ShapeDtypeStruct((Bp, 2, HWp), jnp.float32),
        grid=(Bp // bb,),
        in_specs=[
            pl.BlockSpec((bb, C, HWp), lambda b: (b, 0, 0)),
            pl.BlockSpec((KH * KW, 1, HWp), lambda b: (0, 0, 0)),          # masks
            pl.BlockSpec((KH * KW, 2, 4 * bb, 1), lambda b: (0, 0, 0, 0)),  # weights
        ],
        out_specs=pl.BlockSpec((bb, 2, HWp), lambda b: (b, 0, 0)),
        compiler_params=pltpu.CompilerParams(
            dimension_semantics=("parallel",),
            vmem_limit_bytes=vmem_limit,
        ),
    )(xf, masks, wvec)

    out = out[:B, :, :HW].reshape(B, 2, H, W)
    return out, w_eff


def _reference(x, w_eff):
    """Pure-JAX reference with identical semantics (correctness check)."""
    half = x.shape[1] // 2
    real, imag = x[:, :half], x[:, half:]
    pooled = jnp.stack(
        [real.mean(1), real.max(1), imag.mean(1), imag.max(1)], axis=1
    )
    y = jax.lax.conv_general_dilated(
        pooled, w_eff, window_strides=(1, 1), padding=((PAD, PAD), (PAD, PAD)),
        dimension_numbers=("NCHW", "OIHW", "NCHW"))
    y = y / jnp.sqrt(1.0 + BN_EPS)
    y = jnp.maximum(y, 0.0)
    return jax.nn.sigmoid(y)


if __name__ == "__main__":
    key = jax.random.PRNGKey(0)
    k_x, k_r, k_i = jax.random.split(key, 3)

    B, C, H, W = 2, 4, 16, 16            # C = 2 real + 2 imag channels
    x = jax.random.normal(k_x, (B, C, H, W), jnp.float32)

    # ComplexConv2d(in=4, out=2, k=7, bias=False) -> two real Conv2d(2, 1, 7) weights,
    # deterministically initialized (kaiming-uniform-like bound).
    fan_in = 2 * KH * KW
    bound = (1.0 / fan_in) ** 0.5
    w_real = jax.random.uniform(k_r, (1, 2, KH, KW), jnp.float32, -bound, bound)
    w_imag = jax.random.uniform(k_i, (1, 2, KH, KW), jnp.float32, -bound, bound)

    out, w_eff = spatial_attention(x, w_real, w_imag)
    out = jax.block_until_ready(out)

    ref = _reference(x, w_eff)
    assert out.shape == (B, 2, H, W)
    err = float(jnp.abs(out - ref).max())
    assert jnp.allclose(out, ref, atol=2e-5, rtol=2e-5), err
    print("KERNEL_OK")
</pallas_src>

<mosaic_0001>
module attributes {stable_mosaic.version = 11 : i64} {
  func.func @_spatial_attention_kernel(%arg0: i32, %arg1: memref<2x4x256xf32, #tpu.memory_space<vmem>>, %arg2: memref<49x1x256xf32, #tpu.memory_space<vmem>>, %arg3: memref<49x2x8x1xf32, #tpu.memory_space<vmem>>, %arg4: memref<2x2x256xf32, #tpu.memory_space<vmem>>) attributes {dimension_semantics = [#tpu.dimension_semantics<parallel>], iteration_bounds = array<i64: 1>, scalar_prefetch = 0 : i64, scratch_operands = 0 : i64, tpu.core_type = #tpu.core_type<tc>, window_params = [{transform_indices = @transform_0, window_bounds = array<i64: 2, 4, 256>}, {pipeline_mode = #tpu.pipeline_mode<synchronous>, transform_indices = @transform_1, window_bounds = array<i64: 49, 1, 256>}, {pipeline_mode = #tpu.pipeline_mode<synchronous>, transform_indices = @transform_2, window_bounds = array<i64: 49, 2, 8, 1>}, {transform_indices = @transform_3, window_bounds = array<i64: 2, 2, 256>}]} {
    %c0 = arith.constant 0 : index
    %c0_0 = arith.constant 0 : index
    %c0_1 = arith.constant 0 : index
    %0 = vector.load %arg1[%c0, %c0_0, %c0_1] : memref<2x4x256xf32, #tpu.memory_space<vmem>>, vector<2x4x256xf32>
    %1 = vector.extract_strided_slice %0 {offsets = [0, 0, 0], sizes = [2, 2, 256], strides = [1, 1, 1]} : vector<2x4x256xf32> to vector<2x2x256xf32>
    %2 = vector.extract_strided_slice %0 {offsets = [0, 2, 0], sizes = [2, 2, 256], strides = [1, 1, 1]} : vector<2x4x256xf32> to vector<2x2x256xf32>
    %cst = arith.constant dense<0.000000e+00> : vector<2x256xf32>
    %3 = vector.multi_reduction <add>, %1, %cst [1] : vector<2x2x256xf32> to vector<2x256xf32>
    %cst_2 = arith.constant 2.000000e+00 : f32
    %4 = vector.broadcast %cst_2 : f32 to vector<2x256xf32>
    %5 = arith.divf %3, %4 : vector<2x256xf32>
    %cst_3 = arith.constant dense<0xFF800000> : vector<2x256xf32>
    %6 = vector.multi_reduction <maximumf>, %1, %cst_3 [1] : vector<2x2x256xf32> to vector<2x256xf32>
    %cst_4 = arith.constant dense<0.000000e+00> : vector<2x256xf32>
    %7 = vector.multi_reduction <add>, %2, %cst_4 [1] : vector<2x2x256xf32> to vector<2x256xf32>
    %cst_5 = arith.constant 2.000000e+00 : f32
    %8 = vector.broadcast %cst_5 : f32 to vector<2x256xf32>
    %9 = arith.divf %7, %8 : vector<2x256xf32>
    %cst_6 = arith.constant dense<0xFF800000> : vector<2x256xf32>
    %10 = vector.multi_reduction <maximumf>, %2, %cst_6 [1] : vector<2x2x256xf32> to vector<2x256xf32>
    %11 = tpu.concatenate %5, %6, %9, %10 in 0 : vector<2x256xf32>, vector<2x256xf32>, vector<2x256xf32>, vector<2x256xf32> -> vector<8x256xf32>
    %cst_7 = arith.constant 0.000000e+00 : f32
    %12 = vector.broadcast %cst_7 : f32 to vector<8x256xf32>
    %cst_8 = arith.constant 0.000000e+00 : f32
    %13 = vector.broadcast %cst_8 : f32 to vector<8x256xf32>
    %c51_i32 = arith.constant 51 : i32
    %14 = tpu.dynamic_rotate %11 by %c51_i32 dim 1 : vector<8x256xf32>, i32 -> vector<8x256xf32>
    %c0_9 = arith.constant 0 : index
    %c0_10 = arith.constant 0 : index
    %c0_11 = arith.constant 0 : index
    %15 = vector.load %arg2[%c0_9, %c0_10, %c0_11] : memref<49x1x256xf32, #tpu.memory_space<vmem>>, vector<1x1x256xf32>
    %16 = vector.shape_cast %15 : vector<1x1x256xf32> to vector<1x256xf32>
    %17 = vector.broadcast %16 : vector<1x256xf32> to vector<8x256xf32>
    %18 = arith.mulf %17, %14 : vector<8x256xf32>
    %c0_12 = arith.constant 0 : index
    %c0_13 = arith.constant 0 : index
    %c0_14 = arith.constant 0 : index
    %c0_15 = arith.constant 0 : index
    %19 = vector.load %arg3[%c0_12, %c0_13, %c0_14, %c0_15] : memref<49x2x8x1xf32, #tpu.memory_space<vmem>>, vector<1x2x8x1xf32>
    %20 = vector.shape_cast %19 : vector<1x2x8x1xf32> to vector<2x8x1xf32>
    %21 = vector.extract_strided_slice %20 {offsets = [0, 0, 0], sizes = [1, 8, 1], strides = [1, 1, 1]} : vector<2x8x1xf32> to vector<1x8x1xf32>
    %22 = vector.shape_cast %21 : vector<1x8x1xf32> to vector<8x1xf32>
    %23 = vector.broadcast %22 : vector<8x1xf32> to vector<8x256xf32>
    %24 = arith.mulf %23, %18 : vector<8x256xf32>
    %25 = arith.addf %12, %24 : vector<8x256xf32>
    %26 = vector.extract_strided_slice %20 {offsets = [1, 0, 0], sizes = [1, 8, 1], strides = [1, 1, 1]} : vector<2x8x1xf32> to vector<1x8x1xf32>
    %27 = vector.shape_cast %26 : vector<1x8x1xf32> to vector<8x1xf32>
    %28 = vector.broadcast %27 : vector<8x1xf32> to vector<8x256xf32>
    %29 = arith.mulf %28, %18 : vector<8x256xf32>
    %30 = arith.addf %13, %29 : vector<8x256xf32>
    %c50_i32 = arith.constant 50 : i32
    %31 = tpu.dynamic_rotate %11 by %c50_i32 dim 1 : vector<8x256xf32>, i32 -> vector<8x256xf32>
    %c1 = arith.constant 1 : index
    %c0_16 = arith.constant 0 : index
    %c0_17 = arith.constant 0 : index
    %32 = vector.load %arg2[%c1, %c0_16, %c0_17] : memref<49x1x256xf32, #tpu.memory_space<vmem>>, vector<1x1x256xf32>
    %33 = vector.shape_cast %32 : vector<1x1x256xf32> to vector<1x256xf32>
    %34 = vector.broadcast %33 : vector<1x256xf32> to vector<8x256xf32>
    %35 = arith.mulf %34, %31 : vector<8x256xf32>
    %c1_18 = arith.constant 1 : index
    %c0_19 = arith.constant 0 : index
    %c0_20 = arith.constant 0 : index
    %c0_21 = arith.constant 0 : index
    %36 = vector.load %arg3[%c1_18, %c0_19, %c0_20, %c0_21] : memref<49x2x8x1xf32, #tpu.memory_space<vmem>>, vector<1x2x8x1xf32>
    %37 = vector.shape_cast %36 : vector<1x2x8x1xf32> to vector<2x8x1xf32>
    %38 = vector.extract_strided_slice %37 {offsets = [0, 0, 0], sizes = [1, 8, 1], strides = [1, 1, 1]} : vector<2x8x1xf32> to vector<1x8x1xf32>
    %39 = vector.shape_cast %38 : vector<1x8x1xf32> to vector<8x1xf32>
    %40 = vector.broadcast %39 : vector<8x1xf32> to vector<8x256xf32>
    %41 = arith.mulf %40, %35 : vector<8x256xf32>
    %42 = arith.addf %25, %41 : vector<8x256xf32>
    %43 = vector.extract_strided_slice %37 {offsets = [1, 0, 0], sizes = [1, 8, 1], strides = [1, 1, 1]} : vector<2x8x1xf32> to vector<1x8x1xf32>
    %44 = vector.shape_cast %43 : vector<1x8x1xf32> to vector<8x1xf32>
    %45 = vector.broadcast %44 : vector<8x1xf32> to vector<8x256xf32>
    %46 = arith.mulf %45, %35 : vector<8x256xf32>
    %47 = arith.addf %30, %46 : vector<8x256xf32>
    %c49_i32 = arith.constant 49 : i32
    %48 = tpu.dynamic_rotate %11 by %c49_i32 dim 1 : vector<8x256xf32>, i32 -> vector<8x256xf32>
    %c2 = arith.constant 2 : index
    %c0_22 = arith.constant 0 : index
    %c0_23 = arith.constant 0 : index
    %49 = vector.load %arg2[%c2, %c0_22, %c0_23] : memref<49x1x256xf32, #tpu.memory_space<vmem>>, vector<1x1x256xf32>
    %50 = vector.shape_cast %49 : vector<1x1x256xf32> to vector<1x256xf32>
    %51 = vector.broadcast %50 : vector<1x256xf32> to vector<8x256xf32>
    %52 = arith.mulf %51, %48 : vector<8x256xf32>
    %c2_24 = arith.constant 2 : index
    %c0_25 = arith.constant 0 : index
    %c0_26 = arith.constant 0 : index
    %c0_27 = arith.constant 0 : index
    %53 = vector.load %arg3[%c2_24, %c0_25, %c0_26, %c0_27] : memref<49x2x8x1xf32, #tpu.memory_space<vmem>>, vector<1x2x8x1xf32>
    %54 = vector.shape_cast %53 : vector<1x2x8x1xf32> to vector<2x8x1xf32>
    %55 = vector.extract_strided_slice %54 {offsets = [0, 0, 0], sizes = [1, 8, 1], strides = [1, 1, 1]} : vector<2x8x1xf32> to vector<1x8x1xf32>
    %56 = vector.shape_cast %55 : vector<1x8x1xf32> to vector<8x1xf32>
    %57 = vector.broadcast %56 : vector<8x1xf32> to vector<8x256xf32>
    %58 = arith.mulf %57, %52 : vector<8x256xf32>
    %59 = arith.addf %42, %58 : vector<8x256xf32>
    %60 = vector.extract_strided_slice %54 {offsets = [1, 0, 0], sizes = [1, 8, 1], strides = [1, 1, 1]} : vector<2x8x1xf32> to vector<1x8x1xf32>
    %61 = vector.shape_cast %60 : vector<1x8x1xf32> to vector<8x1xf32>
    %62 = vector.broadcast %61 : vector<8x1xf32> to vector<8x256xf32>
    %63 = arith.mulf %62, %52 : vector<8x256xf32>
    %64 = arith.addf %47, %63 : vector<8x256xf32>
    %c48_i32 = arith.constant 48 : i32
    %65 = tpu.dynamic_rotate %11 by %c48_i32 dim 1 : vector<8x256xf32>, i32 -> vector<8x256xf32>
    %c3 = arith.constant 3 : index
    %c0_28 = arith.constant 0 : index
    %c0_29 = arith.constant 0 : index
    %66 = vector.load %arg2[%c3, %c0_28, %c0_29] : memref<49x1x256xf32, #tpu.memory_space<vmem>>, vector<1x1x256xf32>
    %67 = vector.shape_cast %66 : vector<1x1x256xf32> to vector<1x256xf32>
    %68 = vector.broadcast %67 : vector<1x256xf32> to vector<8x256xf32>
    %69 = arith.mulf %68, %65 : vector<8x256xf32>
    %c3_30 = arith.constant 3 : index
    %c0_31 = arith.constant 0 : index
    %c0_32 = arith.constant 0 : index
    %c0_33 = arith.constant 0 : index
    %70 = vector.load %arg3[%c3_30, %c0_31, %c0_32, %c0_33] : memref<49x2x8x1xf32, #tpu.memory_space<vmem>>, vector<1x2x8x1xf32>
    %71 = vector.shape_cast %70 : vector<1x2x8x1xf32> to vector<2x8x1xf32>
    %72 = vector.extract_strided_slice %71 {offsets = [0, 0, 0], sizes = [1, 8, 1], strides = [1, 1, 1]} : vector<2x8x1xf32> to vector<1x8x1xf32>
    %73 = vector.shape_cast %72 : vector<1x8x1xf32> to vector<8x1xf32>
    %74 = vector.broadcast %73 : vector<8x1xf32> to vector<8x256xf32>
    %75 = arith.mulf %74, %69 : vector<8x256xf32>
    %76 = arith.addf %59, %75 : vector<8x256xf32>
    %77 = vector.extract_strided_slice %71 {offsets = [1, 0, 0], sizes = [1, 8, 1], strides = [1, 1, 1]} : vector<2x8x1xf32> to vector<1x8x1xf32>
    %78 = vector.shape_cast %77 : vector<1x8x1xf32> to vector<8x1xf32>
    %79 = vector.broadcast %78 : vector<8x1xf32> to vector<8x256xf32>
    %80 = arith.mulf %79, %69 : vector<8x256xf32>
    %81 = arith.addf %64, %80 : vector<8x256xf32>
    %c47_i32 = arith.constant 47 : i32
    %82 = tpu.dynamic_rotate %11 by %c47_i32 dim 1 : vector<8x256xf32>, i32 -> vector<8x256xf32>
    %c4 = arith.constant 4 : index
    %c0_34 = arith.constant 0 : index
    %c0_35 = arith.constant 0 : index
    %83 = vector.load %arg2[%c4, %c0_34, %c0_35] : memref<49x1x256xf32, #tpu.memory_space<vmem>>, vector<1x1x256xf32>
    %84 = vector.shape_cast %83 : vector<1x1x256xf32> to vector<1x256xf32>
    %85 = vector.broadcast %84 : vector<1x256xf32> to vector<8x256xf32>
    %86 = arith.mulf %85, %82 : vector<8x256xf32>
    %c4_36 = arith.constant 4 : index
    %c0_37 = arith.constant 0 : index
    %c0_38 = arith.constant 0 : index
    %c0_39 = arith.constant 0 : index
    %87 = vector.load %arg3[%c4_36, %c0_37, %c0_38, %c0_39] : memref<49x2x8x1xf32, #tpu.memory_space<vmem>>, vector<1x2x8x1xf32>
    %88 = vector.shape_cast %87 : vector<1x2x8x1xf32> to vector<2x8x1xf32>
    %89 = vector.extract_strided_slice %88 {offsets = [0, 0, 0], sizes = [1, 8, 1], strides = [1, 1, 1]} : vector<2x8x1xf32> to vector<1x8x1xf32>
    %90 = vector.shape_cast %89 : vector<1x8x1xf32> to vector<8x1xf32>
    %91 = vector.broadcast %90 : vector<8x1xf32> to vector<8x256xf32>
    %92 = arith.mulf %91, %86 : vector<8x256xf32>
    %93 = arith.addf %76, %92 : vector<8x256xf32>
    %94 = vector.extract_strided_slice %88 {offsets = [1, 0, 0], sizes = [1, 8, 1], strides = [1, 1, 1]} : vector<2x8x1xf32> to vector<1x8x1xf32>
    %95 = vector.shape_cast %94 : vector<1x8x1xf32> to vector<8x1xf32>
    %96 = vector.broadcast %95 : vector<8x1xf32> to vector<8x256xf32>
    %97 = arith.mulf %96, %86 : vector<8x256xf32>
    %98 = arith.addf %81, %97 : vector<8x256xf32>
    %c46_i32 = arith.constant 46 : i32
    %99 = tpu.dynamic_rotate %11 by %c46_i32 dim 1 : vector<8x256xf32>, i32 -> vector<8x256xf32>
    %c5 = arith.constant 5 : index
    %c0_40 = arith.constant 0 : index
    %c0_41 = arith.constant 0 : index
    %100 = vector.load %arg2[%c5, %c0_40, %c0_41] : memref<49x1x256xf32, #tpu.memory_space<vmem>>, vector<1x1x256xf32>
    %101 = vector.shape_cast %100 : vector<1x1x256xf32> to vector<1x256xf32>
    %102 = vector.broadcast %101 : vector<1x256xf32> to vector<8x256xf32>
    %103 = arith.mulf %102, %99 : vector<8x256xf32>
    %c5_42 = arith.constant 5 : index
    %c0_43 = arith.constant 0 : index
    %c0_44 = arith.constant 0 : index
    %c0_45 = arith.constant 0 : index
    %104 = vector.load %arg3[%c5_42, %c0_43, %c0_44, %c0_45] : memref<49x2x8x1xf32, #tpu.memory_space<vmem>>, vector<1x2x8x1xf32>
    %105 = vector.shape_cast %104 : vector<1x2x8x1xf32> to vector<2x8x1xf32>
    %106 = vector.extract_strided_slice %105 {offsets = [0, 0, 0], sizes = [1, 8, 1], strides = [1, 1, 1]} : vector<2x8x1xf32> to vector<1x8x1xf32>
    %107 = vector.shape_cast %106 : vector<1x8x1xf32> to vector<8x1xf32>
    %108 = vector.broadcast %107 : vector<8x1xf32> to vector<8x256xf32>
    %109 = arith.mulf %108, %103 : vector<8x256xf32>
    %110 = arith.addf %93, %109 : vector<8x256xf32>
    %111 = vector.extract_strided_slice %105 {offsets = [1, 0, 0], sizes = [1, 8, 1], strides = [1, 1, 1]} : vector<2x8x1xf32> to vector<1x8x1xf32>
    %112 = vector.shape_cast %111 : vector<1x8x1xf32> to vector<8x1xf32>
    %113 = vector.broadcast %112 : vector<8x1xf32> to vector<8x256xf32>
    %114 = arith.mulf %113, %103 : vector<8x256xf32>
    %115 = arith.addf %98, %114 : vector<8x256xf32>
    %c45_i32 = arith.constant 45 : i32
    %116 = tpu.dynamic_rotate %11 by %c45_i32 dim 1 : vector<8x256xf32>, i32 -> vector<8x256xf32>
    %c6 = arith.constant 6 : index
    %c0_46 = arith.constant 0 : index
    %c0_47 = arith.constant 0 : index
    %117 = vector.load %arg2[%c6, %c0_46, %c0_47] : memref<49x1x256xf32, #tpu.memory_space<vmem>>, vector<1x1x256xf32>
    %118 = vector.shape_cast %117 : vector<1x1x256xf32> to vector<1x256xf32>
    %119 = vector.broadcast %118 : vector<1x256xf32> to vector<8x256xf32>
    %120 = arith.mulf %119, %116 : vector<8x256xf32>
    %c6_48 = arith.constant 6 : index
    %c0_49 = arith.constant 0 : index
    %c0_50 = arith.constant 0 : index
    %c0_51 = arith.constant 0 : index
    %121 = vector.load %arg3[%c6_48, %c0_49, %c0_50, %c0_51] : memref<49x2x8x1xf32, #tpu.memory_space<vmem>>, vector<1x2x8x1xf32>
    %122 = vector.shape_cast %121 : vector<1x2x8x1xf32> to vector<2x8x1xf32>
    %123 = vector.extract_strided_slice %122 {offsets = [0, 0, 0], sizes = [1, 8, 1], strides = [1, 1, 1]} : vector<2x8x1xf32> to vector<1x8x1xf32>
    %124 = vector.shape_cast %123 : vector<1x8x1xf32> to vector<8x1xf32>
    %125 = vector.broadcast %124 : vector<8x1xf32> to vector<8x256xf32>
    %126 = arith.mulf %125, %120 : vector<8x256xf32>
    %127 = arith.addf %110, %126 : vector<8x256xf32>
    %128 = vector.extract_strided_slice %122 {offsets = [1, 0, 0], sizes = [1, 8, 1], strides = [1, 1, 1]} : vector<2x8x1xf32> to vector<1x8x1xf32>
    %129 = vector.shape_cast %128 : vector<1x8x1xf32> to vector<8x1xf32>
    %130 = vector.broadcast %129 : vector<8x1xf32> to vector<8x256xf32>
    %131 = arith.mulf %130, %120 : vector<8x256xf32>
    %132 = arith.addf %115, %131 : vector<8x256xf32>
    %c35_i32 = arith.constant 35 : i32
    %133 = tpu.dynamic_rotate %11 by %c35_i32 dim 1 : vector<8x256xf32>, i32 -> vector<8x256xf32>
    %c7 = arith.constant 7 : index
    %c0_52 = arith.constant 0 : index
    %c0_53 = arith.constant 0 : index
    %134 = vector.load %arg2[%c7, %c0_52, %c0_53] : memref<49x1x256xf32, #tpu.memory_space<vmem>>, vector<1x1x256xf32>
    %135 = vector.shape_cast %134 : vector<1x1x256xf32> to vector<1x256xf32>
    %136 = vector.broadcast %135 : vector<1x256xf32> to vector<8x256xf32>
    %137 = arith.mulf %136, %133 : vector<8x256xf32>
    %c7_54 = arith.constant 7 : index
    %c0_55 = arith.constant 0 : index
    %c0_56 = arith.constant 0 : index
    %c0_57 = arith.constant 0 : index
    %138 = vector.load %arg3[%c7_54, %c0_55, %c0_56, %c0_57] : memref<49x2x8x1xf32, #tpu.memory_space<vmem>>, vector<1x2x8x1xf32>
    %139 = vector.shape_cast %138 : vector<1x2x8x1xf32> to vector<2x8x1xf32>
    %140 = vector.extract_strided_slice %139 {offsets = [0, 0, 0], sizes = [1, 8, 1], strides = [1, 1, 1]} : vector<2x8x1xf32> to vector<1x8x1xf32>
    %141 = vector.shape_cast %140 : vector<1x8x1xf32> to vector<8x1xf32>
    %142 = vector.broadcast %141 : vector<8x1xf32> to vector<8x256xf32>
    %143 = arith.mulf %142, %137 : vector<8x256xf32>
    %144 = arith.addf %127, %143 : vector<8x256xf32>
    %145 = vector.extract_strided_slice %139 {offsets = [1, 0, 0], sizes = [1, 8, 1], strides = [1, 1, 1]} : vector<2x8x1xf32> to vector<1x8x1xf32>
    %146 = vector.shape_cast %145 : vector<1x8x1xf32> to vector<8x1xf32>
    %147 = vector.broadcast %146 : vector<8x1xf32> to vector<8x256xf32>
    %148 = arith.mulf %147, %137 : vector<8x256xf32>
    %149 = arith.addf %132, %148 : vector<8x256xf32>
    %c34_i32 = arith.constant 34 : i32
    %150 = tpu.dynamic_rotate %11 by %c34_i32 dim 1 : vector<8x256xf32>, i32 -> vector<8x256xf32>
    %c8 = arith.constant 8 : index
    %c0_58 = arith.constant 0 : index
    %c0_59 = arith.constant 0 : index
    %151 = vector.load %arg2[%c8, %c0_58, %c0_59] : memref<49x1x256xf32, #tpu.memory_space<vmem>>, vector<1x1x256xf32>
    %152 = vector.shape_cast %151 : vector<1x1x256xf32> to vector<1x256xf32>
    %153 = vector.broadcast %152 : vector<1x256xf32> to vector<8x256xf32>
    %154 = arith.mulf %153, %150 : vector<8x256xf32>
    %c8_60 = arith.constant 8 : index
    %c0_61 = arith.constant 0 : index
    %c0_62 = arith.constant 0 : index
    %c0_63 = arith.constant 0 : index
    %155 = vector.load %arg3[%c8_60, %c0_61, %c0_62, %c0_63] : memref<49x2x8x1xf32, #tpu.memory_space<vmem>>, vector<1x2x8x1xf32>
    %156 = vector.shape_cast %155 : vector<1x2x8x1xf32> to vector<2x8x1xf32>
    %157 = vector.extract_strided_slice %156 {offsets = [0, 0, 0], sizes = [1, 8, 1], strides = [1, 1, 1]} : vector<2x8x1xf32> to vector<1x8x1xf32>
    %158 = vector.shape_cast %157 : vector<1x8x1xf32> to vector<8x1xf32>
    %159 = vector.broadcast %158 : vector<8x1xf32> to vector<8x256xf32>
    %160 = arith.mulf %159, %154 : vector<8x256xf32>
    %161 = arith.addf %144, %160 : vector<8x256xf32>
    %162 = vector.extract_strided_slice %156 {offsets = [1, 0, 0], sizes = [1, 8, 1], strides = [1, 1, 1]} : vector<2x8x1xf32> to vector<1x8x1xf32>
    %163 = vector.shape_cast %162 : vector<1x8x1xf32> to vector<8x1xf32>
    %164 = vector.broadcast %163 : vector<8x1xf32> to vector<8x256xf32>
    %165 = arith.mulf %164, %154 : vector<8x256xf32>
    %166 = arith.addf %149, %165 : vector<8x256xf32>
    %c33_i32 = arith.constant 33 : i32
    %167 = tpu.dynamic_rotate %11 by %c33_i32 dim 1 : vector<8x256xf32>, i32 -> vector<8x256xf32>
    %c9 = arith.constant 9 : index
    %c0_64 = arith.constant 0 : index
    %c0_65 = arith.constant 0 : index
    %168 = vector.load %arg2[%c9, %c0_64, %c0_65] : memref<49x1x256xf32, #tpu.memory_space<vmem>>, vector<1x1x256xf32>
    %169 = vector.shape_cast %168 : vector<1x1x256xf32> to vector<1x256xf32>
    %170 = vector.broadcast %169 : vector<1x256xf32> to vector<8x256xf32>
    %171 = arith.mulf %170, %167 : vector<8x256xf32>
    %c9_66 = arith.constant 9 : index
    %c0_67 = arith.constant 0 : index
    %c0_68 = arith.constant 0 : index
    %c0_69 = arith.constant 0 : index
    %172 = vector.load %arg3[%c9_66, %c0_67, %c0_68, %c0_69] : memref<49x2x8x1xf32, #tpu.memory_space<vmem>>, vector<1x2x8x1xf32>
    %173 = vector.shape_cast %172 : vector<1x2x8x1xf32> to vector<2x8x1xf32>
    %174 = vector.extract_strided_slice %173 {offsets = [0, 0, 0], sizes = [1, 8, 1], strides = [1, 1, 1]} : vector<2x8x1xf32> to vector<1x8x1xf32>
    %175 = vector.shape_cast %174 : vector<1x8x1xf32> to vector<8x1xf32>
    %176 = vector.broadcast %175 : vector<8x1xf32> to vector<8x256xf32>
    %177 = arith.mulf %176, %171 : vector<8x256xf32>
    %178 = arith.addf %161, %177 : vector<8x256xf32>
    %179 = vector.extract_strided_slice %173 {offsets = [1, 0, 0], sizes = [1, 8, 1], strides = [1, 1, 1]} : vector<2x8x1xf32> to vector<1x8x1xf32>
    %180 = vector.shape_cast %179 : vector<1x8x1xf32> to vector<8x1xf32>
    %181 = vector.broadcast %180 : vector<8x1xf32> to vector<8x256xf32>
    %182 = arith.mulf %181, %171 : vector<8x256xf32>
    %183 = arith.addf %166, %182 : vector<8x256xf32>
    %c32_i32 = arith.constant 32 : i32
    %184 = tpu.dynamic_rotate %11 by %c32_i32 dim 1 : vector<8x256xf32>, i32 -> vector<8x256xf32>
    %c10 = arith.constant 10 : index
    %c0_70 = arith.constant 0 : index
    %c0_71 = arith.constant 0 : index
    %185 = vector.load %arg2[%c10, %c0_70, %c0_71] : memref<49x1x256xf32, #tpu.memory_space<vmem>>, vector<1x1x256xf32>
    %186 = vector.shape_cast %185 : vector<1x1x256xf32> to vector<1x256xf32>
    %187 = vector.broadcast %186 : vector<1x256xf32> to vector<8x256xf32>
    %188 = arith.mulf %187, %184 : vector<8x256xf32>
    %c10_72 = arith.constant 10 : index
    %c0_73 = arith.constant 0 : index
    %c0_74 = arith.constant 0 : index
    %c0_75 = arith.constant 0 : index
    %189 = vector.load %arg3[%c10_72, %c0_73, %c0_74, %c0_75] : memref<49x2x8x1xf32, #tpu.memory_space<vmem>>, vector<1x2x8x1xf32>
    %190 = vector.shape_cast %189 : vector<1x2x8x1xf32> to vector<2x8x1xf32>
    %191 = vector.extract_strided_slice %190 {offsets = [0, 0, 0], sizes = [1, 8, 1], strides = [1, 1, 1]} : vector<2x8x1xf32> to vector<1x8x1xf32>
    %192 = vector.shape_cast %191 : vector<1x8x1xf32> to vector<8x1xf32>
    %193 = vector.broadcast %192 : vector<8x1xf32> to vector<8x256xf32>
    %194 = arith.mulf %193, %188 : vector<8x256xf32>
    %195 = arith.addf %178, %194 : vector<8x256xf32>
    %196 = vector.extract_strided_slice %190 {offsets = [1, 0, 0], sizes = [1, 8, 1], strides = [1, 1, 1]} : vector<2x8x1xf32> to vector<1x8x1xf32>
    %197 = vector.shape_cast %196 : vector<1x8x1xf32> to vector<8x1xf32>
    %198 = vector.broadcast %197 : vector<8x1xf32> to vector<8x256xf32>
    %199 = arith.mulf %198, %188 : vector<8x256xf32>
    %200 = arith.addf %183, %199 : vector<8x256xf32>
    %c31_i32 = arith.constant 31 : i32
    %201 = tpu.dynamic_rotate %11 by %c31_i32 dim 1 : vector<8x256xf32>, i32 -> vector<8x256xf32>
    %c11 = arith.constant 11 : index
    %c0_76 = arith.constant 0 : index
    %c0_77 = arith.constant 0 : index
    %202 = vector.load %arg2[%c11, %c0_76, %c0_77] : memref<49x1x256xf32, #tpu.memory_space<vmem>>, vector<1x1x256xf32>
    %203 = vector.shape_cast %202 : vector<1x1x256xf32> to vector<1x256xf32>
    %204 = vector.broadcast %203 : vector<1x256xf32> to vector<8x256xf32>
    %205 = arith.mulf %204, %201 : vector<8x256xf32>
    %c11_78 = arith.constant 11 : index
    %c0_79 = arith.constant 0 : index
    %c0_80 = arith.constant 0 : index
    %c0_81 = arith.constant 0 : index
    %206 = vector.load %arg3[%c11_78, %c0_79, %c0_80, %c0_81] : memref<49x2x8x1xf32, #tpu.memory_space<vmem>>, vector<1x2x8x1xf32>
    %207 = vector.shape_cast %206 : vector<1x2x8x1xf32> to vector<2x8x1xf32>
    %208 = vector.extract_strided_slice %207 {offsets = [0, 0, 0], sizes = [1, 8, 1], strides = [1, 1, 1]} : vector<2x8x1xf32> to vector<1x8x1xf32>
    %209 = vector.shape_cast %208 : vector<1x8x1xf32> to vector<8x1xf32>
    %210 = vector.broadcast %209 : vector<8x1xf32> to vector<8x256xf32>
    %211 = arith.mulf %210, %205 : vector<8x256xf32>
    %212 = arith.addf %195, %211 : vector<8x256xf32>
    %213 = vector.extract_strided_slice %207 {offsets = [1, 0, 0], sizes = [1, 8, 1], strides = [1, 1, 1]} : vector<2x8x1xf32> to vector<1x8x1xf32>
    %214 = vector.shape_cast %213 : vector<1x8x1xf32> to vector<8x1xf32>
    %215 = vector.broadcast %214 : vector<8x1xf32> to vector<8x256xf32>
    %216 = arith.mulf %215, %205 : vector<8x256xf32>
    %217 = arith.addf %200, %216 : vector<8x256xf32>
    %c30_i32 = arith.constant 30 : i32
    %218 = tpu.dynamic_rotate %11 by %c30_i32 dim 1 : vector<8x256xf32>, i32 -> vector<8x256xf32>
    %c12 = arith.constant 12 : index
    %c0_82 = arith.constant 0 : index
    %c0_83 = arith.constant 0 : index
    %219 = vector.load %arg2[%c12, %c0_82, %c0_83] : memref<49x1x256xf32, #tpu.memory_space<vmem>>, vector<1x1x256xf32>
    %220 = vector.shape_cast %219 : vector<1x1x256xf32> to vector<1x256xf32>
    %221 = vector.broadcast %220 : vector<1x256xf32> to vector<8x256xf32>
    %222 = arith.mulf %221, %218 : vector<8x256xf32>
    %c12_84 = arith.constant 12 : index
    %c0_85 = arith.constant 0 : index
    %c0_86 = arith.constant 0 : index
    %c0_87 = arith.constant 0 : index
    %223 = vector.load %arg3[%c12_84, %c0_85, %c0_86, %c0_87] : memref<49x2x8x1xf32, #tpu.memory_space<vmem>>, vector<1x2x8x1xf32>
    %224 = vector.shape_cast %223 : vector<1x2x8x1xf32> to vector<2x8x1xf32>
    %225 = vector.extract_strided_slice %224 {offsets = [0, 0, 0], sizes = [1, 8, 1], strides = [1, 1, 1]} : vector<2x8x1xf32> to vector<1x8x1xf32>
    %226 = vector.shape_cast %225 : vector<1x8x1xf32> to vector<8x1xf32>
    %227 = vector.broadcast %226 : vector<8x1xf32> to vector<8x256xf32>
    %228 = arith.mulf %227, %222 : vector<8x256xf32>
    %229 = arith.addf %212, %228 : vector<8x256xf32>
    %230 = vector.extract_strided_slice %224 {offsets = [1, 0, 0], sizes = [1, 8, 1], strides = [1, 1, 1]} : vector<2x8x1xf32> to vector<1x8x1xf32>
    %231 = vector.shape_cast %230 : vector<1x8x1xf32> to vector<8x1xf32>
    %232 = vector.broadcast %231 : vector<8x1xf32> to vector<8x256xf32>
    %233 = arith.mulf %232, %222 : vector<8x256xf32>
    %234 = arith.addf %217, %233 : vector<8x256xf32>
    %c29_i32 = arith.constant 29 : i32
    %235 = tpu.dynamic_rotate %11 by %c29_i32 dim 1 : vector<8x256xf32>, i32 -> vector<8x256xf32>
    %c13 = arith.constant 13 : index
    %c0_88 = arith.constant 0 : index
    %c0_89 = arith.constant 0 : index
    %236 = vector.load %arg2[%c13, %c0_88, %c0_89] : memref<49x1x256xf32, #tpu.memory_space<vmem>>, vector<1x1x256xf32>
    %237 = vector.shape_cast %236 : vector<1x1x256xf32> to vector<1x256xf32>
    %238 = vector.broadcast %237 : vector<1x256xf32> to vector<8x256xf32>
    %239 = arith.mulf %238, %235 : vector<8x256xf32>
    %c13_90 = arith.constant 13 : index
    %c0_91 = arith.constant 0 : index
    %c0_92 = arith.constant 0 : index
    %c0_93 = arith.constant 0 : index
    %240 = vector.load %arg3[%c13_90, %c0_91, %c0_92, %c0_93] : memref<49x2x8x1xf32, #tpu.memory_space<vmem>>, vector<1x2x8x1xf32>
    %241 = vector.shape_cast %240 : vector<1x2x8x1xf32> to vector<2x8x1xf32>
    %242 = vector.extract_strided_slice %241 {offsets = [0, 0, 0], sizes = [1, 8, 1], strides = [1, 1, 1]} : vector<2x8x1xf32> to vector<1x8x1xf32>
    %243 = vector.shape_cast %242 : vector<1x8x1xf32> to vector<8x1xf32>
    %244 = vector.broadcast %243 : vector<8x1xf32> to vector<8x256xf32>
    %245 = arith.mulf %244, %239 : vector<8x256xf32>
    %246 = arith.addf %229, %245 : vector<8x256xf32>
    %247 = vector.extract_strided_slice %241 {offsets = [1, 0, 0], sizes = [1, 8, 1], strides = [1, 1, 1]} : vector<2x8x1xf32> to vector<1x8x1xf32>
    %248 = vector.shape_cast %247 : vector<1x8x1xf32> to vector<8x1xf32>
    %249 = vector.broadcast %248 : vector<8x1xf32> to vector<8x256xf32>
    %250 = arith.mulf %249, %239 : vector<8x256xf32>
    %251 = arith.addf %234, %250 : vector<8x256xf32>
    %c19_i32 = arith.constant 19 : i32
    %252 = tpu.dynamic_rotate %11 by %c19_i32 dim 1 : vector<8x256xf32>, i32 -> vector<8x256xf32>
    %c14 = arith.constant 14 : index
    %c0_94 = arith.constant 0 : index
    %c0_95 = arith.constant 0 : index
    %253 = vector.load %arg2[%c14, %c0_94, %c0_95] : memref<49x1x256xf32, #tpu.memory_space<vmem>>, vector<1x1x256xf32>
    %254 = vector.shape_cast %253 : vector<1x1x256xf32> to vector<1x256xf32>
    %255 = vector.broadcast %254 : vector<1x256xf32> to vector<8x256xf32>
    %256 = arith.mulf %255, %252 : vector<8x256xf32>
    %c14_96 = arith.constant 14 : index
    %c0_97 = arith.constant 0 : index
    %c0_98 = arith.constant 0 : index
    %c0_99 = arith.constant 0 : index
    %257 = vector.load %arg3[%c14_96, %c0_97, %c0_98, %c0_99] : memref<49x2x8x1xf32, #tpu.memory_space<vmem>>, vector<1x2x8x1xf32>
    %258 = vector.shape_cast %257 : vector<1x2x8x1xf32> to vector<2x8x1xf32>
    %259 = vector.extract_strided_slice %258 {offsets = [0, 0, 0], sizes = [1, 8, 1], strides = [1, 1, 1]} : vector<2x8x1xf32> to vector<1x8x1xf32>
    %260 = vector.shape_cast %259 : vector<1x8x1xf32> to vector<8x1xf32>
    %261 = vector.broadcast %260 : vector<8x1xf32> to vector<8x256xf32>
    %262 = arith.mulf %261, %256 : vector<8x256xf32>
    %263 = arith.addf %246, %262 : vector<8x256xf32>
    %264 = vector.extract_strided_slice %258 {offsets = [1, 0, 0], sizes = [1, 8, 1], strides = [1, 1, 1]} : vector<2x8x1xf32> to vector<1x8x1xf32>
    %265 = vector.shape_cast %264 : vector<1x8x1xf32> to vector<8x1xf32>
    %266 = vector.broadcast %265 : vector<8x1xf32> to vector<8x256xf32>
    %267 = arith.mulf %266, %256 : vector<8x256xf32>
    %268 = arith.addf %251, %267 : vector<8x256xf32>
    %c18_i32 = arith.constant 18 : i32
    %269 = tpu.dynamic_rotate %11 by %c18_i32 dim 1 : vector<8x256xf32>, i32 -> vector<8x256xf32>
    %c15 = arith.constant 15 : index
    %c0_100 = arith.constant 0 : index
    %c0_101 = arith.constant 0 : index
    %270 = vector.load %arg2[%c15, %c0_100, %c0_101] : memref<49x1x256xf32, #tpu.memory_space<vmem>>, vector<1x1x256xf32>
    %271 = vector.shape_cast %270 : vector<1x1x256xf32> to vector<1x256xf32>
    %272 = vector.broadcast %271 : vector<1x256xf32> to vector<8x256xf32>
    %273 = arith.mulf %272, %269 : vector<8x256xf32>
    %c15_102 = arith.constant 15 : index
    %c0_103 = arith.constant 0 : index
    %c0_104 = arith.constant 0 : index
    %c0_105 = arith.constant 0 : index
    %274 = vector.load %arg3[%c15_102, %c0_103, %c0_104, %c0_105] : memref<49x2x8x1xf32, #tpu.memory_space<vmem>>, vector<1x2x8x1xf32>
    %275 = vector.shape_cast %274 : vector<1x2x8x1xf32> to vector<2x8x1xf32>
    %276 = vector.extract_strided_slice %275 {offsets = [0, 0, 0], sizes = [1, 8, 1], strides = [1, 1, 1]} : vector<2x8x1xf32> to vector<1x8x1xf32>
    %277 = vector.shape_cast %276 : vector<1x8x1xf32> to vector<8x1xf32>
    %278 = vector.broadcast %277 : vector<8x1xf32> to vector<8x256xf32>
    %279 = arith.mulf %278, %273 : vector<8x256xf32>
    %280 = arith.addf %263, %279 : vector<8x256xf32>
    %281 = vector.extract_strided_slice %275 {offsets = [1, 0, 0], sizes = [1, 8, 1], strides = [1, 1, 1]} : vector<2x8x1xf32> to vector<1x8x1xf32>
    %282 = vector.shape_cast %281 : vector<1x8x1xf32> to vector<8x1xf32>
    %283 = vector.broadcast %282 : vector<8x1xf32> to vector<8x256xf32>
    %284 = arith.mulf %283, %273 : vector<8x256xf32>
    %285 = arith.addf %268, %284 : vector<8x256xf32>
    %c17_i32 = arith.constant 17 : i32
    %286 = tpu.dynamic_rotate %11 by %c17_i32 dim 1 : vector<8x256xf32>, i32 -> vector<8x256xf32>
    %c16 = arith.constant 16 : index
    %c0_106 = arith.constant 0 : index
    %c0_107 = arith.constant 0 : index
    %287 = vector.load %arg2[%c16, %c0_106, %c0_107] : memref<49x1x256xf32, #tpu.memory_space<vmem>>, vector<1x1x256xf32>
    %288 = vector.shape_cast %287 : vector<1x1x256xf32> to vector<1x256xf32>
    %289 = vector.broadcast %288 : vector<1x256xf32> to vector<8x256xf32>
    %290 = arith.mulf %289, %286 : vector<8x256xf32>
    %c16_108 = arith.constant 16 : index
    %c0_109 = arith.constant 0 : index
    %c0_110 = arith.constant 0 : index
    %c0_111 = arith.constant 0 : index
    %291 = vector.load %arg3[%c16_108, %c0_109, %c0_110, %c0_111] : memref<49x2x8x1xf32, #tpu.memory_space<vmem>>, vector<1x2x8x1xf32>
    %292 = vector.shape_cast %291 : vector<1x2x8x1xf32> to vector<2x8x1xf32>
    %293 = vector.extract_strided_slice %292 {offsets = [0, 0, 0], sizes = [1, 8, 1], strides = [1, 1, 1]} : vector<2x8x1xf32> to vector<1x8x1xf32>
    %294 = vector.shape_cast %293 : vector<1x8x1xf32> to vector<8x1xf32>
    %295 = vector.broadcast %294 : vector<8x1xf32> to vector<8x256xf32>
    %296 = arith.mulf %295, %290 : vector<8x256xf32>
    %297 = arith.addf %280, %296 : vector<8x256xf32>
    %298 = vector.extract_strided_slice %292 {offsets = [1, 0, 0], sizes = [1, 8, 1], strides = [1, 1, 1]} : vector<2x8x1xf32> to vector<1x8x1xf32>
    %299 = vector.shape_cast %298 : vector<1x8x1xf32> to vector<8x1xf32>
    %300 = vector.broadcast %299 : vector<8x1xf32> to vector<8x256xf32>
    %301 = arith.mulf %300, %290 : vector<8x256xf32>
    %302 = arith.addf %285, %301 : vector<8x256xf32>
    %c16_i32 = arith.constant 16 : i32
    %303 = tpu.dynamic_rotate %11 by %c16_i32 dim 1 : vector<8x256xf32>, i32 -> vector<8x256xf32>
    %c17 = arith.constant 17 : index
    %c0_112 = arith.constant 0 : index
    %c0_113 = arith.constant 0 : index
    %304 = vector.load %arg2[%c17, %c0_112, %c0_113] : memref<49x1x256xf32, #tpu.memory_space<vmem>>, vector<1x1x256xf32>
    %305 = vector.shape_cast %304 : vector<1x1x256xf32> to vector<1x256xf32>
    %306 = vector.broadcast %305 : vector<1x256xf32> to vector<8x256xf32>
    %307 = arith.mulf %306, %303 : vector<8x256xf32>
    %c17_114 = arith.constant 17 : index
    %c0_115 = arith.constant 0 : index
    %c0_116 = arith.constant 0 : index
    %c0_117 = arith.constant 0 : index
    %308 = vector.load %arg3[%c17_114, %c0_115, %c0_116, %c0_117] : memref<49x2x8x1xf32, #tpu.memory_space<vmem>>, vector<1x2x8x1xf32>
    %309 = vector.shape_cast %308 : vector<1x2x8x1xf32> to vector<2x8x1xf32>
    %310 = vector.extract_strided_slice %309 {offsets = [0, 0, 0], sizes = [1, 8, 1], strides = [1, 1, 1]} : vector<2x8x1xf32> to vector<1x8x1xf32>
    %311 = vector.shape_cast %310 : vector<1x8x1xf32> to vector<8x1xf32>
    %312 = vector.broadcast %311 : vector<8x1xf32> to vector<8x256xf32>
    %313 = arith.mulf %312, %307 : vector<8x256xf32>
    %314 = arith.addf %297, %313 : vector<8x256xf32>
    %315 = vector.extract_strided_slice %309 {offsets = [1, 0, 0], sizes = [1, 8, 1], strides = [1, 1, 1]} : vector<2x8x1xf32> to vector<1x8x1xf32>
    %316 = vector.shape_cast %315 : vector<1x8x1xf32> to vector<8x1xf32>
    %317 = vector.broadcast %316 : vector<8x1xf32> to vector<8x256xf32>
    %318 = arith.mulf %317, %307 : vector<8x256xf32>
    %319 = arith.addf %302, %318 : vector<8x256xf32>
    %c15_i32 = arith.constant 15 : i32
    %320 = tpu.dynamic_rotate %11 by %c15_i32 dim 1 : vector<8x256xf32>, i32 -> vector<8x256xf32>
    %c18 = arith.constant 18 : index
    %c0_118 = arith.constant 0 : index
    %c0_119 = arith.constant 0 : index
    %321 = vector.load %arg2[%c18, %c0_118, %c0_119] : memref<49x1x256xf32, #tpu.memory_space<vmem>>, vector<1x1x256xf32>
    %322 = vector.shape_cast %321 : vector<1x1x256xf32> to vector<1x256xf32>
    %323 = vector.broadcast %322 : vector<1x256xf32> to vector<8x256xf32>
    %324 = arith.mulf %323, %320 : vector<8x256xf32>
    %c18_120 = arith.constant 18 : index
    %c0_121 = arith.constant 0 : index
    %c0_122 = arith.constant 0 : index
    %c0_123 = arith.constant 0 : index
    %325 = vector.load %arg3[%c18_120, %c0_121, %c0_122, %c0_123] : memref<49x2x8x1xf32, #tpu.memory_space<vmem>>, vector<1x2x8x1xf32>
    %326 = vector.shape_cast %325 : vector<1x2x8x1xf32> to vector<2x8x1xf32>
    %327 = vector.extract_strided_slice %326 {offsets = [0, 0, 0], sizes = [1, 8, 1], strides = [1, 1, 1]} : vector<2x8x1xf32> to vector<1x8x1xf32>
    %328 = vector.shape_cast %327 : vector<1x8x1xf32> to vector<8x1xf32>
    %329 = vector.broadcast %328 : vector<8x1xf32> to vector<8x256xf32>
    %330 = arith.mulf %329, %324 : vector<8x256xf32>
    %331 = arith.addf %314, %330 : vector<8x256xf32>
    %332 = vector.extract_strided_slice %326 {offsets = [1, 0, 0], sizes = [1, 8, 1], strides = [1, 1, 1]} : vector<2x8x1xf32> to vector<1x8x1xf32>
    %333 = vector.shape_cast %332 : vector<1x8x1xf32> to vector<8x1xf32>
    %334 = vector.broadcast %333 : vector<8x1xf32> to vector<8x256xf32>
    %335 = arith.mulf %334, %324 : vector<8x256xf32>
    %336 = arith.addf %319, %335 : vector<8x256xf32>
    %c14_i32 = arith.constant 14 : i32
    %337 = tpu.dynamic_rotate %11 by %c14_i32 dim 1 : vector<8x256xf32>, i32 -> vector<8x256xf32>
    %c19 = arith.constant 19 : index
    %c0_124 = arith.constant 0 : index
    %c0_125 = arith.constant 0 : index
    %338 = vector.load %arg2[%c19, %c0_124, %c0_125] : memref<49x1x256xf32, #tpu.memory_space<vmem>>, vector<1x1x256xf32>
    %339 = vector.shape_cast %338 : vector<1x1x256xf32> to vector<1x256xf32>
    %340 = vector.broadcast %339 : vector<1x256xf32> to vector<8x256xf32>
    %341 = arith.mulf %340, %337 : vector<8x256xf32>
    %c19_126 = arith.constant 19 : index
    %c0_127 = arith.constant 0 : index
    %c0_128 = arith.constant 0 : index
    %c0_129 = arith.constant 0 : index
    %342 = vector.load %arg3[%c19_126, %c0_127, %c0_128, %c0_129] : memref<49x2x8x1xf32, #tpu.memory_space<vmem>>, vector<1x2x8x1xf32>
    %343 = vector.shape_cast %342 : vector<1x2x8x1xf32> to vector<2x8x1xf32>
    %344 = vector.extract_strided_slice %343 {offsets = [0, 0, 0], sizes = [1, 8, 1], strides = [1, 1, 1]} : vector<2x8x1xf32> to vector<1x8x1xf32>
    %345 = vector.shape_cast %344 : vector<1x8x1xf32> to vector<8x1xf32>
    %346 = vector.broadcast %345 : vector<8x1xf32> to vector<8x256xf32>
    %347 = arith.mulf %346, %341 : vector<8x256xf32>
    %348 = arith.addf %331, %347 : vector<8x256xf32>
    %349 = vector.extract_strided_slice %343 {offsets = [1, 0, 0], sizes = [1, 8, 1], strides = [1, 1, 1]} : vector<2x8x1xf32> to vector<1x8x1xf32>
    %350 = vector.shape_cast %349 : vector<1x8x1xf32> to vector<8x1xf32>
    %351 = vector.broadcast %350 : vector<8x1xf32> to vector<8x256xf32>
    %352 = arith.mulf %351, %341 : vector<8x256xf32>
    %353 = arith.addf %336, %352 : vector<8x256xf32>
    %c13_i32 = arith.constant 13 : i32
    %354 = tpu.dynamic_rotate %11 by %c13_i32 dim 1 : vector<8x256xf32>, i32 -> vector<8x256xf32>
    %c20 = arith.constant 20 : index
    %c0_130 = arith.constant 0 : index
    %c0_131 = arith.constant 0 : index
    %355 = vector.load %arg2[%c20, %c0_130, %c0_131] : memref<49x1x256xf32, #tpu.memory_space<vmem>>, vector<1x1x256xf32>
    %356 = vector.shape_cast %355 : vector<1x1x256xf32> to vector<1x256xf32>
    %357 = vector.broadcast %356 : vector<1x256xf32> to vector<8x256xf32>
    %358 = arith.mulf %357, %354 : vector<8x256xf32>
    %c20_132 = arith.constant 20 : index
    %c0_133 = arith.constant 0 : index
    %c0_134 = arith.constant 0 : index
    %c0_135 = arith.constant 0 : index
    %359 = vector.load %arg3[%c20_132, %c0_133, %c0_134, %c0_135] : memref<49x2x8x1xf32, #tpu.memory_space<vmem>>, vector<1x2x8x1xf32>
    %360 = vector.shape_cast %359 : vector<1x2x8x1xf32> to vector<2x8x1xf32>
    %361 = vector.extract_strided_slice %360 {offsets = [0, 0, 0], sizes = [1, 8, 1], strides = [1, 1, 1]} : vector<2x8x1xf32> to vector<1x8x1xf32>
    %362 = vector.shape_cast %361 : vector<1x8x1xf32> to vector<8x1xf32>
    %363 = vector.broadcast %362 : vector<8x1xf32> to vector<8x256xf32>
    %364 = arith.mulf %363, %358 : vector<8x256xf32>
    %365 = arith.addf %348, %364 : vector<8x256xf32>
    %366 = vector.extract_strided_slice %360 {offsets = [1, 0, 0], sizes = [1, 8, 1], strides = [1, 1, 1]} : vector<2x8x1xf32> to vector<1x8x1xf32>
    %367 = vector.shape_cast %366 : vector<1x8x1xf32> to vector<8x1xf32>
    %368 = vector.broadcast %367 : vector<8x1xf32> to vector<8x256xf32>
    %369 = arith.mulf %368, %358 : vector<8x256xf32>
    %370 = arith.addf %353, %369 : vector<8x256xf32>
    %c3_i32 = arith.constant 3 : i32
    %371 = tpu.dynamic_rotate %11 by %c3_i32 dim 1 : vector<8x256xf32>, i32 -> vector<8x256xf32>
    %c21 = arith.constant 21 : index
    %c0_136 = arith.constant 0 : index
    %c0_137 = arith.constant 0 : index
    %372 = vector.load %arg2[%c21, %c0_136, %c0_137] : memref<49x1x256xf32, #tpu.memory_space<vmem>>, vector<1x1x256xf32>
    %373 = vector.shape_cast %372 : vector<1x1x256xf32> to vector<1x256xf32>
    %374 = vector.broadcast %373 : vector<1x256xf32> to vector<8x256xf32>
    %375 = arith.mulf %374, %371 : vector<8x256xf32>
    %c21_138 = arith.constant 21 : index
    %c0_139 = arith.constant 0 : index
    %c0_140 = arith.constant 0 : index
    %c0_141 = arith.constant 0 : index
    %376 = vector.load %arg3[%c21_138, %c0_139, %c0_140, %c0_141] : memref<49x2x8x1xf32, #tpu.memory_space<vmem>>, vector<1x2x8x1xf32>
    %377 = vector.shape_cast %376 : vector<1x2x8x1xf32> to vector<2x8x1xf32>
    %378 = vector.extract_strided_slice %377 {offsets = [0, 0, 0], sizes = [1, 8, 1], strides = [1, 1, 1]} : vector<2x8x1xf32> to vector<1x8x1xf32>
    %379 = vector.shape_cast %378 : vector<1x8x1xf32> to vector<8x1xf32>
    %380 = vector.broadcast %379 : vector<8x1xf32> to vector<8x256xf32>
    %381 = arith.mulf %380, %375 : vector<8x256xf32>
    %382 = arith.addf %365, %381 : vector<8x256xf32>
    %383 = vector.extract_strided_slice %377 {offsets = [1, 0, 0], sizes = [1, 8, 1], strides = [1, 1, 1]} : vector<2x8x1xf32> to vector<1x8x1xf32>
    %384 = vector.shape_cast %383 : vector<1x8x1xf32> to vector<8x1xf32>
    %385 = vector.broadcast %384 : vector<8x1xf32> to vector<8x256xf32>
    %386 = arith.mulf %385, %375 : vector<8x256xf32>
    %387 = arith.addf %370, %386 : vector<8x256xf32>
    %c2_i32 = arith.constant 2 : i32
    %388 = tpu.dynamic_rotate %11 by %c2_i32 dim 1 : vector<8x256xf32>, i32 -> vector<8x256xf32>
    %c22 = arith.constant 22 : index
    %c0_142 = arith.constant 0 : index
    %c0_143 = arith.constant 0 : index
    %389 = vector.load %arg2[%c22, %c0_142, %c0_143] : memref<49x1x256xf32, #tpu.memory_space<vmem>>, vector<1x1x256xf32>
    %390 = vector.shape_cast %389 : vector<1x1x256xf32> to vector<1x256xf32>
    %391 = vector.broadcast %390 : vector<1x256xf32> to vector<8x256xf32>
    %392 = arith.mulf %391, %388 : vector<8x256xf32>
    %c22_144 = arith.constant 22 : index
    %c0_145 = arith.constant 0 : index
    %c0_146 = arith.constant 0 : index
    %c0_147 = arith.constant 0 : index
    %393 = vector.load %arg3[%c22_144, %c0_145, %c0_146, %c0_147] : memref<49x2x8x1xf32, #tpu.memory_space<vmem>>, vector<1x2x8x1xf32>
    %394 = vector.shape_cast %393 : vector<1x2x8x1xf32> to vector<2x8x1xf32>
    %395 = vector.extract_strided_slice %394 {offsets = [0, 0, 0], sizes = [1, 8, 1], strides = [1, 1, 1]} : vector<2x8x1xf32> to vector<1x8x1xf32>
    %396 = vector.shape_cast %395 : vector<1x8x1xf32> to vector<8x1xf32>
    %397 = vector.broadcast %396 : vector<8x1xf32> to vector<8x256xf32>
    %398 = arith.mulf %397, %392 : vector<8x256xf32>
    %399 = arith.addf %382, %398 : vector<8x256xf32>
    %400 = vector.extract_strided_slice %394 {offsets = [1, 0, 0], sizes = [1, 8, 1], strides = [1, 1, 1]} : vector<2x8x1xf32> to vector<1x8x1xf32>
    %401 = vector.shape_cast %400 : vector<1x8x1xf32> to vector<8x1xf32>
    %402 = vector.broadcast %401 : vector<8x1xf32> to vector<8x256xf32>
    %403 = arith.mulf %402, %392 : vector<8x256xf32>
    %404 = arith.addf %387, %403 : vector<8x256xf32>
    %c1_i32 = arith.constant 1 : i32
    %405 = tpu.dynamic_rotate %11 by %c1_i32 dim 1 : vector<8x256xf32>, i32 -> vector<8x256xf32>
    %c23 = arith.constant 23 : index
    %c0_148 = arith.constant 0 : index
    %c0_149 = arith.constant 0 : index
    %406 = vector.load %arg2[%c23, %c0_148, %c0_149] : memref<49x1x256xf32, #tpu.memory_space<vmem>>, vector<1x1x256xf32>
    %407 = vector.shape_cast %406 : vector<1x1x256xf32> to vector<1x256xf32>
    %408 = vector.broadcast %407 : vector<1x256xf32> to vector<8x256xf32>
    %409 = arith.mulf %408, %405 : vector<8x256xf32>
    %c23_150 = arith.constant 23 : index
    %c0_151 = arith.constant 0 : index
    %c0_152 = arith.constant 0 : index
    %c0_153 = arith.constant 0 : index
    %410 = vector.load %arg3[%c23_150, %c0_151, %c0_152, %c0_153] : memref<49x2x8x1xf32, #tpu.memory_space<vmem>>, vector<1x2x8x1xf32>
    %411 = vector.shape_cast %410 : vector<1x2x8x1xf32> to vector<2x8x1xf32>
    %412 = vector.extract_strided_slice %411 {offsets = [0, 0, 0], sizes = [1, 8, 1], strides = [1, 1, 1]} : vector<2x8x1xf32> to vector<1x8x1xf32>
    %413 = vector.shape_cast %412 : vector<1x8x1xf32> to vector<8x1xf32>
    %414 = vector.broadcast %413 : vector<8x1xf32> to vector<8x256xf32>
    %415 = arith.mulf %414, %409 : vector<8x256xf32>
    %416 = arith.addf %399, %415 : vector<8x256xf32>
    %417 = vector.extract_strided_slice %411 {offsets = [1, 0, 0], sizes = [1, 8, 1], strides = [1, 1, 1]} : vector<2x8x1xf32> to vector<1x8x1xf32>
    %418 = vector.shape_cast %417 : vector<1x8x1xf32> to vector<8x1xf32>
    %419 = vector.broadcast %418 : vector<8x1xf32> to vector<8x256xf32>
    %420 = arith.mulf %419, %409 : vector<8x256xf32>
    %421 = arith.addf %404, %420 : vector<8x256xf32>
    %c24 = arith.constant 24 : index
    %c0_154 = arith.constant 0 : index
    %c0_155 = arith.constant 0 : index
    %422 = vector.load %arg2[%c24, %c0_154, %c0_155] : memref<49x1x256xf32, #tpu.memory_space<vmem>>, vector<1x1x256xf32>
    %423 = vector.shape_cast %422 : vector<1x1x256xf32> to vector<1x256xf32>
    %424 = vector.broadcast %423 : vector<1x256xf32> to vector<8x256xf32>
    %425 = arith.mulf %424, %11 : vector<8x256xf32>
    %c24_156 = arith.constant 24 : index
    %c0_157 = arith.constant 0 : index
    %c0_158 = arith.constant 0 : index
    %c0_159 = arith.constant 0 : index
    %426 = vector.load %arg3[%c24_156, %c0_157, %c0_158, %c0_159] : memref<49x2x8x1xf32, #tpu.memory_space<vmem>>, vector<1x2x8x1xf32>
    %427 = vector.shape_cast %426 : vector<1x2x8x1xf32> to vector<2x8x1xf32>
    %428 = vector.extract_strided_slice %427 {offsets = [0, 0, 0], sizes = [1, 8, 1], strides = [1, 1, 1]} : vector<2x8x1xf32> to vector<1x8x1xf32>
    %429 = vector.shape_cast %428 : vector<1x8x1xf32> to vector<8x1xf32>
    %430 = vector.broadcast %429 : vector<8x1xf32> to vector<8x256xf32>
    %431 = arith.mulf %430, %425 : vector<8x256xf32>
    %432 = arith.addf %416, %431 : vector<8x256xf32>
    %433 = vector.extract_strided_slice %427 {offsets = [1, 0, 0], sizes = [1, 8, 1], strides = [1, 1, 1]} : vector<2x8x1xf32> to vector<1x8x1xf32>
    %434 = vector.shape_cast %433 : vector<1x8x1xf32> to vector<8x1xf32>
    %435 = vector.broadcast %434 : vector<8x1xf32> to vector<8x256xf32>
    %436 = arith.mulf %435, %425 : vector<8x256xf32>
    %437 = arith.addf %421, %436 : vector<8x256xf32>
    %c255_i32 = arith.constant 255 : i32
    %438 = tpu.dynamic_rotate %11 by %c255_i32 dim 1 : vector<8x256xf32>, i32 -> vector<8x256xf32>
    %c25 = arith.constant 25 : index
    %c0_160 = arith.constant 0 : index
    %c0_161 = arith.constant 0 : index
    %439 = vector.load %arg2[%c25, %c0_160, %c0_161] : memref<49x1x256xf32, #tpu.memory_space<vmem>>, vector<1x1x256xf32>
    %440 = vector.shape_cast %439 : vector<1x1x256xf32> to vector<1x256xf32>
    %441 = vector.broadcast %440 : vector<1x256xf32> to vector<8x256xf32>
    %442 = arith.mulf %441, %438 : vector<8x256xf32>
    %c25_162 = arith.constant 25 : index
    %c0_163 = arith.constant 0 : index
    %c0_164 = arith.constant 0 : index
    %c0_165 = arith.constant 0 : index
    %443 = vector.load %arg3[%c25_162, %c0_163, %c0_164, %c0_165] : memref<49x2x8x1xf32, #tpu.memory_space<vmem>>, vector<1x2x8x1xf32>
    %444 = vector.shape_cast %443 : vector<1x2x8x1xf32> to vector<2x8x1xf32>
    %445 = vector.extract_strided_slice %444 {offsets = [0, 0, 0], sizes = [1, 8, 1], strides = [1, 1, 1]} : vector<2x8x1xf32> to vector<1x8x1xf32>
    %446 = vector.shape_cast %445 : vector<1x8x1xf32> to vector<8x1xf32>
    %447 = vector.broadcast %446 : vector<8x1xf32> to vector<8x256xf32>
    %448 = arith.mulf %447, %442 : vector<8x256xf32>
    %449 = arith.addf %432, %448 : vector<8x256xf32>
    %450 = vector.extract_strided_slice %444 {offsets = [1, 0, 0], sizes = [1, 8, 1], strides = [1, 1, 1]} : vector<2x8x1xf32> to vector<1x8x1xf32>
    %451 = vector.shape_cast %450 : vector<1x8x1xf32> to vector<8x1xf32>
    %452 = vector.broadcast %451 : vector<8x1xf32> to vector<8x256xf32>
    %453 = arith.mulf %452, %442 : vector<8x256xf32>
    %454 = arith.addf %437, %453 : vector<8x256xf32>
    %c254_i32 = arith.constant 254 : i32
    %455 = tpu.dynamic_rotate %11 by %c254_i32 dim 1 : vector<8x256xf32>, i32 -> vector<8x256xf32>
    %c26 = arith.constant 26 : index
    %c0_166 = arith.constant 0 : index
    %c0_167 = arith.constant 0 : index
    %456 = vector.load %arg2[%c26, %c0_166, %c0_167] : memref<49x1x256xf32, #tpu.memory_space<vmem>>, vector<1x1x256xf32>
    %457 = vector.shape_cast %456 : vector<1x1x256xf32> to vector<1x256xf32>
    %458 = vector.broadcast %457 : vector<1x256xf32> to vector<8x256xf32>
    %459 = arith.mulf %458, %455 : vector<8x256xf32>
    %c26_168 = arith.constant 26 : index
    %c0_169 = arith.constant 0 : index
    %c0_170 = arith.constant 0 : index
    %c0_171 = arith.constant 0 : index
    %460 = vector.load %arg3[%c26_168, %c0_169, %c0_170, %c0_171] : memref<49x2x8x1xf32, #tpu.memory_space<vmem>>, vector<1x2x8x1xf32>
    %461 = vector.shape_cast %460 : vector<1x2x8x1xf32> to vector<2x8x1xf32>
    %462 = vector.extract_strided_slice %461 {offsets = [0, 0, 0], sizes = [1, 8, 1], strides = [1, 1, 1]} : vector<2x8x1xf32> to vector<1x8x1xf32>
    %463 = vector.shape_cast %462 : vector<1x8x1xf32> to vector<8x1xf32>
    %464 = vector.broadcast %463 : vector<8x1xf32> to vector<8x256xf32>
    %465 = arith.mulf %464, %459 : vector<8x256xf32>
    %466 = arith.addf %449, %465 : vector<8x256xf32>
    %467 = vector.extract_strided_slice %461 {offsets = [1, 0, 0], sizes = [1, 8, 1], strides = [1, 1, 1]} : vector<2x8x1xf32> to vector<1x8x1xf32>
    %468 = vector.shape_cast %467 : vector<1x8x1xf32> to vector<8x1xf32>
    %469 = vector.broadcast %468 : vector<8x1xf32> to vector<8x256xf32>
    %470 = arith.mulf %469, %459 : vector<8x256xf32>
    %471 = arith.addf %454, %470 : vector<8x256xf32>
    %c253_i32 = arith.constant 253 : i32
    %472 = tpu.dynamic_rotate %11 by %c253_i32 dim 1 : vector<8x256xf32>, i32 -> vector<8x256xf32>
    %c27 = arith.constant 27 : index
    %c0_172 = arith.constant 0 : index
    %c0_173 = arith.constant 0 : index
    %473 = vector.load %arg2[%c27, %c0_172, %c0_173] : memref<49x1x256xf32, #tpu.memory_space<vmem>>, vector<1x1x256xf32>
    %474 = vector.shape_cast %473 : vector<1x1x256xf32> to vector<1x256xf32>
    %475 = vector.broadcast %474 : vector<1x256xf32> to vector<8x256xf32>
    %476 = arith.mulf %475, %472 : vector<8x256xf32>
    %c27_174 = arith.constant 27 : index
    %c0_175 = arith.constant 0 : index
    %c0_176 = arith.constant 0 : index
    %c0_177 = arith.constant 0 : index
    %477 = vector.load %arg3[%c27_174, %c0_175, %c0_176, %c0_177] : memref<49x2x8x1xf32, #tpu.memory_space<vmem>>, vector<1x2x8x1xf32>
    %478 = vector.shape_cast %477 : vector<1x2x8x1xf32> to vector<2x8x1xf32>
    %479 = vector.extract_strided_slice %478 {offsets = [0, 0, 0], sizes = [1, 8, 1], strides = [1, 1, 1]} : vector<2x8x1xf32> to vector<1x8x1xf32>
    %480 = vector.shape_cast %479 : vector<1x8x1xf32> to vector<8x1xf32>
    %481 = vector.broadcast %480 : vector<8x1xf32> to vector<8x256xf32>
    %482 = arith.mulf %481, %476 : vector<8x256xf32>
    %483 = arith.addf %466, %482 : vector<8x256xf32>
    %484 = vector.extract_strided_slice %478 {offsets = [1, 0, 0], sizes = [1, 8, 1], strides = [1, 1, 1]} : vector<2x8x1xf32> to vector<1x8x1xf32>
    %485 = vector.shape_cast %484 : vector<1x8x1xf32> to vector<8x1xf32>
    %486 = vector.broadcast %485 : vector<8x1xf32> to vector<8x256xf32>
    %487 = arith.mulf %486, %476 : vector<8x256xf32>
    %488 = arith.addf %471, %487 : vector<8x256xf32>
    %c243_i32 = arith.constant 243 : i32
    %489 = tpu.dynamic_rotate %11 by %c243_i32 dim 1 : vector<8x256xf32>, i32 -> vector<8x256xf32>
    %c28 = arith.constant 28 : index
    %c0_178 = arith.constant 0 : index
    %c0_179 = arith.constant 0 : index
    %490 = vector.load %arg2[%c28, %c0_178, %c0_179] : memref<49x1x256xf32, #tpu.memory_space<vmem>>, vector<1x1x256xf32>
    %491 = vector.shape_cast %490 : vector<1x1x256xf32> to vector<1x256xf32>
    %492 = vector.broadcast %491 : vector<1x256xf32> to vector<8x256xf32>
    %493 = arith.mulf %492, %489 : vector<8x256xf32>
    %c28_180 = arith.constant 28 : index
    %c0_181 = arith.constant 0 : index
    %c0_182 = arith.constant 0 : index
    %c0_183 = arith.constant 0 : index
    %494 = vector.load %arg3[%c28_180, %c0_181, %c0_182, %c0_183] : memref<49x2x8x1xf32, #tpu.memory_space<vmem>>, vector<1x2x8x1xf32>
    %495 = vector.shape_cast %494 : vector<1x2x8x1xf32> to vector<2x8x1xf32>
    %496 = vector.extract_strided_slice %495 {offsets = [0, 0, 0], sizes = [1, 8, 1], strides = [1, 1, 1]} : vector<2x8x1xf32> to vector<1x8x1xf32>
    %497 = vector.shape_cast %496 : vector<1x8x1xf32> to vector<8x1xf32>
    %498 = vector.broadcast %497 : vector<8x1xf32> to vector<8x256xf32>
    %499 = arith.mulf %498, %493 : vector<8x256xf32>
    %500 = arith.addf %483, %499 : vector<8x256xf32>
    %501 = vector.extract_strided_slice %495 {offsets = [1, 0, 0], sizes = [1, 8, 1], strides = [1, 1, 1]} : vector<2x8x1xf32> to vector<1x8x1xf32>
    %502 = vector.shape_cast %501 : vector<1x8x1xf32> to vector<8x1xf32>
    %503 = vector.broadcast %502 : vector<8x1xf32> to vector<8x256xf32>
    %504 = arith.mulf %503, %493 : vector<8x256xf32>
    %505 = arith.addf %488, %504 : vector<8x256xf32>
    %c242_i32 = arith.constant 242 : i32
    %506 = tpu.dynamic_rotate %11 by %c242_i32 dim 1 : vector<8x256xf32>, i32 -> vector<8x256xf32>
    %c29 = arith.constant 29 : index
    %c0_184 = arith.constant 0 : index
    %c0_185 = arith.constant 0 : index
    %507 = vector.load %arg2[%c29, %c0_184, %c0_185] : memref<49x1x256xf32, #tpu.memory_space<vmem>>, vector<1x1x256xf32>
    %508 = vector.shape_cast %507 : vector<1x1x256xf32> to vector<1x256xf32>
    %509 = vector.broadcast %508 : vector<1x256xf32> to vector<8x256xf32>
    %510 = arith.mulf %509, %506 : vector<8x256xf32>
    %c29_186 = arith.constant 29 : index
    %c0_187 = arith.constant 0 : index
    %c0_188 = arith.constant 0 : index
    %c0_189 = arith.constant 0 : index
    %511 = vector.load %arg3[%c29_186, %c0_187, %c0_188, %c0_189] : memref<49x2x8x1xf32, #tpu.memory_space<vmem>>, vector<1x2x8x1xf32>
    %512 = vector.shape_cast %511 : vector<1x2x8x1xf32> to vector<2x8x1xf32>
    %513 = vector.extract_strided_slice %512 {offsets = [0, 0, 0], sizes = [1, 8, 1], strides = [1, 1, 1]} : vector<2x8x1xf32> to vector<1x8x1xf32>
    %514 = vector.shape_cast %513 : vector<1x8x1xf32> to vector<8x1xf32>
    %515 = vector.broadcast %514 : vector<8x1xf32> to vector<8x256xf32>
    %516 = arith.mulf %515, %510 : vector<8x256xf32>
    %517 = arith.addf %500, %516 : vector<8x256xf32>
    %518 = vector.extract_strided_slice %512 {offsets = [1, 0, 0], sizes = [1, 8, 1], strides = [1, 1, 1]} : vector<2x8x1xf32> to vector<1x8x1xf32>
    %519 = vector.shape_cast %518 : vector<1x8x1xf32> to vector<8x1xf32>
    %520 = vector.broadcast %519 : vector<8x1xf32> to vector<8x256xf32>
    %521 = arith.mulf %520, %510 : vector<8x256xf32>
    %522 = arith.addf %505, %521 : vector<8x256xf32>
    %c241_i32 = arith.constant 241 : i32
    %523 = tpu.dynamic_rotate %11 by %c241_i32 dim 1 : vector<8x256xf32>, i32 -> vector<8x256xf32>
    %c30 = arith.constant 30 : index
    %c0_190 = arith.constant 0 : index
    %c0_191 = arith.constant 0 : index
    %524 = vector.load %arg2[%c30, %c0_190, %c0_191] : memref<49x1x256xf32, #tpu.memory_space<vmem>>, vector<1x1x256xf32>
    %525 = vector.shape_cast %524 : vector<1x1x256xf32> to vector<1x256xf32>
    %526 = vector.broadcast %525 : vector<1x256xf32> to vector<8x256xf32>
    %527 = arith.mulf %526, %523 : vector<8x256xf32>
    %c30_192 = arith.constant 30 : index
    %c0_193 = arith.constant 0 : index
    %c0_194 = arith.constant 0 : index
    %c0_195 = arith.constant 0 : index
    %528 = vector.load %arg3[%c30_192, %c0_193, %c0_194, %c0_195] : memref<49x2x8x1xf32, #tpu.memory_space<vmem>>, vector<1x2x8x1xf32>
    %529 = vector.shape_cast %528 : vector<1x2x8x1xf32> to vector<2x8x1xf32>
    %530 = vector.extract_strided_slice %529 {offsets = [0, 0, 0], sizes = [1, 8, 1], strides = [1, 1, 1]} : vector<2x8x1xf32> to vector<1x8x1xf32>
    %531 = vector.shape_cast %530 : vector<1x8x1xf32> to vector<8x1xf32>
    %532 = vector.broadcast %531 : vector<8x1xf32> to vector<8x256xf32>
    %533 = arith.mulf %532, %527 : vector<8x256xf32>
    %534 = arith.addf %517, %533 : vector<8x256xf32>
    %535 = vector.extract_strided_slice %529 {offsets = [1, 0, 0], sizes = [1, 8, 1], strides = [1, 1, 1]} : vector<2x8x1xf32> to vector<1x8x1xf32>
    %536 = vector.shape_cast %535 : vector<1x8x1xf32> to vector<8x1xf32>
    %537 = vector.broadcast %536 : vector<8x1xf32> to vector<8x256xf32>
    %538 = arith.mulf %537, %527 : vector<8x256xf32>
    %539 = arith.addf %522, %538 : vector<8x256xf32>
    %c240_i32 = arith.constant 240 : i32
    %540 = tpu.dynamic_rotate %11 by %c240_i32 dim 1 : vector<8x256xf32>, i32 -> vector<8x256xf32>
    %c31 = arith.constant 31 : index
    %c0_196 = arith.constant 0 : index
    %c0_197 = arith.constant 0 : index
    %541 = vector.load %arg2[%c31, %c0_196, %c0_197] : memref<49x1x256xf32, #tpu.memory_space<vmem>>, vector<1x1x256xf32>
    %542 = vector.shape_cast %541 : vector<1x1x256xf32> to vector<1x256xf32>
    %543 = vector.broadcast %542 : vector<1x256xf32> to vector<8x256xf32>
    %544 = arith.mulf %543, %540 : vector<8x256xf32>
    %c31_198 = arith.constant 31 : index
    %c0_199 = arith.constant 0 : index
    %c0_200 = arith.constant 0 : index
    %c0_201 = arith.constant 0 : index
    %545 = vector.load %arg3[%c31_198, %c0_199, %c0_200, %c0_201] : memref<49x2x8x1xf32, #tpu.memory_space<vmem>>, vector<1x2x8x1xf32>
    %546 = vector.shape_cast %545 : vector<1x2x8x1xf32> to vector<2x8x1xf32>
    %547 = vector.extract_strided_slice %546 {offsets = [0, 0, 0], sizes = [1, 8, 1], strides = [1, 1, 1]} : vector<2x8x1xf32> to vector<1x8x1xf32>
    %548 = vector.shape_cast %547 : vector<1x8x1xf32> to vector<8x1xf32>
    %549 = vector.broadcast %548 : vector<8x1xf32> to vector<8x256xf32>
    %550 = arith.mulf %549, %544 : vector<8x256xf32>
    %551 = arith.addf %534, %550 : vector<8x256xf32>
    %552 = vector.extract_strided_slice %546 {offsets = [1, 0, 0], sizes = [1, 8, 1], strides = [1, 1, 1]} : vector<2x8x1xf32> to vector<1x8x1xf32>
    %553 = vector.shape_cast %552 : vector<1x8x1xf32> to vector<8x1xf32>
    %554 = vector.broadcast %553 : vector<8x1xf32> to vector<8x256xf32>
    %555 = arith.mulf %554, %544 : vector<8x256xf32>
    %556 = arith.addf %539, %555 : vector<8x256xf32>
    %c239_i32 = arith.constant 239 : i32
    %557 = tpu.dynamic_rotate %11 by %c239_i32 dim 1 : vector<8x256xf32>, i32 -> vector<8x256xf32>
    %c32 = arith.constant 32 : index
    %c0_202 = arith.constant 0 : index
    %c0_203 = arith.constant 0 : index
    %558 = vector.load %arg2[%c32, %c0_202, %c0_203] : memref<49x1x256xf32, #tpu.memory_space<vmem>>, vector<1x1x256xf32>
    %559 = vector.shape_cast %558 : vector<1x1x256xf32> to vector<1x256xf32>
    %560 = vector.broadcast %559 : vector<1x256xf32> to vector<8x256xf32>
    %561 = arith.mulf %560, %557 : vector<8x256xf32>
    %c32_204 = arith.constant 32 : index
    %c0_205 = arith.constant 0 : index
    %c0_206 = arith.constant 0 : index
    %c0_207 = arith.constant 0 : index
    %562 = vector.load %arg3[%c32_204, %c0_205, %c0_206, %c0_207] : memref<49x2x8x1xf32, #tpu.memory_space<vmem>>, vector<1x2x8x1xf32>
    %563 = vector.shape_cast %562 : vector<1x2x8x1xf32> to vector<2x8x1xf32>
    %564 = vector.extract_strided_slice %563 {offsets = [0, 0, 0], sizes = [1, 8, 1], strides = [1, 1, 1]} : vector<2x8x1xf32> to vector<1x8x1xf32>
    %565 = vector.shape_cast %564 : vector<1x8x1xf32> to vector<8x1xf32>
    %566 = vector.broadcast %565 : vector<8x1xf32> to vector<8x256xf32>
    %567 = arith.mulf %566, %561 : vector<8x256xf32>
    %568 = arith.addf %551, %567 : vector<8x256xf32>
    %569 = vector.extract_strided_slice %563 {offsets = [1, 0, 0], sizes = [1, 8, 1], strides = [1, 1, 1]} : vector<2x8x1xf32> to vector<1x8x1xf32>
    %570 = vector.shape_cast %569 : vector<1x8x1xf32> to vector<8x1xf32>
    %571 = vector.broadcast %570 : vector<8x1xf32> to vector<8x256xf32>
    %572 = arith.mulf %571, %561 : vector<8x256xf32>
    %573 = arith.addf %556, %572 : vector<8x256xf32>
    %c238_i32 = arith.constant 238 : i32
    %574 = tpu.dynamic_rotate %11 by %c238_i32 dim 1 : vector<8x256xf32>, i32 -> vector<8x256xf32>
    %c33 = arith.constant 33 : index
    %c0_208 = arith.constant 0 : index
    %c0_209 = arith.constant 0 : index
    %575 = vector.load %arg2[%c33, %c0_208, %c0_209] : memref<49x1x256xf32, #tpu.memory_space<vmem>>, vector<1x1x256xf32>
    %576 = vector.shape_cast %575 : vector<1x1x256xf32> to vector<1x256xf32>
    %577 = vector.broadcast %576 : vector<1x256xf32> to vector<8x256xf32>
    %578 = arith.mulf %577, %574 : vector<8x256xf32>
    %c33_210 = arith.constant 33 : index
    %c0_211 = arith.constant 0 : index
    %c0_212 = arith.constant 0 : index
    %c0_213 = arith.constant 0 : index
    %579 = vector.load %arg3[%c33_210, %c0_211, %c0_212, %c0_213] : memref<49x2x8x1xf32, #tpu.memory_space<vmem>>, vector<1x2x8x1xf32>
    %580 = vector.shape_cast %579 : vector<1x2x8x1xf32> to vector<2x8x1xf32>
    %581 = vector.extract_strided_slice %580 {offsets = [0, 0, 0], sizes = [1, 8, 1], strides = [1, 1, 1]} : vector<2x8x1xf32> to vector<1x8x1xf32>
    %582 = vector.shape_cast %581 : vector<1x8x1xf32> to vector<8x1xf32>
    %583 = vector.broadcast %582 : vector<8x1xf32> to vector<8x256xf32>
    %584 = arith.mulf %583, %578 : vector<8x256xf32>
    %585 = arith.addf %568, %584 : vector<8x256xf32>
    %586 = vector.extract_strided_slice %580 {offsets = [1, 0, 0], sizes = [1, 8, 1], strides = [1, 1, 1]} : vector<2x8x1xf32> to vector<1x8x1xf32>
    %587 = vector.shape_cast %586 : vector<1x8x1xf32> to vector<8x1xf32>
    %588 = vector.broadcast %587 : vector<8x1xf32> to vector<8x256xf32>
    %589 = arith.mulf %588, %578 : vector<8x256xf32>
    %590 = arith.addf %573, %589 : vector<8x256xf32>
    %c237_i32 = arith.constant 237 : i32
    %591 = tpu.dynamic_rotate %11 by %c237_i32 dim 1 : vector<8x256xf32>, i32 -> vector<8x256xf32>
    %c34 = arith.constant 34 : index
    %c0_214 = arith.constant 0 : index
    %c0_215 = arith.constant 0 : index
    %592 = vector.load %arg2[%c34, %c0_214, %c0_215] : memref<49x1x256xf32, #tpu.memory_space<vmem>>, vector<1x1x256xf32>
    %593 = vector.shape_cast %592 : vector<1x1x256xf32> to vector<1x256xf32>
    %594 = vector.broadcast %593 : vector<1x256xf32> to vector<8x256xf32>
    %595 = arith.mulf %594, %591 : vector<8x256xf32>
    %c34_216 = arith.constant 34 : index
    %c0_217 = arith.constant 0 : index
    %c0_218 = arith.constant 0 : index
    %c0_219 = arith.constant 0 : index
    %596 = vector.load %arg3[%c34_216, %c0_217, %c0_218, %c0_219] : memref<49x2x8x1xf32, #tpu.memory_space<vmem>>, vector<1x2x8x1xf32>
    %597 = vector.shape_cast %596 : vector<1x2x8x1xf32> to vector<2x8x1xf32>
    %598 = vector.extract_strided_slice %597 {offsets = [0, 0, 0], sizes = [1, 8, 1], strides = [1, 1, 1]} : vector<2x8x1xf32> to vector<1x8x1xf32>
    %599 = vector.shape_cast %598 : vector<1x8x1xf32> to vector<8x1xf32>
    %600 = vector.broadcast %599 : vector<8x1xf32> to vector<8x256xf32>
    %601 = arith.mulf %600, %595 : vector<8x256xf32>
    %602 = arith.addf %585, %601 : vector<8x256xf32>
    %603 = vector.extract_strided_slice %597 {offsets = [1, 0, 0], sizes = [1, 8, 1], strides = [1, 1, 1]} : vector<2x8x1xf32> to vector<1x8x1xf32>
    %604 = vector.shape_cast %603 : vector<1x8x1xf32> to vector<8x1xf32>
    %605 = vector.broadcast %604 : vector<8x1xf32> to vector<8x256xf32>
    %606 = arith.mulf %605, %595 : vector<8x256xf32>
    %607 = arith.addf %590, %606 : vector<8x256xf32>
    %c227_i32 = arith.constant 227 : i32
    %608 = tpu.dynamic_rotate %11 by %c227_i32 dim 1 : vector<8x256xf32>, i32 -> vector<8x256xf32>
    %c35 = arith.constant 35 : index
    %c0_220 = arith.constant 0 : index
    %c0_221 = arith.constant 0 : index
    %609 = vector.load %arg2[%c35, %c0_220, %c0_221] : memref<49x1x256xf32, #tpu.memory_space<vmem>>, vector<1x1x256xf32>
    %610 = vector.shape_cast %609 : vector<1x1x256xf32> to vector<1x256xf32>
    %611 = vector.broadcast %610 : vector<1x256xf32> to vector<8x256xf32>
    %612 = arith.mulf %611, %608 : vector<8x256xf32>
    %c35_222 = arith.constant 35 : index
    %c0_223 = arith.constant 0 : index
    %c0_224 = arith.constant 0 : index
    %c0_225 = arith.constant 0 : index
    %613 = vector.load %arg3[%c35_222, %c0_223, %c0_224, %c0_225] : memref<49x2x8x1xf32, #tpu.memory_space<vmem>>, vector<1x2x8x1xf32>
    %614 = vector.shape_cast %613 : vector<1x2x8x1xf32> to vector<2x8x1xf32>
    %615 = vector.extract_strided_slice %614 {offsets = [0, 0, 0], sizes = [1, 8, 1], strides = [1, 1, 1]} : vector<2x8x1xf32> to vector<1x8x1xf32>
    %616 = vector.shape_cast %615 : vector<1x8x1xf32> to vector<8x1xf32>
    %617 = vector.broadcast %616 : vector<8x1xf32> to vector<8x256xf32>
    %618 = arith.mulf %617, %612 : vector<8x256xf32>
    %619 = arith.addf %602, %618 : vector<8x256xf32>
    %620 = vector.extract_strided_slice %614 {offsets = [1, 0, 0], sizes = [1, 8, 1], strides = [1, 1, 1]} : vector<2x8x1xf32> to vector<1x8x1xf32>
    %621 = vector.shape_cast %620 : vector<1x8x1xf32> to vector<8x1xf32>
    %622 = vector.broadcast %621 : vector<8x1xf32> to vector<8x256xf32>
    %623 = arith.mulf %622, %612 : vector<8x256xf32>
    %624 = arith.addf %607, %623 : vector<8x256xf32>
    %c226_i32 = arith.constant 226 : i32
    %625 = tpu.dynamic_rotate %11 by %c226_i32 dim 1 : vector<8x256xf32>, i32 -> vector<8x256xf32>
    %c36 = arith.constant 36 : index
    %c0_226 = arith.constant 0 : index
    %c0_227 = arith.constant 0 : index
    %626 = vector.load %arg2[%c36, %c0_226, %c0_227] : memref<49x1x256xf32, #tpu.memory_space<vmem>>, vector<1x1x256xf32>
    %627 = vector.shape_cast %626 : vector<1x1x256xf32> to vector<1x256xf32>
    %628 = vector.broadcast %627 : vector<1x256xf32> to vector<8x256xf32>
    %629 = arith.mulf %628, %625 : vector<8x256xf32>
    %c36_228 = arith.constant 36 : index
    %c0_229 = arith.constant 0 : index
    %c0_230 = arith.constant 0 : index
    %c0_231 = arith.constant 0 : index
    %630 = vector.load %arg3[%c36_228, %c0_229, %c0_230, %c0_231] : memref<49x2x8x1xf32, #tpu.memory_space<vmem>>, vector<1x2x8x1xf32>
    %631 = vector.shape_cast %630 : vector<1x2x8x1xf32> to vector<2x8x1xf32>
    %632 = vector.extract_strided_slice %631 {offsets = [0, 0, 0], sizes = [1, 8, 1], strides = [1, 1, 1]} : vector<2x8x1xf32> to vector<1x8x1xf32>
    %633 = vector.shape_cast %632 : vector<1x8x1xf32> to vector<8x1xf32>
    %634 = vector.broadcast %633 : vector<8x1xf32> to vector<8x256xf32>
    %635 = arith.mulf %634, %629 : vector<8x256xf32>
    %636 = arith.addf %619, %635 : vector<8x256xf32>
    %637 = vector.extract_strided_slice %631 {offsets = [1, 0, 0], sizes = [1, 8, 1], strides = [1, 1, 1]} : vector<2x8x1xf32> to vector<1x8x1xf32>
    %638 = vector.shape_cast %637 : vector<1x8x1xf32> to vector<8x1xf32>
    %639 = vector.broadcast %638 : vector<8x1xf32> to vector<8x256xf32>
    %640 = arith.mulf %639, %629 : vector<8x256xf32>
    %641 = arith.addf %624, %640 : vector<8x256xf32>
    %c225_i32 = arith.constant 225 : i32
    %642 = tpu.dynamic_rotate %11 by %c225_i32 dim 1 : vector<8x256xf32>, i32 -> vector<8x256xf32>
    %c37 = arith.constant 37 : index
    %c0_232 = arith.constant 0 : index
    %c0_233 = arith.constant 0 : index
    %643 = vector.load %arg2[%c37, %c0_232, %c0_233] : memref<49x1x256xf32, #tpu.memory_space<vmem>>, vector<1x1x256xf32>
    %644 = vector.shape_cast %643 : vector<1x1x256xf32> to vector<1x256xf32>
    %645 = vector.broadcast %644 : vector<1x256xf32> to vector<8x256xf32>
    %646 = arith.mulf %645, %642 : vector<8x256xf32>
    %c37_234 = arith.constant 37 : index
    %c0_235 = arith.constant 0 : index
    %c0_236 = arith.constant 0 : index
    %c0_237 = arith.constant 0 : index
    %647 = vector.load %arg3[%c37_234, %c0_235, %c0_236, %c0_237] : memref<49x2x8x1xf32, #tpu.memory_space<vmem>>, vector<1x2x8x1xf32>
    %648 = vector.shape_cast %647 : vector<1x2x8x1xf32> to vector<2x8x1xf32>
    %649 = vector.extract_strided_slice %648 {offsets = [0, 0, 0], sizes = [1, 8, 1], strides = [1, 1, 1]} : vector<2x8x1xf32> to vector<1x8x1xf32>
    %650 = vector.shape_cast %649 : vector<1x8x1xf32> to vector<8x1xf32>
    %651 = vector.broadcast %650 : vector<8x1xf32> to vector<8x256xf32>
    %652 = arith.mulf %651, %646 : vector<8x256xf32>
    %653 = arith.addf %636, %652 : vector<8x256xf32>
    %654 = vector.extract_strided_slice %648 {offsets = [1, 0, 0], sizes = [1, 8, 1], strides = [1, 1, 1]} : vector<2x8x1xf32> to vector<1x8x1xf32>
    %655 = vector.shape_cast %654 : vector<1x8x1xf32> to vector<8x1xf32>
    %656 = vector.broadcast %655 : vector<8x1xf32> to vector<8x256xf32>
    %657 = arith.mulf %656, %646 : vector<8x256xf32>
    %658 = arith.addf %641, %657 : vector<8x256xf32>
    %c224_i32 = arith.constant 224 : i32
    %659 = tpu.dynamic_rotate %11 by %c224_i32 dim 1 : vector<8x256xf32>, i32 -> vector<8x256xf32>
    %c38 = arith.constant 38 : index
    %c0_238 = arith.constant 0 : index
    %c0_239 = arith.constant 0 : index
    %660 = vector.load %arg2[%c38, %c0_238, %c0_239] : memref<49x1x256xf32, #tpu.memory_space<vmem>>, vector<1x1x256xf32>
    %661 = vector.shape_cast %660 : vector<1x1x256xf32> to vector<1x256xf32>
    %662 = vector.broadcast %661 : vector<1x256xf32> to vector<8x256xf32>
    %663 = arith.mulf %662, %659 : vector<8x256xf32>
    %c38_240 = arith.constant 38 : index
    %c0_241 = arith.constant 0 : index
    %c0_242 = arith.constant 0 : index
    %c0_243 = arith.constant 0 : index
    %664 = vector.load %arg3[%c38_240, %c0_241, %c0_242, %c0_243] : memref<49x2x8x1xf32, #tpu.memory_space<vmem>>, vector<1x2x8x1xf32>
    %665 = vector.shape_cast %664 : vector<1x2x8x1xf32> to vector<2x8x1xf32>
    %666 = vector.extract_strided_slice %665 {offsets = [0, 0, 0], sizes = [1, 8, 1], strides = [1, 1, 1]} : vector<2x8x1xf32> to vector<1x8x1xf32>
    %667 = vector.shape_cast %666 : vector<1x8x1xf32> to vector<8x1xf32>
    %668 = vector.broadcast %667 : vector<8x1xf32> to vector<8x256xf32>
    %669 = arith.mulf %668, %663 : vector<8x256xf32>
    %670 = arith.addf %653, %669 : vector<8x256xf32>
    %671 = vector.extract_strided_slice %665 {offsets = [1, 0, 0], sizes = [1, 8, 1], strides = [1, 1, 1]} : vector<2x8x1xf32> to vector<1x8x1xf32>
    %672 = vector.shape_cast %671 : vector<1x8x1xf32> to vector<8x1xf32>
    %673 = vector.broadcast %672 : vector<8x1xf32> to vector<8x256xf32>
    %674 = arith.mulf %673, %663 : vector<8x256xf32>
    %675 = arith.addf %658, %674 : vector<8x256xf32>
    %c223_i32 = arith.constant 223 : i32
    %676 = tpu.dynamic_rotate %11 by %c223_i32 dim 1 : vector<8x256xf32>, i32 -> vector<8x256xf32>
    %c39 = arith.constant 39 : index
    %c0_244 = arith.constant 0 : index
    %c0_245 = arith.constant 0 : index
    %677 = vector.load %arg2[%c39, %c0_244, %c0_245] : memref<49x1x256xf32, #tpu.memory_space<vmem>>, vector<1x1x256xf32>
    %678 = vector.shape_cast %677 : vector<1x1x256xf32> to vector<1x256xf32>
    %679 = vector.broadcast %678 : vector<1x256xf32> to vector<8x256xf32>
    %680 = arith.mulf %679, %676 : vector<8x256xf32>
    %c39_246 = arith.constant 39 : index
    %c0_247 = arith.constant 0 : index
    %c0_248 = arith.constant 0 : index
    %c0_249 = arith.constant 0 : index
    %681 = vector.load %arg3[%c39_246, %c0_247, %c0_248, %c0_249] : memref<49x2x8x1xf32, #tpu.memory_space<vmem>>, vector<1x2x8x1xf32>
    %682 = vector.shape_cast %681 : vector<1x2x8x1xf32> to vector<2x8x1xf32>
    %683 = vector.extract_strided_slice %682 {offsets = [0, 0, 0], sizes = [1, 8, 1], strides = [1, 1, 1]} : vector<2x8x1xf32> to vector<1x8x1xf32>
    %684 = vector.shape_cast %683 : vector<1x8x1xf32> to vector<8x1xf32>
    %685 = vector.broadcast %684 : vector<8x1xf32> to vector<8x256xf32>
    %686 = arith.mulf %685, %680 : vector<8x256xf32>
    %687 = arith.addf %670, %686 : vector<8x256xf32>
    %688 = vector.extract_strided_slice %682 {offsets = [1, 0, 0], sizes = [1, 8, 1], strides = [1, 1, 1]} : vector<2x8x1xf32> to vector<1x8x1xf32>
    %689 = vector.shape_cast %688 : vector<1x8x1xf32> to vector<8x1xf32>
    %690 = vector.broadcast %689 : vector<8x1xf32> to vector<8x256xf32>
    %691 = arith.mulf %690, %680 : vector<8x256xf32>
    %692 = arith.addf %675, %691 : vector<8x256xf32>
    %c222_i32 = arith.constant 222 : i32
    %693 = tpu.dynamic_rotate %11 by %c222_i32 dim 1 : vector<8x256xf32>, i32 -> vector<8x256xf32>
    %c40 = arith.constant 40 : index
    %c0_250 = arith.constant 0 : index
    %c0_251 = arith.constant 0 : index
    %694 = vector.load %arg2[%c40, %c0_250, %c0_251] : memref<49x1x256xf32, #tpu.memory_space<vmem>>, vector<1x1x256xf32>
    %695 = vector.shape_cast %694 : vector<1x1x256xf32> to vector<1x256xf32>
    %696 = vector.broadcast %695 : vector<1x256xf32> to vector<8x256xf32>
    %697 = arith.mulf %696, %693 : vector<8x256xf32>
    %c40_252 = arith.constant 40 : index
    %c0_253 = arith.constant 0 : index
    %c0_254 = arith.constant 0 : index
    %c0_255 = arith.constant 0 : index
    %698 = vector.load %arg3[%c40_252, %c0_253, %c0_254, %c0_255] : memref<49x2x8x1xf32, #tpu.memory_space<vmem>>, vector<1x2x8x1xf32>
    %699 = vector.shape_cast %698 : vector<1x2x8x1xf32> to vector<2x8x1xf32>
    %700 = vector.extract_strided_slice %699 {offsets = [0, 0, 0], sizes = [1, 8, 1], strides = [1, 1, 1]} : vector<2x8x1xf32> to vector<1x8x1xf32>
    %701 = vector.shape_cast %700 : vector<1x8x1xf32> to vector<8x1xf32>
    %702 = vector.broadcast %701 : vector<8x1xf32> to vector<8x256xf32>
    %703 = arith.mulf %702, %697 : vector<8x256xf32>
    %704 = arith.addf %687, %703 : vector<8x256xf32>
    %705 = vector.extract_strided_slice %699 {offsets = [1, 0, 0], sizes = [1, 8, 1], strides = [1, 1, 1]} : vector<2x8x1xf32> to vector<1x8x1xf32>
    %706 = vector.shape_cast %705 : vector<1x8x1xf32> to vector<8x1xf32>
    %707 = vector.broadcast %706 : vector<8x1xf32> to vector<8x256xf32>
    %708 = arith.mulf %707, %697 : vector<8x256xf32>
    %709 = arith.addf %692, %708 : vector<8x256xf32>
    %c221_i32 = arith.constant 221 : i32
    %710 = tpu.dynamic_rotate %11 by %c221_i32 dim 1 : vector<8x256xf32>, i32 -> vector<8x256xf32>
    %c41 = arith.constant 41 : index
    %c0_256 = arith.constant 0 : index
    %c0_257 = arith.constant 0 : index
    %711 = vector.load %arg2[%c41, %c0_256, %c0_257] : memref<49x1x256xf32, #tpu.memory_space<vmem>>, vector<1x1x256xf32>
    %712 = vector.shape_cast %711 : vector<1x1x256xf32> to vector<1x256xf32>
    %713 = vector.broadcast %712 : vector<1x256xf32> to vector<8x256xf32>
    %714 = arith.mulf %713, %710 : vector<8x256xf32>
    %c41_258 = arith.constant 41 : index
    %c0_259 = arith.constant 0 : index
    %c0_260 = arith.constant 0 : index
    %c0_261 = arith.constant 0 : index
    %715 = vector.load %arg3[%c41_258, %c0_259, %c0_260, %c0_261] : memref<49x2x8x1xf32, #tpu.memory_space<vmem>>, vector<1x2x8x1xf32>
    %716 = vector.shape_cast %715 : vector<1x2x8x1xf32> to vector<2x8x1xf32>
    %717 = vector.extract_strided_slice %716 {offsets = [0, 0, 0], sizes = [1, 8, 1], strides = [1, 1, 1]} : vector<2x8x1xf32> to vector<1x8x1xf32>
    %718 = vector.shape_cast %717 : vector<1x8x1xf32> to vector<8x1xf32>
    %719 = vector.broadcast %718 : vector<8x1xf32> to vector<8x256xf32>
    %720 = arith.mulf %719, %714 : vector<8x256xf32>
    %721 = arith.addf %704, %720 : vector<8x256xf32>
    %722 = vector.extract_strided_slice %716 {offsets = [1, 0, 0], sizes = [1, 8, 1], strides = [1, 1, 1]} : vector<2x8x1xf32> to vector<1x8x1xf32>
    %723 = vector.shape_cast %722 : vector<1x8x1xf32> to vector<8x1xf32>
    %724 = vector.broadcast %723 : vector<8x1xf32> to vector<8x256xf32>
    %725 = arith.mulf %724, %714 : vector<8x256xf32>
    %726 = arith.addf %709, %725 : vector<8x256xf32>
    %c211_i32 = arith.constant 211 : i32
    %727 = tpu.dynamic_rotate %11 by %c211_i32 dim 1 : vector<8x256xf32>, i32 -> vector<8x256xf32>
    %c42 = arith.constant 42 : index
    %c0_262 = arith.constant 0 : index
    %c0_263 = arith.constant 0 : index
    %728 = vector.load %arg2[%c42, %c0_262, %c0_263] : memref<49x1x256xf32, #tpu.memory_space<vmem>>, vector<1x1x256xf32>
    %729 = vector.shape_cast %728 : vector<1x1x256xf32> to vector<1x256xf32>
    %730 = vector.broadcast %729 : vector<1x256xf32> to vector<8x256xf32>
    %731 = arith.mulf %730, %727 : vector<8x256xf32>
    %c42_264 = arith.constant 42 : index
    %c0_265 = arith.constant 0 : index
    %c0_266 = arith.constant 0 : index
    %c0_267 = arith.constant 0 : index
    %732 = vector.load %arg3[%c42_264, %c0_265, %c0_266, %c0_267] : memref<49x2x8x1xf32, #tpu.memory_space<vmem>>, vector<1x2x8x1xf32>
    %733 = vector.shape_cast %732 : vector<1x2x8x1xf32> to vector<2x8x1xf32>
    %734 = vector.extract_strided_slice %733 {offsets = [0, 0, 0], sizes = [1, 8, 1], strides = [1, 1, 1]} : vector<2x8x1xf32> to vector<1x8x1xf32>
    %735 = vector.shape_cast %734 : vector<1x8x1xf32> to vector<8x1xf32>
    %736 = vector.broadcast %735 : vector<8x1xf32> to vector<8x256xf32>
    %737 = arith.mulf %736, %731 : vector<8x256xf32>
    %738 = arith.addf %721, %737 : vector<8x256xf32>
    %739 = vector.extract_strided_slice %733 {offsets = [1, 0, 0], sizes = [1, 8, 1], strides = [1, 1, 1]} : vector<2x8x1xf32> to vector<1x8x1xf32>
    %740 = vector.shape_cast %739 : vector<1x8x1xf32> to vector<8x1xf32>
    %741 = vector.broadcast %740 : vector<8x1xf32> to vector<8x256xf32>
    %742 = arith.mulf %741, %731 : vector<8x256xf32>
    %743 = arith.addf %726, %742 : vector<8x256xf32>
    %c210_i32 = arith.constant 210 : i32
    %744 = tpu.dynamic_rotate %11 by %c210_i32 dim 1 : vector<8x256xf32>, i32 -> vector<8x256xf32>
    %c43 = arith.constant 43 : index
    %c0_268 = arith.constant 0 : index
    %c0_269 = arith.constant 0 : index
    %745 = vector.load %arg2[%c43, %c0_268, %c0_269] : memref<49x1x256xf32, #tpu.memory_space<vmem>>, vector<1x1x256xf32>
    %746 = vector.shape_cast %745 : vector<1x1x256xf32> to vector<1x256xf32>
    %747 = vector.broadcast %746 : vector<1x256xf32> to vector<8x256xf32>
    %748 = arith.mulf %747, %744 : vector<8x256xf32>
    %c43_270 = arith.constant 43 : index
    %c0_271 = arith.constant 0 : index
    %c0_272 = arith.constant 0 : index
    %c0_273 = arith.constant 0 : index
    %749 = vector.load %arg3[%c43_270, %c0_271, %c0_272, %c0_273] : memref<49x2x8x1xf32, #tpu.memory_space<vmem>>, vector<1x2x8x1xf32>
    %750 = vector.shape_cast %749 : vector<1x2x8x1xf32> to vector<2x8x1xf32>
    %751 = vector.extract_strided_slice %750 {offsets = [0, 0, 0], sizes = [1, 8, 1], strides = [1, 1, 1]} : vector<2x8x1xf32> to vector<1x8x1xf32>
    %752 = vector.shape_cast %751 : vector<1x8x1xf32> to vector<8x1xf32>
    %753 = vector.broadcast %752 : vector<8x1xf32> to vector<8x256xf32>
    %754 = arith.mulf %753, %748 : vector<8x256xf32>
    %755 = arith.addf %738, %754 : vector<8x256xf32>
    %756 = vector.extract_strided_slice %750 {offsets = [1, 0, 0], sizes = [1, 8, 1], strides = [1, 1, 1]} : vector<2x8x1xf32> to vector<1x8x1xf32>
    %757 = vector.shape_cast %756 : vector<1x8x1xf32> to vector<8x1xf32>
    %758 = vector.broadcast %757 : vector<8x1xf32> to vector<8x256xf32>
    %759 = arith.mulf %758, %748 : vector<8x256xf32>
    %760 = arith.addf %743, %759 : vector<8x256xf32>
    %c209_i32 = arith.constant 209 : i32
    %761 = tpu.dynamic_rotate %11 by %c209_i32 dim 1 : vector<8x256xf32>, i32 -> vector<8x256xf32>
    %c44 = arith.constant 44 : index
    %c0_274 = arith.constant 0 : index
    %c0_275 = arith.constant 0 : index
    %762 = vector.load %arg2[%c44, %c0_274, %c0_275] : memref<49x1x256xf32, #tpu.memory_space<vmem>>, vector<1x1x256xf32>
    %763 = vector.shape_cast %762 : vector<1x1x256xf32> to vector<1x256xf32>
    %764 = vector.broadcast %763 : vector<1x256xf32> to vector<8x256xf32>
    %765 = arith.mulf %764, %761 : vector<8x256xf32>
    %c44_276 = arith.constant 44 : index
    %c0_277 = arith.constant 0 : index
    %c0_278 = arith.constant 0 : index
    %c0_279 = arith.constant 0 : index
    %766 = vector.load %arg3[%c44_276, %c0_277, %c0_278, %c0_279] : memref<49x2x8x1xf32, #tpu.memory_space<vmem>>, vector<1x2x8x1xf32>
    %767 = vector.shape_cast %766 : vector<1x2x8x1xf32> to vector<2x8x1xf32>
    %768 = vector.extract_strided_slice %767 {offsets = [0, 0, 0], sizes = [1, 8, 1], strides = [1, 1, 1]} : vector<2x8x1xf32> to vector<1x8x1xf32>
    %769 = vector.shape_cast %768 : vector<1x8x1xf32> to vector<8x1xf32>
    %770 = vector.broadcast %769 : vector<8x1xf32> to vector<8x256xf32>
    %771 = arith.mulf %770, %765 : vector<8x256xf32>
    %772 = arith.addf %755, %771 : vector<8x256xf32>
    %773 = vector.extract_strided_slice %767 {offsets = [1, 0, 0], sizes = [1, 8, 1], strides = [1, 1, 1]} : vector<2x8x1xf32> to vector<1x8x1xf32>
    %774 = vector.shape_cast %773 : vector<1x8x1xf32> to vector<8x1xf32>
    %775 = vector.broadcast %774 : vector<8x1xf32> to vector<8x256xf32>
    %776 = arith.mulf %775, %765 : vector<8x256xf32>
    %777 = arith.addf %760, %776 : vector<8x256xf32>
    %c208_i32 = arith.constant 208 : i32
    %778 = tpu.dynamic_rotate %11 by %c208_i32 dim 1 : vector<8x256xf32>, i32 -> vector<8x256xf32>
    %c45 = arith.constant 45 : index
    %c0_280 = arith.constant 0 : index
    %c0_281 = arith.constant 0 : index
    %779 = vector.load %arg2[%c45, %c0_280, %c0_281] : memref<49x1x256xf32, #tpu.memory_space<vmem>>, vector<1x1x256xf32>
    %780 = vector.shape_cast %779 : vector<1x1x256xf32> to vector<1x256xf32>
    %781 = vector.broadcast %780 : vector<1x256xf32> to vector<8x256xf32>
    %782 = arith.mulf %781, %778 : vector<8x256xf32>
    %c45_282 = arith.constant 45 : index
    %c0_283 = arith.constant 0 : index
    %c0_284 = arith.constant 0 : index
    %c0_285 = arith.constant 0 : index
    %783 = vector.load %arg3[%c45_282, %c0_283, %c0_284, %c0_285] : memref<49x2x8x1xf32, #tpu.memory_space<vmem>>, vector<1x2x8x1xf32>
    %784 = vector.shape_cast %783 : vector<1x2x8x1xf32> to vector<2x8x1xf32>
    %785 = vector.extract_strided_slice %784 {offsets = [0, 0, 0], sizes = [1, 8, 1], strides = [1, 1, 1]} : vector<2x8x1xf32> to vector<1x8x1xf32>
    %786 = vector.shape_cast %785 : vector<1x8x1xf32> to vector<8x1xf32>
    %787 = vector.broadcast %786 : vector<8x1xf32> to vector<8x256xf32>
    %788 = arith.mulf %787, %782 : vector<8x256xf32>
    %789 = arith.addf %772, %788 : vector<8x256xf32>
    %790 = vector.extract_strided_slice %784 {offsets = [1, 0, 0], sizes = [1, 8, 1], strides = [1, 1, 1]} : vector<2x8x1xf32> to vector<1x8x1xf32>
    %791 = vector.shape_cast %790 : vector<1x8x1xf32> to vector<8x1xf32>
    %792 = vector.broadcast %791 : vector<8x1xf32> to vector<8x256xf32>
    %793 = arith.mulf %792, %782 : vector<8x256xf32>
    %794 = arith.addf %777, %793 : vector<8x256xf32>
    %c207_i32 = arith.constant 207 : i32
    %795 = tpu.dynamic_rotate %11 by %c207_i32 dim 1 : vector<8x256xf32>, i32 -> vector<8x256xf32>
    %c46 = arith.constant 46 : index
    %c0_286 = arith.constant 0 : index
    %c0_287 = arith.constant 0 : index
    %796 = vector.load %arg2[%c46, %c0_286, %c0_287] : memref<49x1x256xf32, #tpu.memory_space<vmem>>, vector<1x1x256xf32>
    %797 = vector.shape_cast %796 : vector<1x1x256xf32> to vector<1x256xf32>
    %798 = vector.broadcast %797 : vector<1x256xf32> to vector<8x256xf32>
    %799 = arith.mulf %798, %795 : vector<8x256xf32>
    %c46_288 = arith.constant 46 : index
    %c0_289 = arith.constant 0 : index
    %c0_290 = arith.constant 0 : index
    %c0_291 = arith.constant 0 : index
    %800 = vector.load %arg3[%c46_288, %c0_289, %c0_290, %c0_291] : memref<49x2x8x1xf32, #tpu.memory_space<vmem>>, vector<1x2x8x1xf32>
    %801 = vector.shape_cast %800 : vector<1x2x8x1xf32> to vector<2x8x1xf32>
    %802 = vector.extract_strided_slice %801 {offsets = [0, 0, 0], sizes = [1, 8, 1], strides = [1, 1, 1]} : vector<2x8x1xf32> to vector<1x8x1xf32>
    %803 = vector.shape_cast %802 : vector<1x8x1xf32> to vector<8x1xf32>
    %804 = vector.broadcast %803 : vector<8x1xf32> to vector<8x256xf32>
    %805 = arith.mulf %804, %799 : vector<8x256xf32>
    %806 = arith.addf %789, %805 : vector<8x256xf32>
    %807 = vector.extract_strided_slice %801 {offsets = [1, 0, 0], sizes = [1, 8, 1], strides = [1, 1, 1]} : vector<2x8x1xf32> to vector<1x8x1xf32>
    %808 = vector.shape_cast %807 : vector<1x8x1xf32> to vector<8x1xf32>
    %809 = vector.broadcast %808 : vector<8x1xf32> to vector<8x256xf32>
    %810 = arith.mulf %809, %799 : vector<8x256xf32>
    %811 = arith.addf %794, %810 : vector<8x256xf32>
    %c206_i32 = arith.constant 206 : i32
    %812 = tpu.dynamic_rotate %11 by %c206_i32 dim 1 : vector<8x256xf32>, i32 -> vector<8x256xf32>
    %c47 = arith.constant 47 : index
    %c0_292 = arith.constant 0 : index
    %c0_293 = arith.constant 0 : index
    %813 = vector.load %arg2[%c47, %c0_292, %c0_293] : memref<49x1x256xf32, #tpu.memory_space<vmem>>, vector<1x1x256xf32>
    %814 = vector.shape_cast %813 : vector<1x1x256xf32> to vector<1x256xf32>
    %815 = vector.broadcast %814 : vector<1x256xf32> to vector<8x256xf32>
    %816 = arith.mulf %815, %812 : vector<8x256xf32>
    %c47_294 = arith.constant 47 : index
    %c0_295 = arith.constant 0 : index
    %c0_296 = arith.constant 0 : index
    %c0_297 = arith.constant 0 : index
    %817 = vector.load %arg3[%c47_294, %c0_295, %c0_296, %c0_297] : memref<49x2x8x1xf32, #tpu.memory_space<vmem>>, vector<1x2x8x1xf32>
    %818 = vector.shape_cast %817 : vector<1x2x8x1xf32> to vector<2x8x1xf32>
    %819 = vector.extract_strided_slice %818 {offsets = [0, 0, 0], sizes = [1, 8, 1], strides = [1, 1, 1]} : vector<2x8x1xf32> to vector<1x8x1xf32>
    %820 = vector.shape_cast %819 : vector<1x8x1xf32> to vector<8x1xf32>
    %821 = vector.broadcast %820 : vector<8x1xf32> to vector<8x256xf32>
    %822 = arith.mulf %821, %816 : vector<8x256xf32>
    %823 = arith.addf %806, %822 : vector<8x256xf32>
    %824 = vector.extract_strided_slice %818 {offsets = [1, 0, 0], sizes = [1, 8, 1], strides = [1, 1, 1]} : vector<2x8x1xf32> to vector<1x8x1xf32>
    %825 = vector.shape_cast %824 : vector<1x8x1xf32> to vector<8x1xf32>
    %826 = vector.broadcast %825 : vector<8x1xf32> to vector<8x256xf32>
    %827 = arith.mulf %826, %816 : vector<8x256xf32>
    %828 = arith.addf %811, %827 : vector<8x256xf32>
    %c205_i32 = arith.constant 205 : i32
    %829 = tpu.dynamic_rotate %11 by %c205_i32 dim 1 : vector<8x256xf32>, i32 -> vector<8x256xf32>
    %c48 = arith.constant 48 : index
    %c0_298 = arith.constant 0 : index
    %c0_299 = arith.constant 0 : index
    %830 = vector.load %arg2[%c48, %c0_298, %c0_299] : memref<49x1x256xf32, #tpu.memory_space<vmem>>, vector<1x1x256xf32>
    %831 = vector.shape_cast %830 : vector<1x1x256xf32> to vector<1x256xf32>
    %832 = vector.broadcast %831 : vector<1x256xf32> to vector<8x256xf32>
    %833 = arith.mulf %832, %829 : vector<8x256xf32>
    %c48_300 = arith.constant 48 : index
    %c0_301 = arith.constant 0 : index
    %c0_302 = arith.constant 0 : index
    %c0_303 = arith.constant 0 : index
    %834 = vector.load %arg3[%c48_300, %c0_301, %c0_302, %c0_303] : memref<49x2x8x1xf32, #tpu.memory_space<vmem>>, vector<1x2x8x1xf32>
    %835 = vector.shape_cast %834 : vector<1x2x8x1xf32> to vector<2x8x1xf32>
    %836 = vector.extract_strided_slice %835 {offsets = [0, 0, 0], sizes = [1, 8, 1], strides = [1, 1, 1]} : vector<2x8x1xf32> to vector<1x8x1xf32>
    %837 = vector.shape_cast %836 : vector<1x8x1xf32> to vector<8x1xf32>
    %838 = vector.broadcast %837 : vector<8x1xf32> to vector<8x256xf32>
    %839 = arith.mulf %838, %833 : vector<8x256xf32>
    %840 = arith.addf %823, %839 : vector<8x256xf32>
    %841 = vector.extract_strided_slice %835 {offsets = [1, 0, 0], sizes = [1, 8, 1], strides = [1, 1, 1]} : vector<2x8x1xf32> to vector<1x8x1xf32>
    %842 = vector.shape_cast %841 : vector<1x8x1xf32> to vector<8x1xf32>
    %843 = vector.broadcast %842 : vector<8x1xf32> to vector<8x256xf32>
    %844 = arith.mulf %843, %833 : vector<8x256xf32>
    %845 = arith.addf %828, %844 : vector<8x256xf32>
    %846 = vector.extract_strided_slice %840 {offsets = [0, 0], sizes = [2, 256], strides = [1, 1]} : vector<8x256xf32> to vector<2x256xf32>
    %847 = vector.extract_strided_slice %840 {offsets = [2, 0], sizes = [2, 256], strides = [1, 1]} : vector<8x256xf32> to vector<2x256xf32>
    %848 = arith.addf %846, %847 : vector<2x256xf32>
    %849 = vector.extract_strided_slice %840 {offsets = [4, 0], sizes = [2, 256], strides = [1, 1]} : vector<8x256xf32> to vector<2x256xf32>
    %850 = arith.addf %848, %849 : vector<2x256xf32>
    %851 = vector.extract_strided_slice %840 {offsets = [6, 0], sizes = [2, 256], strides = [1, 1]} : vector<8x256xf32> to vector<2x256xf32>
    %852 = arith.addf %850, %851 : vector<2x256xf32>
    %853 = vector.extract_strided_slice %845 {offsets = [0, 0], sizes = [2, 256], strides = [1, 1]} : vector<8x256xf32> to vector<2x256xf32>
    %854 = vector.extract_strided_slice %845 {offsets = [2, 0], sizes = [2, 256], strides = [1, 1]} : vector<8x256xf32> to vector<2x256xf32>
    %855 = arith.addf %853, %854 : vector<2x256xf32>
    %856 = vector.extract_strided_slice %845 {offsets = [4, 0], sizes = [2, 256], strides = [1, 1]} : vector<8x256xf32> to vector<2x256xf32>
    %857 = arith.addf %855, %856 : vector<2x256xf32>
    %858 = vector.extract_strided_slice %845 {offsets = [6, 0], sizes = [2, 256], strides = [1, 1]} : vector<8x256xf32> to vector<2x256xf32>
    %859 = arith.addf %857, %858 : vector<2x256xf32>
    %cst_304 = arith.constant 0.000000e+00 : f32
    %860 = vector.broadcast %cst_304 : f32 to vector<2x256xf32>
    %861 = arith.maximumf %852, %860 : vector<2x256xf32>
    %862 = arith.negf %861 : vector<2x256xf32>
    %863 = math.exp %862 : vector<2x256xf32>
    %cst_305 = arith.constant 1.000000e+00 : f32
    %864 = vector.broadcast %cst_305 : f32 to vector<2x256xf32>
    %865 = arith.addf %864, %863 : vector<2x256xf32>
    %866 = arith.divf %864, %865 : vector<2x256xf32>
    %c0_306 = arith.constant 0 : index
    %c0_307 = arith.constant 0 : index
    %c0_308 = arith.constant 0 : index
    %867 = vector.load %arg4[%c0_306, %c0_307, %c0_308] : memref<2x2x256xf32, #tpu.memory_space<vmem>>, vector<2x1x256xf32>
    %868 = vector.shape_cast %867 : vector<2x1x256xf32> to vector<2x256xf32>
    %869 = vector.shape_cast %866 : vector<2x256xf32> to vector<2x1x256xf32>
    tpu.vector_store %arg4[%c0_306, %c0_307, %c0_308], %869 {strides = array<i32>} : memref<2x2x256xf32, #tpu.memory_space<vmem>>, vector<2x1x256xf32>,
    %cst_309 = arith.constant 0.000000e+00 : f32
    %870 = vector.broadcast %cst_309 : f32 to vector<2x256xf32>
    %871 = arith.maximumf %859, %870 : vector<2x256xf32>
    %872 = arith.negf %871 : vector<2x256xf32>
    %873 = math.exp %872 : vector<2x256xf32>
    %cst_310 = arith.constant 1.000000e+00 : f32
    %874 = vector.broadcast %cst_310 : f32 to vector<2x256xf32>
    %875 = arith.addf %874, %873 : vector<2x256xf32>
    %876 = arith.divf %874, %875 : vector<2x256xf32>
    %c0_311 = arith.constant 0 : index
    %c1_312 = arith.constant 1 : index
    %c0_313 = arith.constant 0 : index
    %877 = vector.load %arg4[%c0_311, %c1_312, %c0_313] : memref<2x2x256xf32, #tpu.memory_space<vmem>>, vector<2x1x256xf32>
    %878 = vector.shape_cast %877 : vector<2x1x256xf32> to vector<2x256xf32>
    %879 = vector.shape_cast %876 : vector<2x256xf32> to vector<2x1x256xf32>
    tpu.vector_store %arg4[%c0_311, %c1_312, %c0_313], %879 {strides = array<i32>} : memref<2x2x256xf32, #tpu.memory_space<vmem>>, vector<2x1x256xf32>,
    return
  }
  func.func @transform_0(%arg0: i32) -> (i32, i32, i32) {
    %c0_i32 = arith.constant 0 : i32
    %c0_i32_0 = arith.constant 0 : i32
    %c0_i32_1 = arith.constant 0 : i32
    return %arg0, %c0_i32, %c0_i32_0 : i32, i32, i32
  }
  func.func @transform_1(%arg0: i32) -> (i32, i32, i32) {
    %c0_i32 = arith.constant 0 : i32
    %c0_i32_0 = arith.constant 0 : i32
    %c0_i32_1 = arith.constant 0 : i32
    %c0_i32_2 = arith.constant 0 : i32
    return %c0_i32, %c0_i32_0, %c0_i32_1 : i32, i32, i32
  }
  func.func @transform_2(%arg0: i32) -> (i32, i32, i32, i32) {
    %c0_i32 = arith.constant 0 : i32
    %c0_i32_0 = arith.constant 0 : i32
    %c0_i32_1 = arith.constant 0 : i32
    %c0_i32_2 = arith.constant 0 : i32
    %c0_i32_3 = arith.constant 0 : i32
    return %c0_i32, %c0_i32_0, %c0_i32_1, %c0_i32_2 : i32, i32, i32, i32
  }
  func.func @transform_3(%arg0: i32) -> (i32, i32, i32) {
    %c0_i32 = arith.constant 0 : i32
    %c0_i32_0 = arith.constant 0 : i32
    %c0_i32_1 = arith.constant 0 : i32
    return %arg0, %c0_i32, %c0_i32_0 : i32, i32, i32
  }
}

</mosaic_0001>

<llo_original>
// kernel: tpu_custom_call.1
$region0: #{tpu_custom_call.1}
  #allocation0 [shape = 'u32[]', space=smem, size = 0x4, offset = 0x4, fixed_abs, tag = 'smem constant byte address 0x4 - core index']
  #allocation1 [shape = 'u32[144,128]{1,0:T(1,128)}', space=vmem, size = 0x12000, scoped, tag = 'internal scratch']
  %s0 = inlined_call_operand.vmem [shape: f32[2,4,256], index: 0, kind: input, shape index: {}]
  %s1 = inlined_call_operand.vmem [shape: f32[49,1,256], index: 1, kind: input, shape index: {}]
  %s2 = inlined_call_operand.vmem [shape: f32[49,2,8,1], index: 2, kind: input, shape index: {}]
  %s3 = inlined_call_operand.hbm [shape: f32[2,2,256], index: 3, kind: output, shape index: {}]
  %s4 = sld [smem:[#allocation0]]
  $region22: #{tpu_custom_call.1} parent=0
    _
  %s6 = ssub.s32 1, %s4
  %s7 = scalar_select 0, %s6, %s4
  $region1: #{tpu_custom_call.1} parent=0
    #allocation2 [shape = 'u8[4096]{0}', space=vmem, size = 0x1000, scoped, tag = 'output window, operand 0, single buffered']
    #allocation3 [shape = 's32[1]{0}', space=sflag, size = 0x4, scoped, tag = 'scoped memory for tpu_custom_call.1']
    %8 = vsyncpa [#allocation3], 0
    // Predicated region
    $region2: #{tpu_custom_call.1} parent=1 // pred_check
      _
    $region3: #{tpu_custom_call.1} parent=1 // pred_check_branch
      %10 = sbr.rel (0) target = $region5
    $region4: #{tpu_custom_call.1} parent=1 // pred_region
      _
    $region5: #{tpu_custom_call.1} parent=1 // pred_fallthru
      _
    // Predicated region
    $region6: #{tpu_custom_call.1} parent=1 // pred_check
      _
    $region7: #{tpu_custom_call.1} parent=1 // pred_check_branch
      %12 = sbr.rel (0) target = $region9
    $region8: #{tpu_custom_call.1} parent=1 // pred_region
      _
    $region9: #{tpu_custom_call.1} parent=1 // pred_fallthru
      _
    // Predicated region
    $region10: #{tpu_custom_call.1} parent=1 // pred_check
      _
    $region11: #{tpu_custom_call.1} parent=1 // pred_check_branch
      %14 = sbr.rel (0) target = $region13
    $region12: #{tpu_custom_call.1} parent=1 // pred_region
      _
    $region13: #{tpu_custom_call.1} parent=1 // pred_fallthru
      _
    %v15 = vld [vmem:[%s0] sm:$0xff]
    %v16 = vld [vmem:[%s0 + $0x8] sm:$0xff]
    %v19 = vcombine.high %v15, %v15
    %v20 = vcombine.high %v16, %v16
    %vm23 = vcmask 1041408
    %v24 = vsel %vm23, %v15, 0.0
    %v25 = vrot.slane %v24, 4
    %v26 = vadd.f32 %v24, %v25
    %v27 = vrot.slane %v26, 2
    %v28 = vadd.f32 %v26, %v27
    %v29 = vrot.slane %v28, 1
    %v30 = vadd.f32 %v28, %v29
    %v31 = vsel %vm23, %v19, 0.0
    %v32 = vrot.slane %v31, 4
    %v33 = vadd.f32 %v31, %v32
    %v34 = vrot.slane %v33, 2
    %v35 = vadd.f32 %v33, %v34
    %v36 = vrot.slane %v35, 1
    %v37 = vadd.f32 %v35, %v36
    %v38 = vsel %vm23, %v16, 0.0
    %v39 = vrot.slane %v38, 4
    %v40 = vadd.f32 %v38, %v39
    %v41 = vrot.slane %v40, 2
    %v42 = vadd.f32 %v40, %v41
    %v43 = vrot.slane %v42, 1
    %v44 = vadd.f32 %v42, %v43
    %v45 = vsel %vm23, %v20, 0.0
    %v46 = vrot.slane %v45, 4
    %v47 = vadd.f32 %v45, %v46
    %v48 = vrot.slane %v47, 2
    %v49 = vadd.f32 %v47, %v48
    %v50 = vrot.slane %v49, 1
    %v51 = vadd.f32 %v49, %v50
    %v52 = vrcp.pop 2.0
    %v53 = vmul.f32 %v30, %v52
    %v54 = vmul.f32 %v37, %v52
    %v55 = vmul.f32 %v44, %v52
    %v56 = vmul.f32 %v51, %v52
    %v57 = vsel %vm23, %v15, -inf
    %v58 = vrot.slane %v57, 4
    %v59 = vmax.f32 %v57, %v58
    %v60 = vrot.slane %v59, 2
    %v61 = vmax.f32 %v59, %v60
    %v62 = vrot.slane %v61, 1
    %v63 = vmax.f32 %v61, %v62
    %v64 = vsel %vm23, %v19, -inf
    %v65 = vrot.slane %v64, 4
    %v66 = vmax.f32 %v64, %v65
    %v67 = vrot.slane %v66, 2
    %v68 = vmax.f32 %v66, %v67
    %v69 = vrot.slane %v68, 1
    %v70 = vmax.f32 %v68, %v69
    %v71 = vsel %vm23, %v16, -inf
    %v72 = vrot.slane %v71, 4
    %v73 = vmax.f32 %v71, %v72
    %v74 = vrot.slane %v73, 2
    %v75 = vmax.f32 %v73, %v74
    %v76 = vrot.slane %v75, 1
    %v77 = vmax.f32 %v75, %v76
    %v78 = vsel %vm23, %v20, -inf
    %v79 = vrot.slane %v78, 4
    %v80 = vmax.f32 %v78, %v79
    %v81 = vrot.slane %v80, 2
    %v82 = vmax.f32 %v80, %v81
    %v83 = vrot.slane %v82, 1
    %v84 = vmax.f32 %v82, %v83
    %v85 = vrot.slane %v15, 2
    %v86 = vrot.slane %v19, 2
    %v87 = vrot.slane %v16, 2
    %v88 = vrot.slane %v20, 2
    %v93 = vsel %vm23, %v85, 0.0
    %v94 = vrot.slane %v93, 4
    %v95 = vadd.f32 %v93, %v94
    %v96 = vrot.slane %v95, 2
    %v97 = vadd.f32 %v95, %v96
    %v98 = vrot.slane %v97, 1
    %v99 = vadd.f32 %v97, %v98
    %v100 = vsel %vm23, %v86, 0.0
    %v101 = vrot.slane %v100, 4
    %v102 = vadd.f32 %v100, %v101
    %v103 = vrot.slane %v102, 2
    %v104 = vadd.f32 %v102, %v103
    %v105 = vrot.slane %v104, 1
    %v106 = vadd.f32 %v104, %v105
    %v107 = vsel %vm23, %v87, 0.0
    %v108 = vrot.slane %v107, 4
    %v109 = vadd.f32 %v107, %v108
    %v110 = vrot.slane %v109, 2
    %v111 = vadd.f32 %v109, %v110
    %v112 = vrot.slane %v111, 1
    %v113 = vadd.f32 %v111, %v112
    %v114 = vsel %vm23, %v88, 0.0
    %v115 = vrot.slane %v114, 4
    %v116 = vadd.f32 %v114, %v115
    %v117 = vrot.slane %v116, 2
    %v118 = vadd.f32 %v116, %v117
    %v119 = vrot.slane %v118, 1
    %v120 = vadd.f32 %v118, %v119
    %v121 = vmul.f32 %v99, %v52
    %v122 = vmul.f32 %v106, %v52
    %v123 = vmul.f32 %v113, %v52
    %v124 = vmul.f32 %v120, %v52
    %vm125 = vcmask 1043458
    %v126 = vsel %vm125, %v15, -inf
    %v127 = vrot.slane %v126, 4
    %v128 = vmax.f32 %v126, %v127
    %v129 = vrot.slane %v128, 2
    %v130 = vmax.f32 %v128, %v129
    %v131 = vrot.slane %v130, 1
    %v132 = vmax.f32 %v130, %v131
    %v133 = vsel %vm125, %v19, -inf
    %v134 = vrot.slane %v133, 4
    %v135 = vmax.f32 %v133, %v134
    %v136 = vrot.slane %v135, 2
    %v137 = vmax.f32 %v135, %v136
    %v138 = vrot.slane %v137, 1
    %v139 = vmax.f32 %v137, %v138
    %v140 = vsel %vm125, %v16, -inf
    %v141 = vrot.slane %v140, 4
    %v142 = vmax.f32 %v140, %v141
    %v143 = vrot.slane %v142, 2
    %v144 = vmax.f32 %v142, %v143
    %v145 = vrot.slane %v144, 1
    %v146 = vmax.f32 %v144, %v145
    %v147 = vsel %vm125, %v20, -inf
    %v148 = vrot.slane %v147, 4
    %v149 = vmax.f32 %v147, %v148
    %v150 = vrot.slane %v149, 2
    %v151 = vmax.f32 %v149, %v150
    %v152 = vrot.slane %v151, 1
    %v153 = vmax.f32 %v151, %v152
    %vm158 = vcmask 1041409
    %v159 = vsel %vm158, %v55, %v53
    %v160 = vsel %vm158, %v56, %v54
    %vm167 = vcmask 1043459
    %v168 = vsel %vm167, %v77, %v63
    %v169 = vsel %vm167, %v84, %v70
    %vm176 = vcmask 1045509
    %v177 = vsel %vm176, %v123, %v121
    %v178 = vsel %vm176, %v124, %v122
    %vm185 = vcmask 1047559
    %v186 = vsel %vm185, %v146, %v132
    %v187 = vsel %vm185, %v153, %v139
    %v190 = vsel %vm23, %v159, %v168
    %v191 = vsel %vm23, %v160, %v169
    %vm192 = vcmask 1043456
    %v193 = vsel %vm192, %v190, %v177
    %v194 = vsel %vm192, %v191, %v178
    %vm195 = vcmask 1045504
    %v196 = vsel %vm195, %v193, %v186
    %v197 = vsel %vm195, %v194, %v187
    %198 = vrot.lane.b32.xlu0 %v196, 51
    %v199 = vpop.permute.xlu0 %198
    %200 = vrot.lane.b32.xlu0 %v197, 51
    %v201 = vpop.permute.xlu0 %200
    %v202 = vlaneseq
    %v203 = vand.u32 %v202, 127
    %vm204 = vcmp.lt.s32.totalorder %v203, 51
    %v205 = vsel %vm204, %v199, %v201
    %v206 = vsel %vm204, %v201, %v199
    %v207 = vld [vmem:[%s1] sm:$0x3]
    %v209 = vlaneseq
    %v210 = vshrl.u32 %v209, 7
    %v211 = vsub.s32 0, %v210
    %v212 = vrot.slane %v207, %v211
    %v213 = vlaneseq
    %v214 = vshrl.u32 %v213, 7
    %v215 = vsub.s32 1, %v214
    %v216 = vrot.slane %v207, %v215
    %v219 = vmul.f32 %v212, %v206
    %v220 = vmul.f32 %v216, %v205
    %v221 = vld [vmem:[%s2] sm:$0xff]
    %v222 = vld [vmem:[%s2 + $0x8] sm:$0xff]
    %224 = vset.pattern.permute.xlu0 0
    %225 = vperm.xlu0 %224, %v221
    %v226 = vpop.permute.xlu0 %225
    %v228 = vmul.f32 %v226, %v219
    %v229 = vmul.f32 %v226, %v220
    %v230 = vadd.f32 %v228, 0.0
    %v231 = vadd.f32 %v229, 0.0
    %233 = vset.pattern.permute.xlu0 0
    %234 = vperm.xlu0 %233, %v222
    %v235 = vpop.permute.xlu0 %234
    %v237 = vmul.f32 %v235, %v219
    %v238 = vmul.f32 %v235, %v220
    %v239 = vadd.f32 %v237, 0.0
    %v240 = vadd.f32 %v238, 0.0
    %241 = vrot.lane.b32.xlu0 %v196, 50
    %v242 = vpop.permute.xlu0 %241
    %243 = vrot.lane.b32.xlu0 %v197, 50
    %v244 = vpop.permute.xlu0 %243
    %vm245 = vcmp.lt.s32.totalorder %v203, 50
    %v246 = vsel %vm245, %v242, %v244
    %v247 = vsel %vm245, %v244, %v242
    %s248 = scalar_lea.vmem %s1, 2
    %v249 = vld [vmem:[%s248] sm:$0x3]
    %v251 = vlaneseq
    %v252 = vshrl.u32 %v251, 7
    %v253 = vsub.s32 0, %v252
    %v254 = vrot.slane %v249, %v253
    %v255 = vlaneseq
    %v256 = vshrl.u32 %v255, 7
    %v257 = vsub.s32 1, %v256
    %v258 = vrot.slane %v249, %v257
    %v261 = vmul.f32 %v254, %v247
    %v262 = vmul.f32 %v258, %v246
    %s263 = scalar_lea.vmem %s2, 16
    %v264 = vld [vmem:[%s263] sm:$0xff]
    %v265 = vld [vmem:[%s263 + $0x8] sm:$0xff]
    %267 = vset.pattern.permute.xlu0 0
    %268 = vperm.xlu0 %267, %v264
    %v269 = vpop.permute.xlu0 %268
    %v271 = vmul.f32 %v269, %v261
    %v272 = vmul.f32 %v269, %v262
    %v273 = vadd.f32 %v230, %v271
    %v274 = vadd.f32 %v231, %v272
    %276 = vset.pattern.permute.xlu0 0
    %277 = vperm.xlu0 %276, %v265
    %v278 = vpop.permute.xlu0 %277
    %v280 = vmul.f32 %v278, %v261
    %v281 = vmul.f32 %v278, %v262
    %v282 = vadd.f32 %v239, %v280
    %v283 = vadd.f32 %v240, %v281
    %284 = vrot.lane.b32.xlu0 %v196, 49
    %v285 = vpop.permute.xlu0 %284
    %286 = vrot.lane.b32.xlu0 %v197, 49
    %v287 = vpop.permute.xlu0 %286
    %vm288 = vcmp.lt.s32.totalorder %v203, 49
    %v289 = vsel %vm288, %v285, %v287
    %v290 = vsel %vm288, %v287, %v285
    %s291 = scalar_lea.vmem %s1, 4
    %v292 = vld [vmem:[%s291] sm:$0x3]
    %v294 = vlaneseq
    %v295 = vshrl.u32 %v294, 7
    %v296 = vsub.s32 0, %v295
    %v297 = vrot.slane %v292, %v296
    %v298 = vlaneseq
    %v299 = vshrl.u32 %v298, 7
    %v300 = vsub.s32 1, %v299
    %v301 = vrot.slane %v292, %v300
    %v304 = vmul.f32 %v297, %v290
    %v305 = vmul.f32 %v301, %v289
    %s306 = scalar_lea.vmem %s2, 32
    %v307 = vld [vmem:[%s306] sm:$0xff]
    %v308 = vld [vmem:[%s306 + $0x8] sm:$0xff]
    %310 = vset.pattern.permute.xlu0 0
    %311 = vperm.xlu0 %310, %v307
    %v312 = vpop.permute.xlu0 %311
    %v314 = vmul.f32 %v312, %v304
    %v315 = vmul.f32 %v312, %v305
    %v316 = vadd.f32 %v273, %v314
    %v317 = vadd.f32 %v274, %v315
    %319 = vset.pattern.permute.xlu0 0
    %320 = vperm.xlu0 %319, %v308
    %v321 = vpop.permute.xlu0 %320
    %v323 = vmul.f32 %v321, %v304
    %v324 = vmul.f32 %v321, %v305
    %v325 = vadd.f32 %v282, %v323
    %v326 = vadd.f32 %v283, %v324
    %327 = vrot.lane.b32.xlu0 %v196, 48
    %v328 = vpop.permute.xlu0 %327
    %329 = vrot.lane.b32.xlu0 %v197, 48
    %v330 = vpop.permute.xlu0 %329
    %vm331 = vcmp.lt.s32.totalorder %v203, 48
    %v332 = vsel %vm331, %v328, %v330
    %v333 = vsel %vm331, %v330, %v328
    %s334 = scalar_lea.vmem %s1, 6
    %v335 = vld [vmem:[%s334] sm:$0x3]
    %v337 = vlaneseq
    %v338 = vshrl.u32 %v337, 7
    %v339 = vsub.s32 0, %v338
    %v340 = vrot.slane %v335, %v339
    %v341 = vlaneseq
    %v342 = vshrl.u32 %v341, 7
    %v343 = vsub.s32 1, %v342
    %v344 = vrot.slane %v335, %v343
    %v347 = vmul.f32 %v340, %v333
    %v348 = vmul.f32 %v344, %v332
    %s349 = scalar_lea.vmem %s2, 48
    %v350 = vld [vmem:[%s349] sm:$0xff]
    %v351 = vld [vmem:[%s349 + $0x8] sm:$0xff]
    %353 = vset.pattern.permute.xlu0 0
    %354 = vperm.xlu0 %353, %v350
    %v355 = vpop.permute.xlu0 %354
    %v357 = vmul.f32 %v355, %v347
    %v358 = vmul.f32 %v355, %v348
    %v359 = vadd.f32 %v316, %v357
    %v360 = vadd.f32 %v317, %v358
    %362 = vset.pattern.permute.xlu0 0
    %363 = vperm.xlu0 %362, %v351
    %v364 = vpop.permute.xlu0 %363
    %v366 = vmul.f32 %v364, %v347
    %v367 = vmul.f32 %v364, %v348
    %v368 = vadd.f32 %v325, %v366
    %v369 = vadd.f32 %v326, %v367
    %370 = vrot.lane.b32.xlu0 %v196, 47
    %v371 = vpop.permute.xlu0 %370
    %372 = vrot.lane.b32.xlu0 %v197, 47
    %v373 = vpop.permute.xlu0 %372
    %vm374 = vcmp.lt.s32.totalorder %v203, 47
    %v375 = vsel %vm374, %v371, %v373
    %v376 = vsel %vm374, %v373, %v371
    %s377 = scalar_lea.vmem %s1, 8
    %v378 = vld [vmem:[%s377] sm:$0x3]
    %v380 = vlaneseq
    %v381 = vshrl.u32 %v380, 7
    %v382 = vsub.s32 0, %v381
    %v383 = vrot.slane %v378, %v382
    %v384 = vlaneseq
    %v385 = vshrl.u32 %v384, 7
    %v386 = vsub.s32 1, %v385
    %v387 = vrot.slane %v378, %v386
    %v390 = vmul.f32 %v383, %v376
    %v391 = vmul.f32 %v387, %v375
    %s392 = scalar_lea.vmem %s2, 64
    %v393 = vld [vmem:[%s392] sm:$0xff]
    %v394 = vld [vmem:[%s392 + $0x8] sm:$0xff]
    %396 = vset.pattern.permute.xlu0 0
    %397 = vperm.xlu0 %396, %v393
    %v398 = vpop.permute.xlu0 %397
    %v400 = vmul.f32 %v398, %v390
    %v401 = vmul.f32 %v398, %v391
    %v402 = vadd.f32 %v359, %v400
    %v403 = vadd.f32 %v360, %v401
    %405 = vset.pattern.permute.xlu0 0
    %406 = vperm.xlu0 %405, %v394
    %v407 = vpop.permute.xlu0 %406
    %v409 = vmul.f32 %v407, %v390
    %v410 = vmul.f32 %v407, %v391
    %v411 = vadd.f32 %v368, %v409
    %v412 = vadd.f32 %v369, %v410
    %413 = vrot.lane.b32.xlu0 %v196, 46
    %v414 = vpop.permute.xlu0 %413
    %415 = vrot.lane.b32.xlu0 %v197, 46
    %v416 = vpop.permute.xlu0 %415
    %vm417 = vcmp.lt.s32.totalorder %v203, 46
    %v418 = vsel %vm417, %v414, %v416
    %v419 = vsel %vm417, %v416, %v414
    %s420 = scalar_lea.vmem %s1, 10
    %v421 = vld [vmem:[%s420] sm:$0x3]
    %v423 = vlaneseq
    %v424 = vshrl.u32 %v423, 7
    %v425 = vsub.s32 0, %v424
    %v426 = vrot.slane %v421, %v425
    %v427 = vlaneseq
    %v428 = vshrl.u32 %v427, 7
    %v429 = vsub.s32 1, %v428
    %v430 = vrot.slane %v421, %v429
    %v433 = vmul.f32 %v426, %v419
    %v434 = vmul.f32 %v430, %v418
    %s435 = scalar_lea.vmem %s2, 80
    %v436 = vld [vmem:[%s435] sm:$0xff]
    %v437 = vld [vmem:[%s435 + $0x8] sm:$0xff]
    %439 = vset.pattern.permute.xlu0 0
    %440 = vperm.xlu0 %439, %v436
    %v441 = vpop.permute.xlu0 %440
    %v443 = vmul.f32 %v441, %v433
    %v444 = vmul.f32 %v441, %v434
    %v445 = vadd.f32 %v402, %v443
    %v446 = vadd.f32 %v403, %v444
    %448 = vset.pattern.permute.xlu0 0
    %449 = vperm.xlu0 %448, %v437
    %v450 = vpop.permute.xlu0 %449
    %v452 = vmul.f32 %v450, %v433
    %v453 = vmul.f32 %v450, %v434
    %v454 = vadd.f32 %v411, %v452
    %v455 = vadd.f32 %v412, %v453
    %456 = vrot.lane.b32.xlu0 %v196, 45
    %v457 = vpop.permute.xlu0 %456
    %458 = vrot.lane.b32.xlu0 %v197, 45
    %v459 = vpop.permute.xlu0 %458
    %vm460 = vcmp.lt.s32.totalorder %v203, 45
    %v461 = vsel %vm460, %v457, %v459
    %v462 = vsel %vm460, %v459, %v457
    %s463 = scalar_lea.vmem %s1, 12
    %v464 = vld [vmem:[%s463] sm:$0x3]
    %v466 = vlaneseq
    %v467 = vshrl.u32 %v466, 7
    %v468 = vsub.s32 0, %v467
    %v469 = vrot.slane %v464, %v468
    %v470 = vlaneseq
    %v471 = vshrl.u32 %v470, 7
    %v472 = vsub.s32 1, %v471
    %v473 = vrot.slane %v464, %v472
    %v476 = vmul.f32 %v469, %v462
    %v477 = vmul.f32 %v473, %v461
    %s478 = scalar_lea.vmem %s2, 96
    %v479 = vld [vmem:[%s478] sm:$0xff]
    %v480 = vld [vmem:[%s478 + $0x8] sm:$0xff]
    %482 = vset.pattern.permute.xlu0 0
    %483 = vperm.xlu0 %482, %v479
    %v484 = vpop.permute.xlu0 %483
    %v486 = vmul.f32 %v484, %v476
    %v487 = vmul.f32 %v484, %v477
    %v488 = vadd.f32 %v445, %v486
    %v489 = vadd.f32 %v446, %v487
    %491 = vset.pattern.permute.xlu0 0
    %492 = vperm.xlu0 %491, %v480
    %v493 = vpop.permute.xlu0 %492
    %v495 = vmul.f32 %v493, %v476
    %v496 = vmul.f32 %v493, %v477
    %v497 = vadd.f32 %v454, %v495
    %v498 = vadd.f32 %v455, %v496
    %499 = vrot.lane.b32.xlu0 %v196, 35
    %v500 = vpop.permute.xlu0 %499
    %501 = vrot.lane.b32.xlu0 %v197, 35
    %v502 = vpop.permute.xlu0 %501
    %vm503 = vcmp.lt.s32.totalorder %v203, 35
    %v504 = vsel %vm503, %v500, %v502
    %v505 = vsel %vm503, %v502, %v500
    %s506 = scalar_lea.vmem %s1, 14
    %v507 = vld [vmem:[%s506] sm:$0x3]
    %v509 = vlaneseq
    %v510 = vshrl.u32 %v509, 7
    %v511 = vsub.s32 0, %v510
    %v512 = vrot.slane %v507, %v511
    %v513 = vlaneseq
    %v514 = vshrl.u32 %v513, 7
    %v515 = vsub.s32 1, %v514
    %v516 = vrot.slane %v507, %v515
    %v519 = vmul.f32 %v512, %v505
    %v520 = vmul.f32 %v516, %v504
    %s521 = scalar_lea.vmem %s2, 112
    %v522 = vld [vmem:[%s521] sm:$0xff]
    %v523 = vld [vmem:[%s521 + $0x8] sm:$0xff]
    %525 = vset.pattern.permute.xlu0 0
    %526 = vperm.xlu0 %525, %v522
    %v527 = vpop.permute.xlu0 %526
    %v529 = vmul.f32 %v527, %v519
    %v530 = vmul.f32 %v527, %v520
    %v531 = vadd.f32 %v488, %v529
    %v532 = vadd.f32 %v489, %v530
    %534 = vset.pattern.permute.xlu0 0
    %535 = vperm.xlu0 %534, %v523
    %v536 = vpop.permute.xlu0 %535
    %v538 = vmul.f32 %v536, %v519
    %v539 = vmul.f32 %v536, %v520
    %v540 = vadd.f32 %v497, %v538
    %v541 = vadd.f32 %v498, %v539
    %542 = vrot.lane.b32.xlu0 %v196, 34
    %v543 = vpop.permute.xlu0 %542
    %544 = vrot.lane.b32.xlu0 %v197, 34
    %v545 = vpop.permute.xlu0 %544
    %vm546 = vcmp.lt.s32.totalorder %v203, 34
    %v547 = vsel %vm546, %v543, %v545
    %v548 = vsel %vm546, %v545, %v543
    %s549 = scalar_lea.vmem %s1, 16
    %v550 = vld [vmem:[%s549] sm:$0x3]
    %v552 = vlaneseq
    %v553 = vshrl.u32 %v552, 7
    %v554 = vsub.s32 0, %v553
    %v555 = vrot.slane %v550, %v554
    %v556 = vlaneseq
    %v557 = vshrl.u32 %v556, 7
    %v558 = vsub.s32 1, %v557
    %v559 = vrot.slane %v550, %v558
    %v562 = vmul.f32 %v555, %v548
    %v563 = vmul.f32 %v559, %v547
    %s564 = scalar_lea.vmem %s2, 128
    %v565 = vld [vmem:[%s564] sm:$0xff]
    %v566 = vld [vmem:[%s564 + $0x8] sm:$0xff]
    %568 = vset.pattern.permute.xlu0 0
    %569 = vperm.xlu0 %568, %v565
    %v570 = vpop.permute.xlu0 %569
    %v572 = vmul.f32 %v570, %v562
    %v573 = vmul.f32 %v570, %v563
    %v574 = vadd.f32 %v531, %v572
    %v575 = vadd.f32 %v532, %v573
    %577 = vset.pattern.permute.xlu0 0
    %578 = vperm.xlu0 %577, %v566
    %v579 = vpop.permute.xlu0 %578
    %v581 = vmul.f32 %v579, %v562
    %v582 = vmul.f32 %v579, %v563
    %v583 = vadd.f32 %v540, %v581
    %v584 = vadd.f32 %v541, %v582
    %585 = vrot.lane.b32.xlu0 %v196, 33
    %v586 = vpop.permute.xlu0 %585
    %587 = vrot.lane.b32.xlu0 %v197, 33
    %v588 = vpop.permute.xlu0 %587
    %vm589 = vcmp.lt.s32.totalorder %v203, 33
    %v590 = vsel %vm589, %v586, %v588
    %v591 = vsel %vm589, %v588, %v586
    %s592 = scalar_lea.vmem %s1, 18
    %v593 = vld [vmem:[%s592] sm:$0x3]
    %v595 = vlaneseq
    %v596 = vshrl.u32 %v595, 7
    %v597 = vsub.s32 0, %v596
    %v598 = vrot.slane %v593, %v597
    %v599 = vlaneseq
    %v600 = vshrl.u32 %v599, 7
    %v601 = vsub.s32 1, %v600
    %v602 = vrot.slane %v593, %v601
    %v605 = vmul.f32 %v598, %v591
    %v606 = vmul.f32 %v602, %v590
    %s607 = scalar_lea.vmem %s2, 144
    %v608 = vld [vmem:[%s607] sm:$0xff]
    %v609 = vld [vmem:[%s607 + $0x8] sm:$0xff]
    %611 = vset.pattern.permute.xlu0 0
    %612 = vperm.xlu0 %611, %v608
    %v613 = vpop.permute.xlu0 %612
    %v615 = vmul.f32 %v613, %v605
    %v616 = vmul.f32 %v613, %v606
    %v617 = vadd.f32 %v574, %v615
    %v618 = vadd.f32 %v575, %v616
    %620 = vset.pattern.permute.xlu0 0
    %621 = vperm.xlu0 %620, %v609
    %v622 = vpop.permute.xlu0 %621
    %v624 = vmul.f32 %v622, %v605
    %v625 = vmul.f32 %v622, %v606
    %v626 = vadd.f32 %v583, %v624
    %v627 = vadd.f32 %v584, %v625
    %628 = vrot.lane.b32.xlu0 %v196, 32
    %v629 = vpop.permute.xlu0 %628
    %630 = vrot.lane.b32.xlu0 %v197, 32
    %v631 = vpop.permute.xlu0 %630
    %vm632 = vcmp.lt.s32.totalorder %v203, 32
    %v633 = vsel %vm632, %v629, %v631
    %v634 = vsel %vm632, %v631, %v629
    %s635 = scalar_lea.vmem %s1, 20
    %v636 = vld [vmem:[%s635] sm:$0x3]
    %v638 = vlaneseq
    %v639 = vshrl.u32 %v638, 7
    %v640 = vsub.s32 0, %v639
    %v641 = vrot.slane %v636, %v640
    %v642 = vlaneseq
    %v643 = vshrl.u32 %v642, 7
    %v644 = vsub.s32 1, %v643
    %v645 = vrot.slane %v636, %v644
    %v648 = vmul.f32 %v641, %v634
    %v649 = vmul.f32 %v645, %v633
    %s650 = scalar_lea.vmem %s2, 160
    %v651 = vld [vmem:[%s650] sm:$0xff]
    %v652 = vld [vmem:[%s650 + $0x8] sm:$0xff]
    %654 = vset.pattern.permute.xlu0 0
    %655 = vperm.xlu0 %654, %v651
    %v656 = vpop.permute.xlu0 %655
    %v658 = vmul.f32 %v656, %v648
    %v659 = vmul.f32 %v656, %v649
    %v660 = vadd.f32 %v617, %v658
    %v661 = vadd.f32 %v618, %v659
    %663 = vset.pattern.permute.xlu0 0
    %664 = vperm.xlu0 %663, %v652
    %v665 = vpop.permute.xlu0 %664
    %v667 = vmul.f32 %v665, %v648
    %v668 = vmul.f32 %v665, %v649
    %v669 = vadd.f32 %v626, %v667
    %v670 = vadd.f32 %v627, %v668
    %671 = vrot.lane.b32.xlu0 %v196, 31
    %v672 = vpop.permute.xlu0 %671
    %673 = vrot.lane.b32.xlu0 %v197, 31
    %v674 = vpop.permute.xlu0 %673
    %vm675 = vcmp.lt.s32.totalorder %v203, 31
    %v676 = vsel %vm675, %v672, %v674
    %v677 = vsel %vm675, %v674, %v672
    %s678 = scalar_lea.vmem %s1, 22
    %v679 = vld [vmem:[%s678] sm:$0x3]
    %v681 = vlaneseq
    %v682 = vshrl.u32 %v681, 7
    %v683 = vsub.s32 0, %v682
    %v684 = vrot.slane %v679, %v683
    %v685 = vlaneseq
    %v686 = vshrl.u32 %v685, 7
    %v687 = vsub.s32 1, %v686
    %v688 = vrot.slane %v679, %v687
    %v691 = vmul.f32 %v684, %v677
    %v692 = vmul.f32 %v688, %v676
    %s693 = scalar_lea.vmem %s2, 176
    %v694 = vld [vmem:[%s693] sm:$0xff]
    %v695 = vld [vmem:[%s693 + $0x8] sm:$0xff]
    %697 = vset.pattern.permute.xlu0 0
    %698 = vperm.xlu0 %697, %v694
    %v699 = vpop.permute.xlu0 %698
    %v701 = vmul.f32 %v699, %v691
    %v702 = vmul.f32 %v699, %v692
    %v703 = vadd.f32 %v660, %v701
    %v704 = vadd.f32 %v661, %v702
    %706 = vset.pattern.permute.xlu0 0
    %707 = vperm.xlu0 %706, %v695
    %v708 = vpop.permute.xlu0 %707
    %v710 = vmul.f32 %v708, %v691
    %v711 = vmul.f32 %v708, %v692
    %v712 = vadd.f32 %v669, %v710
    %v713 = vadd.f32 %v670, %v711
    %714 = vrot.lane.b32.xlu0 %v196, 30
    %v715 = vpop.permute.xlu0 %714
    %716 = vrot.lane.b32.xlu0 %v197, 30
    %v717 = vpop.permute.xlu0 %716
    %vm718 = vcmp.lt.s32.totalorder %v203, 30
    %v719 = vsel %vm718, %v715, %v717
    %v720 = vsel %vm718, %v717, %v715
    %s721 = scalar_lea.vmem %s1, 24
    %v722 = vld [vmem:[%s721] sm:$0x3]
    %v724 = vlaneseq
    %v725 = vshrl.u32 %v724, 7
    %v726 = vsub.s32 0, %v725
    %v727 = vrot.slane %v722, %v726
    %v728 = vlaneseq
    %v729 = vshrl.u32 %v728, 7
    %v730 = vsub.s32 1, %v729
    %v731 = vrot.slane %v722, %v730
    %v734 = vmul.f32 %v727, %v720
    %v735 = vmul.f32 %v731, %v719
    %s736 = scalar_lea.vmem %s2, 192
    %v737 = vld [vmem:[%s736] sm:$0xff]
    %v738 = vld [vmem:[%s736 + $0x8] sm:$0xff]
    %740 = vset.pattern.permute.xlu0 0
    %741 = vperm.xlu0 %740, %v737
    %v742 = vpop.permute.xlu0 %741
    %v744 = vmul.f32 %v742, %v734
    %v745 = vmul.f32 %v742, %v735
    %v746 = vadd.f32 %v703, %v744
    %v747 = vadd.f32 %v704, %v745
    %749 = vset.pattern.permute.xlu0 0
    %750 = vperm.xlu0 %749, %v738
    %v751 = vpop.permute.xlu0 %750
    %v753 = vmul.f32 %v751, %v734
    %v754 = vmul.f32 %v751, %v735
    %v755 = vadd.f32 %v712, %v753
    %v756 = vadd.f32 %v713, %v754
    %757 = vrot.lane.b32.xlu0 %v196, 29
    %v758 = vpop.permute.xlu0 %757
    %759 = vrot.lane.b32.xlu0 %v197, 29
    %v760 = vpop.permute.xlu0 %759
    %vm761 = vcmp.lt.s32.totalorder %v203, 29
    %v762 = vsel %vm761, %v758, %v760
    %v763 = vsel %vm761, %v760, %v758
    %s764 = scalar_lea.vmem %s1, 26
    %v765 = vld [vmem:[%s764] sm:$0x3]
    %v767 = vlaneseq
    %v768 = vshrl.u32 %v767, 7
    %v769 = vsub.s32 0, %v768
    %v770 = vrot.slane %v765, %v769
    %v771 = vlaneseq
    %v772 = vshrl.u32 %v771, 7
    %v773 = vsub.s32 1, %v772
    %v774 = vrot.slane %v765, %v773
    %v777 = vmul.f32 %v770, %v763
    %v778 = vmul.f32 %v774, %v762
    %s779 = scalar_lea.vmem %s2, 208
    %v780 = vld [vmem:[%s779] sm:$0xff]
    %v781 = vld [vmem:[%s779 + $0x8] sm:$0xff]
    %783 = vset.pattern.permute.xlu0 0
    %784 = vperm.xlu0 %783, %v780
    %v785 = vpop.permute.xlu0 %784
    %v787 = vmul.f32 %v785, %v777
    %v788 = vmul.f32 %v785, %v778
    %v789 = vadd.f32 %v746, %v787
    %v790 = vadd.f32 %v747, %v788
    %792 = vset.pattern.permute.xlu0 0
    %793 = vperm.xlu0 %792, %v781
    %v794 = vpop.permute.xlu0 %793
    %v796 = vmul.f32 %v794, %v777
    %v797 = vmul.f32 %v794, %v778
    %v798 = vadd.f32 %v755, %v796
    %v799 = vadd.f32 %v756, %v797
    %800 = vrot.lane.b32.xlu0 %v196, 19
    %v801 = vpop.permute.xlu0 %800
    %802 = vrot.lane.b32.xlu0 %v197, 19
    %v803 = vpop.permute.xlu0 %802
    %vm804 = vcmp.lt.s32.totalorder %v203, 19
    %v805 = vsel %vm804, %v801, %v803
    %v806 = vsel %vm804, %v803, %v801
    %s807 = scalar_lea.vmem %s1, 28
    %v808 = vld [vmem:[%s807] sm:$0x3]
    %v810 = vlaneseq
    %v811 = vshrl.u32 %v810, 7
    %v812 = vsub.s32 0, %v811
    %v813 = vrot.slane %v808, %v812
    %v814 = vlaneseq
    %v815 = vshrl.u32 %v814, 7
    %v816 = vsub.s32 1, %v815
    %v817 = vrot.slane %v808, %v816
    %v820 = vmul.f32 %v813, %v806
    %v821 = vmul.f32 %v817, %v805
    %s822 = scalar_lea.vmem %s2, 224
    %v823 = vld [vmem:[%s822] sm:$0xff]
    %v824 = vld [vmem:[%s822 + $0x8] sm:$0xff]
    %826 = vset.pattern.permute.xlu0 0
    %827 = vperm.xlu0 %826, %v823
    %v828 = vpop.permute.xlu0 %827
    %v830 = vmul.f32 %v828, %v820
    %v831 = vmul.f32 %v828, %v821
    %v832 = vadd.f32 %v789, %v830
    %v833 = vadd.f32 %v790, %v831
    %835 = vset.pattern.permute.xlu0 0
    %836 = vperm.xlu0 %835, %v824
    %v837 = vpop.permute.xlu0 %836
    %v839 = vmul.f32 %v837, %v820
    %v840 = vmul.f32 %v837, %v821
    %v841 = vadd.f32 %v798, %v839
    %v842 = vadd.f32 %v799, %v840
    %843 = vrot.lane.b32.xlu0 %v196, 18
    %v844 = vpop.permute.xlu0 %843
    %845 = vrot.lane.b32.xlu0 %v197, 18
    %v846 = vpop.permute.xlu0 %845
    %vm847 = vcmp.lt.s32.totalorder %v203, 18
    %v848 = vsel %vm847, %v844, %v846
    %v849 = vsel %vm847, %v846, %v844
    %s850 = scalar_lea.vmem %s1, 30
    %v851 = vld [vmem:[%s850] sm:$0x3]
    %v853 = vlaneseq
    %v854 = vshrl.u32 %v853, 7
    %v855 = vsub.s32 0, %v854
    %v856 = vrot.slane %v851, %v855
    %v857 = vlaneseq
    %v858 = vshrl.u32 %v857, 7
    %v859 = vsub.s32 1, %v858
    %v860 = vrot.slane %v851, %v859
    %v863 = vmul.f32 %v856, %v849
    %v864 = vmul.f32 %v860, %v848
    %s865 = scalar_lea.vmem %s2, 240
    %v866 = vld [vmem:[%s865] sm:$0xff]
    %v867 = vld [vmem:[%s865 + $0x8] sm:$0xff]
    %869 = vset.pattern.permute.xlu0 0
    %870 = vperm.xlu0 %869, %v866
    %v871 = vpop.permute.xlu0 %870
    %v873 = vmul.f32 %v871, %v863
    %v874 = vmul.f32 %v871, %v864
    %v875 = vadd.f32 %v832, %v873
    %v876 = vadd.f32 %v833, %v874
    %878 = vset.pattern.permute.xlu0 0
    %879 = vperm.xlu0 %878, %v867
    %v880 = vpop.permute.xlu0 %879
    %v882 = vmul.f32 %v880, %v863
    %v883 = vmul.f32 %v880, %v864
    %v884 = vadd.f32 %v841, %v882
    %v885 = vadd.f32 %v842, %v883
    %886 = vrot.lane.b32.xlu0 %v196, 17
    %v887 = vpop.permute.xlu0 %886
    %888 = vrot.lane.b32.xlu0 %v197, 17
    %v889 = vpop.permute.xlu0 %888
    %vm890 = vcmp.lt.s32.totalorder %v203, 17
    %v891 = vsel %vm890, %v887, %v889
    %v892 = vsel %vm890, %v889, %v887
    %s893 = scalar_lea.vmem %s1, 32
    %v894 = vld [vmem:[%s893] sm:$0x3]
    %v896 = vlaneseq
    %v897 = vshrl.u32 %v896, 7
    %v898 = vsub.s32 0, %v897
    %v899 = vrot.slane %v894, %v898
    %v900 = vlaneseq
    %v901 = vshrl.u32 %v900, 7
    %v902 = vsub.s32 1, %v901
    %v903 = vrot.slane %v894, %v902
    %v906 = vmul.f32 %v899, %v892
    %v907 = vmul.f32 %v903, %v891
    %s908 = scalar_lea.vmem %s2, 256
    %v909 = vld [vmem:[%s908] sm:$0xff]
    %v910 = vld [vmem:[%s908 + $0x8] sm:$0xff]
    %912 = vset.pattern.permute.xlu0 0
    %913 = vperm.xlu0 %912, %v909
    %v914 = vpop.permute.xlu0 %913
    %v916 = vmul.f32 %v914, %v906
    %v917 = vmul.f32 %v914, %v907
    %v918 = vadd.f32 %v875, %v916
    %v919 = vadd.f32 %v876, %v917
    %921 = vset.pattern.permute.xlu0 0
    %922 = vperm.xlu0 %921, %v910
    %v923 = vpop.permute.xlu0 %922
    %v925 = vmul.f32 %v923, %v906
    %v926 = vmul.f32 %v923, %v907
    %v927 = vadd.f32 %v884, %v925
    %v928 = vadd.f32 %v885, %v926
    %929 = vrot.lane.b32.xlu0 %v196, 16
    %v930 = vpop.permute.xlu0 %929
    %931 = vrot.lane.b32.xlu0 %v197, 16
    %v932 = vpop.permute.xlu0 %931
    %vm933 = vcmp.lt.s32.totalorder %v203, 16
    %v934 = vsel %vm933, %v930, %v932
    %v935 = vsel %vm933, %v932, %v930
    %s936 = scalar_lea.vmem %s1, 34
    %v937 = vld [vmem:[%s936] sm:$0x3]
    %v939 = vlaneseq
    %v940 = vshrl.u32 %v939, 7
    %v941 = vsub.s32 0, %v940
    %v942 = vrot.slane %v937, %v941
    %v943 = vlaneseq
    %v944 = vshrl.u32 %v943, 7
    %v945 = vsub.s32 1, %v944
    %v946 = vrot.slane %v937, %v945
    %v949 = vmul.f32 %v942, %v935
    %v950 = vmul.f32 %v946, %v934
    %s951 = scalar_lea.vmem %s2, 272
    %v952 = vld [vmem:[%s951] sm:$0xff]
    %v953 = vld [vmem:[%s951 + $0x8] sm:$0xff]
    %955 = vset.pattern.permute.xlu0 0
    %956 = vperm.xlu0 %955, %v952
    %v957 = vpop.permute.xlu0 %956
    %v959 = vmul.f32 %v957, %v949
    %v960 = vmul.f32 %v957, %v950
    %v961 = vadd.f32 %v918, %v959
    %v962 = vadd.f32 %v919, %v960
    %964 = vset.pattern.permute.xlu0 0
    %965 = vperm.xlu0 %964, %v953
    %v966 = vpop.permute.xlu0 %965
    %v968 = vmul.f32 %v966, %v949
    %v969 = vmul.f32 %v966, %v950
    %v970 = vadd.f32 %v927, %v968
    %v971 = vadd.f32 %v928, %v969
    %972 = vrot.lane.b32.xlu0 %v196, 15
    %v973 = vpop.permute.xlu0 %972
    %974 = vrot.lane.b32.xlu0 %v197, 15
    %v975 = vpop.permute.xlu0 %974
    %vm976 = vcmp.lt.s32.totalorder %v203, 15
    %v977 = vsel %vm976, %v973, %v975
    %v978 = vsel %vm976, %v975, %v973
    %s979 = scalar_lea.vmem %s1, 36
    %v980 = vld [vmem:[%s979] sm:$0x3]
    %v982 = vlaneseq
    %v983 = vshrl.u32 %v982, 7
    %v984 = vsub.s32 0, %v983
    %v985 = vrot.slane %v980, %v984
    %v986 = vlaneseq
    %v987 = vshrl.u32 %v986, 7
    %v988 = vsub.s32 1, %v987
    %v989 = vrot.slane %v980, %v988
    %v992 = vmul.f32 %v985, %v978
    %v993 = vmul.f32 %v989, %v977
    %s994 = scalar_lea.vmem %s2, 288
    %v995 = vld [vmem:[%s994] sm:$0xff]
    %v996 = vld [vmem:[%s994 + $0x8] sm:$0xff]
    %998 = vset.pattern.permute.xlu0 0
    %999 = vperm.xlu0 %998, %v995
    %v1000 = vpop.permute.xlu0 %999
    %v1002 = vmul.f32 %v1000, %v992
    %v1003 = vmul.f32 %v1000, %v993
    %v1004 = vadd.f32 %v961, %v1002
    %v1005 = vadd.f32 %v962, %v1003
    %1007 = vset.pattern.permute.xlu0 0
    %1008 = vperm.xlu0 %1007, %v996
    %v1009 = vpop.permute.xlu0 %1008
    %v1011 = vmul.f32 %v1009, %v992
    %v1012 = vmul.f32 %v1009, %v993
    %v1013 = vadd.f32 %v970, %v1011
    %v1014 = vadd.f32 %v971, %v1012
    %1015 = vrot.lane.b32.xlu0 %v196, 14
    %v1016 = vpop.permute.xlu0 %1015
    %1017 = vrot.lane.b32.xlu0 %v197, 14
    %v1018 = vpop.permute.xlu0 %1017
    %vm1019 = vcmp.lt.s32.totalorder %v203, 14
    %v1020 = vsel %vm1019, %v1016, %v1018
    %v1021 = vsel %vm1019, %v1018, %v1016
    %s1022 = scalar_lea.vmem %s1, 38
    %v1023 = vld [vmem:[%s1022] sm:$0x3]
    %v1025 = vlaneseq
    %v1026 = vshrl.u32 %v1025, 7
    %v1027 = vsub.s32 0, %v1026
    %v1028 = vrot.slane %v1023, %v1027
    %v1029 = vlaneseq
    %v1030 = vshrl.u32 %v1029, 7
    %v1031 = vsub.s32 1, %v1030
    %v1032 = vrot.slane %v1023, %v1031
    %v1035 = vmul.f32 %v1028, %v1021
    %v1036 = vmul.f32 %v1032, %v1020
    %s1037 = scalar_lea.vmem %s2, 304
    %v1038 = vld [vmem:[%s1037] sm:$0xff]
    %v1039 = vld [vmem:[%s1037 + $0x8] sm:$0xff]
    %1041 = vset.pattern.permute.xlu0 0
    %1042 = vperm.xlu0 %1041, %v1038
    %v1043 = vpop.permute.xlu0 %1042
    %v1045 = vmul.f32 %v1043, %v1035
    %v1046 = vmul.f32 %v1043, %v1036
    %v1047 = vadd.f32 %v1004, %v1045
    %v1048 = vadd.f32 %v1005, %v1046
    %1050 = vset.pattern.permute.xlu0 0
    %1051 = vperm.xlu0 %1050, %v1039
    %v1052 = vpop.permute.xlu0 %1051
    %v1054 = vmul.f32 %v1052, %v1035
    %v1055 = vmul.f32 %v1052, %v1036
    %v1056 = vadd.f32 %v1013, %v1054
    %v1057 = vadd.f32 %v1014, %v1055
    %1058 = vrot.lane.b32.xlu0 %v196, 13
    %v1059 = vpop.permute.xlu0 %1058
    %1060 = vrot.lane.b32.xlu0 %v197, 13
    %v1061 = vpop.permute.xlu0 %1060
    %vm1062 = vcmp.lt.s32.totalorder %v203, 13
    %v1063 = vsel %vm1062, %v1059, %v1061
    %v1064 = vsel %vm1062, %v1061, %v1059
    %s1065 = scalar_lea.vmem %s1, 40
    %v1066 = vld [vmem:[%s1065] sm:$0x3]
    %v1068 = vlaneseq
    %v1069 = vshrl.u32 %v1068, 7
    %v1070 = vsub.s32 0, %v1069
    %v1071 = vrot.slane %v1066, %v1070
    %v1072 = vlaneseq
    %v1073 = vshrl.u32 %v1072, 7
    %v1074 = vsub.s32 1, %v1073
    %v1075 = vrot.slane %v1066, %v1074
    %v1078 = vmul.f32 %v1071, %v1064
    %v1079 = vmul.f32 %v1075, %v1063
    %s1080 = scalar_lea.vmem %s2, 320
    %v1081 = vld [vmem:[%s1080] sm:$0xff]
    %v1082 = vld [vmem:[%s1080 + $0x8] sm:$0xff]
    %1084 = vset.pattern.permute.xlu0 0
    %1085 = vperm.xlu0 %1084, %v1081
    %v1086 = vpop.permute.xlu0 %1085
    %v1088 = vmul.f32 %v1086, %v1078
    %v1089 = vmul.f32 %v1086, %v1079
    %v1090 = vadd.f32 %v1047, %v1088
    %v1091 = vadd.f32 %v1048, %v1089
    %1093 = vset.pattern.permute.xlu0 0
    %1094 = vperm.xlu0 %1093, %v1082
    %v1095 = vpop.permute.xlu0 %1094
    %v1097 = vmul.f32 %v1095, %v1078
    %v1098 = vmul.f32 %v1095, %v1079
    %v1099 = vadd.f32 %v1056, %v1097
    %v1100 = vadd.f32 %v1057, %v1098
    %1101 = vrot.lane.b32.xlu0 %v196, 3
    %v1102 = vpop.permute.xlu0 %1101
    %1103 = vrot.lane.b32.xlu0 %v197, 3
    %v1104 = vpop.permute.xlu0 %1103
    %vm1105 = vcmp.lt.s32.totalorder %v203, 3
    %v1106 = vsel %vm1105, %v1102, %v1104
    %v1107 = vsel %vm1105, %v1104, %v1102
    %s1108 = scalar_lea.vmem %s1, 42
    %v1109 = vld [vmem:[%s1108] sm:$0x3]
    %v1111 = vlaneseq
    %v1112 = vshrl.u32 %v1111, 7
    %v1113 = vsub.s32 0, %v1112
    %v1114 = vrot.slane %v1109, %v1113
    %v1115 = vlaneseq
    %v1116 = vshrl.u32 %v1115, 7
    %v1117 = vsub.s32 1, %v1116
    %v1118 = vrot.slane %v1109, %v1117
    %v1121 = vmul.f32 %v1114, %v1107
    %v1122 = vmul.f32 %v1118, %v1106
    %s1123 = scalar_lea.vmem %s2, 336
    %v1124 = vld [vmem:[%s1123] sm:$0xff]
    %v1125 = vld [vmem:[%s1123 + $0x8] sm:$0xff]
    %1127 = vset.pattern.permute.xlu0 0
    %1128 = vperm.xlu0 %1127, %v1124
    %v1129 = vpop.permute.xlu0 %1128
    %v1131 = vmul.f32 %v1129, %v1121
    %v1132 = vmul.f32 %v1129, %v1122
    %v1133 = vadd.f32 %v1090, %v1131
    %v1134 = vadd.f32 %v1091, %v1132
    %1136 = vset.pattern.permute.xlu0 0
    %1137 = vperm.xlu0 %1136, %v1125
    %v1138 = vpop.permute.xlu0 %1137
    %v1140 = vmul.f32 %v1138, %v1121
    %v1141 = vmul.f32 %v1138, %v1122
    %v1142 = vadd.f32 %v1099, %v1140
    %v1143 = vadd.f32 %v1100, %v1141
    %1144 = vrot.lane.b32.xlu0 %v196, 2
    %v1145 = vpop.permute.xlu0 %1144
    %1146 = vrot.lane.b32.xlu0 %v197, 2
    %v1147 = vpop.permute.xlu0 %1146
    %vm1148 = vcmp.lt.s32.totalorder %v203, 2
    %v1149 = vsel %vm1148, %v1145, %v1147
    %v1150 = vsel %vm1148, %v1147, %v1145
    %s1151 = scalar_lea.vmem %s1, 44
    %v1152 = vld [vmem:[%s1151] sm:$0x3]
    %v1154 = vlaneseq
    %v1155 = vshrl.u32 %v1154, 7
    %v1156 = vsub.s32 0, %v1155
    %v1157 = vrot.slane %v1152, %v1156
    %v1158 = vlaneseq
    %v1159 = vshrl.u32 %v1158, 7
    %v1160 = vsub.s32 1, %v1159
    %v1161 = vrot.slane %v1152, %v1160
    %v1164 = vmul.f32 %v1157, %v1150
    %v1165 = vmul.f32 %v1161, %v1149
    %s1166 = scalar_lea.vmem %s2, 352
    %v1167 = vld [vmem:[%s1166] sm:$0xff]
    %v1168 = vld [vmem:[%s1166 + $0x8] sm:$0xff]
    %1170 = vset.pattern.permute.xlu0 0
    %1171 = vperm.xlu0 %1170, %v1167
    %v1172 = vpop.permute.xlu0 %1171
    %v1174 = vmul.f32 %v1172, %v1164
    %v1175 = vmul.f32 %v1172, %v1165
    %v1176 = vadd.f32 %v1133, %v1174
    %v1177 = vadd.f32 %v1134, %v1175
    %1179 = vset.pattern.permute.xlu0 0
    %1180 = vperm.xlu0 %1179, %v1168
    %v1181 = vpop.permute.xlu0 %1180
    %v1183 = vmul.f32 %v1181, %v1164
    %v1184 = vmul.f32 %v1181, %v1165
    %v1185 = vadd.f32 %v1142, %v1183
    %v1186 = vadd.f32 %v1143, %v1184
    %1187 = vrot.lane.b32.xlu0 %v196, 1
    %v1188 = vpop.permute.xlu0 %1187
    %1189 = vrot.lane.b32.xlu0 %v197, 1
    %v1190 = vpop.permute.xlu0 %1189
    %vm1191 = vcmp.lt.s32.totalorder %v203, 1
    %v1192 = vsel %vm1191, %v1188, %v1190
    %v1193 = vsel %vm1191, %v1190, %v1188
    %s1194 = scalar_lea.vmem %s1, 46
    %v1195 = vld [vmem:[%s1194] sm:$0x3]
    %v1197 = vlaneseq
    %v1198 = vshrl.u32 %v1197, 7
    %v1199 = vsub.s32 0, %v1198
    %v1200 = vrot.slane %v1195, %v1199
    %v1201 = vlaneseq
    %v1202 = vshrl.u32 %v1201, 7
    %v1203 = vsub.s32 1, %v1202
    %v1204 = vrot.slane %v1195, %v1203
    %v1207 = vmul.f32 %v1200, %v1193
    %v1208 = vmul.f32 %v1204, %v1192
    %s1209 = scalar_lea.vmem %s2, 368
    %v1210 = vld [vmem:[%s1209] sm:$0xff]
    %v1211 = vld [vmem:[%s1209 + $0x8] sm:$0xff]
    %1213 = vset.pattern.permute.xlu0 0
    %1214 = vperm.xlu0 %1213, %v1210
    %v1215 = vpop.permute.xlu0 %1214
    %v1217 = vmul.f32 %v1215, %v1207
    %v1218 = vmul.f32 %v1215, %v1208
    %v1219 = vadd.f32 %v1176, %v1217
    %v1220 = vadd.f32 %v1177, %v1218
    %1222 = vset.pattern.permute.xlu0 0
    %1223 = vperm.xlu0 %1222, %v1211
    %v1224 = vpop.permute.xlu0 %1223
    %v1226 = vmul.f32 %v1224, %v1207
    %v1227 = vmul.f32 %v1224, %v1208
    %v1228 = vadd.f32 %v1185, %v1226
    %v1229 = vadd.f32 %v1186, %v1227
    %s1230 = scalar_lea.vmem %s1, 48
    %v1231 = vld [vmem:[%s1230] sm:$0x3]
    %v1233 = vlaneseq
    %v1234 = vshrl.u32 %v1233, 7
    %v1235 = vsub.s32 0, %v1234
    %v1236 = vrot.slane %v1231, %v1235
    %v1237 = vlaneseq
    %v1238 = vshrl.u32 %v1237, 7
    %v1239 = vsub.s32 1, %v1238
    %v1240 = vrot.slane %v1231, %v1239
    %v1243 = vmul.f32 %v1236, %v196
    %v1244 = vmul.f32 %v1240, %v197
    %s1245 = scalar_lea.vmem %s2, 384
    %v1246 = vld [vmem:[%s1245] sm:$0xff]
    %v1247 = vld [vmem:[%s1245 + $0x8] sm:$0xff]
    %1249 = vset.pattern.permute.xlu0 0
    %1250 = vperm.xlu0 %1249, %v1246
    %v1251 = vpop.permute.xlu0 %1250
    %v1253 = vmul.f32 %v1251, %v1243
    %v1254 = vmul.f32 %v1251, %v1244
    %v1255 = vadd.f32 %v1219, %v1253
    %v1256 = vadd.f32 %v1220, %v1254
    %1258 = vset.pattern.permute.xlu0 0
    %1259 = vperm.xlu0 %1258, %v1247
    %v1260 = vpop.permute.xlu0 %1259
    %v1262 = vmul.f32 %v1260, %v1243
    %v1263 = vmul.f32 %v1260, %v1244
    %v1264 = vadd.f32 %v1228, %v1262
    %v1265 = vadd.f32 %v1229, %v1263
    %1266 = vrot.lane.b32.xlu0 %v196, 127
    %v1267 = vpop.permute.xlu0 %1266
    %1268 = vrot.lane.b32.xlu0 %v197, 127
    %v1269 = vpop.permute.xlu0 %1268
    %vm1270 = vcmp.lt.s32.totalorder %v203, 127
    %v1271 = vsel %vm1270, %v1267, %v1269
    %v1272 = vsel %vm1270, %v1269, %v1267
    %s1273 = scalar_lea.vmem %s1, 50
    %v1274 = vld [vmem:[%s1273] sm:$0x3]
    %v1276 = vlaneseq
    %v1277 = vshrl.u32 %v1276, 7
    %v1278 = vsub.s32 0, %v1277
    %v1279 = vrot.slane %v1274, %v1278
    %v1280 = vlaneseq
    %v1281 = vshrl.u32 %v1280, 7
    %v1282 = vsub.s32 1, %v1281
    %v1283 = vrot.slane %v1274, %v1282
    %v1286 = vmul.f32 %v1279, %v1271
    %v1287 = vmul.f32 %v1283, %v1272
    %s1288 = scalar_lea.vmem %s2, 400
    %v1289 = vld [vmem:[%s1288] sm:$0xff]
    %v1290 = vld [vmem:[%s1288 + $0x8] sm:$0xff]
    %1292 = vset.pattern.permute.xlu0 0
    %1293 = vperm.xlu0 %1292, %v1289
    %v1294 = vpop.permute.xlu0 %1293
    %v1296 = vmul.f32 %v1294, %v1286
    %v1297 = vmul.f32 %v1294, %v1287
    %v1298 = vadd.f32 %v1255, %v1296
    %v1299 = vadd.f32 %v1256, %v1297
    %1301 = vset.pattern.permute.xlu0 0
    %1302 = vperm.xlu0 %1301, %v1290
    %v1303 = vpop.permute.xlu0 %1302
    %v1305 = vmul.f32 %v1303, %v1286
    %v1306 = vmul.f32 %v1303, %v1287
    %v1307 = vadd.f32 %v1264, %v1305
    %v1308 = vadd.f32 %v1265, %v1306
    %1309 = vrot.lane.b32.xlu0 %v196, 126
    %v1310 = vpop.permute.xlu0 %1309
    %1311 = vrot.lane.b32.xlu0 %v197, 126
    %v1312 = vpop.permute.xlu0 %1311
    %vm1313 = vcmp.lt.s32.totalorder %v203, 126
    %v1314 = vsel %vm1313, %v1310, %v1312
    %v1315 = vsel %vm1313, %v1312, %v1310
    %s1316 = scalar_lea.vmem %s1, 52
    %v1317 = vld [vmem:[%s1316] sm:$0x3]
    %v1319 = vlaneseq
    %v1320 = vshrl.u32 %v1319, 7
    %v1321 = vsub.s32 0, %v1320
    %v1322 = vrot.slane %v1317, %v1321
    %v1323 = vlaneseq
    %v1324 = vshrl.u32 %v1323, 7
    %v1325 = vsub.s32 1, %v1324
    %v1326 = vrot.slane %v1317, %v1325
    %v1329 = vmul.f32 %v1322, %v1314
    %v1330 = vmul.f32 %v1326, %v1315
    %s1331 = scalar_lea.vmem %s2, 416
    %v1332 = vld [vmem:[%s1331] sm:$0xff]
    %v1333 = vld [vmem:[%s1331 + $0x8] sm:$0xff]
    %1335 = vset.pattern.permute.xlu0 0
    %1336 = vperm.xlu0 %1335, %v1332
    %v1337 = vpop.permute.xlu0 %1336
    %v1339 = vmul.f32 %v1337, %v1329
    %v1340 = vmul.f32 %v1337, %v1330
    %v1341 = vadd.f32 %v1298, %v1339
    %v1342 = vadd.f32 %v1299, %v1340
    %1344 = vset.pattern.permute.xlu0 0
    %1345 = vperm.xlu0 %1344, %v1333
    %v1346 = vpop.permute.xlu0 %1345
    %v1348 = vmul.f32 %v1346, %v1329
    %v1349 = vmul.f32 %v1346, %v1330
    %v1350 = vadd.f32 %v1307, %v1348
    %v1351 = vadd.f32 %v1308, %v1349
    %1352 = vrot.lane.b32.xlu0 %v196, 125
    %v1353 = vpop.permute.xlu0 %1352
    %1354 = vrot.lane.b32.xlu0 %v197, 125
    %v1355 = vpop.permute.xlu0 %1354
    %vm1356 = vcmp.lt.s32.totalorder %v203, 125
    %v1357 = vsel %vm1356, %v1353, %v1355
    %v1358 = vsel %vm1356, %v1355, %v1353
    %s1359 = scalar_lea.vmem %s1, 54
    %v1360 = vld [vmem:[%s1359] sm:$0x3]
    %v1362 = vlaneseq
    %v1363 = vshrl.u32 %v1362, 7
    %v1364 = vsub.s32 0, %v1363
    %v1365 = vrot.slane %v1360, %v1364
    %v1366 = vlaneseq
    %v1367 = vshrl.u32 %v1366, 7
    %v1368 = vsub.s32 1, %v1367
    %v1369 = vrot.slane %v1360, %v1368
    %v1372 = vmul.f32 %v1365, %v1357
    %v1373 = vmul.f32 %v1369, %v1358
    %s1374 = scalar_lea.vmem %s2, 432
    %v1375 = vld [vmem:[%s1374] sm:$0xff]
    %v1376 = vld [vmem:[%s1374 + $0x8] sm:$0xff]
    %1378 = vset.pattern.permute.xlu0 0
    %1379 = vperm.xlu0 %1378, %v1375
    %v1380 = vpop.permute.xlu0 %1379
    %v1382 = vmul.f32 %v1380, %v1372
    %v1383 = vmul.f32 %v1380, %v1373
    %v1384 = vadd.f32 %v1341, %v1382
    %v1385 = vadd.f32 %v1342, %v1383
    %1387 = vset.pattern.permute.xlu0 0
    %1388 = vperm.xlu0 %1387, %v1376
    %v1389 = vpop.permute.xlu0 %1388
    %v1391 = vmul.f32 %v1389, %v1372
    %v1392 = vmul.f32 %v1389, %v1373
    %v1393 = vadd.f32 %v1350, %v1391
    %v1394 = vadd.f32 %v1351, %v1392
    %1395 = vrot.lane.b32.xlu0 %v196, 115
    %v1396 = vpop.permute.xlu0 %1395
    %1397 = vrot.lane.b32.xlu0 %v197, 115
    %v1398 = vpop.permute.xlu0 %1397
    %vm1399 = vcmp.lt.s32.totalorder %v203, 115
    %v1400 = vsel %vm1399, %v1396, %v1398
    %v1401 = vsel %vm1399, %v1398, %v1396
    %s1402 = scalar_lea.vmem %s1, 56
    %v1403 = vld [vmem:[%s1402] sm:$0x3]
    %v1405 = vlaneseq
    %v1406 = vshrl.u32 %v1405, 7
    %v1407 = vsub.s32 0, %v1406
    %v1408 = vrot.slane %v1403, %v1407
    %v1409 = vlaneseq
    %v1410 = vshrl.u32 %v1409, 7
    %v1411 = vsub.s32 1, %v1410
    %v1412 = vrot.slane %v1403, %v1411
    %v1415 = vmul.f32 %v1408, %v1400
    %v1416 = vmul.f32 %v1412, %v1401
    %s1417 = scalar_lea.vmem %s2, 448
    %v1418 = vld [vmem:[%s1417] sm:$0xff]
    %v1419 = vld [vmem:[%s1417 + $0x8] sm:$0xff]
    %1421 = vset.pattern.permute.xlu0 0
    %1422 = vperm.xlu0 %1421, %v1418
    %v1423 = vpop.permute.xlu0 %1422
    %v1425 = vmul.f32 %v1423, %v1415
    %v1426 = vmul.f32 %v1423, %v1416
    %v1427 = vadd.f32 %v1384, %v1425
    %v1428 = vadd.f32 %v1385, %v1426
    %1430 = vset.pattern.permute.xlu0 0
    %1431 = vperm.xlu0 %1430, %v1419
    %v1432 = vpop.permute.xlu0 %1431
    %v1434 = vmul.f32 %v1432, %v1415
    %v1435 = vmul.f32 %v1432, %v1416
    %v1436 = vadd.f32 %v1393, %v1434
    %v1437 = vadd.f32 %v1394, %v1435
    %1438 = vrot.lane.b32.xlu0 %v196, 114
    %v1439 = vpop.permute.xlu0 %1438
    %1440 = vrot.lane.b32.xlu0 %v197, 114
    %v1441 = vpop.permute.xlu0 %1440
    %vm1442 = vcmp.lt.s32.totalorder %v203, 114
    %v1443 = vsel %vm1442, %v1439, %v1441
    %v1444 = vsel %vm1442, %v1441, %v1439
    %s1445 = scalar_lea.vmem %s1, 58
    %v1446 = vld [vmem:[%s1445] sm:$0x3]
    %v1448 = vlaneseq
    %v1449 = vshrl.u32 %v1448, 7
    %v1450 = vsub.s32 0, %v1449
    %v1451 = vrot.slane %v1446, %v1450
    %v1452 = vlaneseq
    %v1453 = vshrl.u32 %v1452, 7
    %v1454 = vsub.s32 1, %v1453
    %v1455 = vrot.slane %v1446, %v1454
    %v1458 = vmul.f32 %v1451, %v1443
    %v1459 = vmul.f32 %v1455, %v1444
    %s1460 = scalar_lea.vmem %s2, 464
    %v1461 = vld [vmem:[%s1460] sm:$0xff]
    %v1462 = vld [vmem:[%s1460 + $0x8] sm:$0xff]
    %1464 = vset.pattern.permute.xlu0 0
    %1465 = vperm.xlu0 %1464, %v1461
    %v1466 = vpop.permute.xlu0 %1465
    %v1468 = vmul.f32 %v1466, %v1458
    %v1469 = vmul.f32 %v1466, %v1459
    %v1470 = vadd.f32 %v1427, %v1468
    %v1471 = vadd.f32 %v1428, %v1469
    %1473 = vset.pattern.permute.xlu0 0
    %1474 = vperm.xlu0 %1473, %v1462
    %v1475 = vpop.permute.xlu0 %1474
    %v1477 = vmul.f32 %v1475, %v1458
    %v1478 = vmul.f32 %v1475, %v1459
    %v1479 = vadd.f32 %v1436, %v1477
    %v1480 = vadd.f32 %v1437, %v1478
    %1481 = vrot.lane.b32.xlu0 %v196, 113
    %v1482 = vpop.permute.xlu0 %1481
    %1483 = vrot.lane.b32.xlu0 %v197, 113
    %v1484 = vpop.permute.xlu0 %1483
    %vm1485 = vcmp.lt.s32.totalorder %v203, 113
    %v1486 = vsel %vm1485, %v1482, %v1484
    %v1487 = vsel %vm1485, %v1484, %v1482
    %s1488 = scalar_lea.vmem %s1, 60
    %v1489 = vld [vmem:[%s1488] sm:$0x3]
    %v1491 = vlaneseq
    %v1492 = vshrl.u32 %v1491, 7
    %v1493 = vsub.s32 0, %v1492
    %v1494 = vrot.slane %v1489, %v1493
    %v1495 = vlaneseq
    %v1496 = vshrl.u32 %v1495, 7
    %v1497 = vsub.s32 1, %v1496
    %v1498 = vrot.slane %v1489, %v1497
    %v1501 = vmul.f32 %v1494, %v1486
    %v1502 = vmul.f32 %v1498, %v1487
    %s1503 = scalar_lea.vmem %s2, 480
    %v1504 = vld [vmem:[%s1503] sm:$0xff]
    %v1505 = vld [vmem:[%s1503 + $0x8] sm:$0xff]
    %1507 = vset.pattern.permute.xlu0 0
    %1508 = vperm.xlu0 %1507, %v1504
    %v1509 = vpop.permute.xlu0 %1508
    %v1511 = vmul.f32 %v1509, %v1501
    %v1512 = vmul.f32 %v1509, %v1502
    %v1513 = vadd.f32 %v1470, %v1511
    %v1514 = vadd.f32 %v1471, %v1512
    %1516 = vset.pattern.permute.xlu0 0
    %1517 = vperm.xlu0 %1516, %v1505
    %v1518 = vpop.permute.xlu0 %1517
    %v1520 = vmul.f32 %v1518, %v1501
    %v1521 = vmul.f32 %v1518, %v1502
    %v1522 = vadd.f32 %v1479, %v1520
    %v1523 = vadd.f32 %v1480, %v1521
    %1524 = vrot.lane.b32.xlu0 %v196, 112
    %v1525 = vpop.permute.xlu0 %1524
    %1526 = vrot.lane.b32.xlu0 %v197, 112
    %v1527 = vpop.permute.xlu0 %1526
    %vm1528 = vcmp.lt.s32.totalorder %v203, 112
    %v1529 = vsel %vm1528, %v1525, %v1527
    %v1530 = vsel %vm1528, %v1527, %v1525
    %s1531 = scalar_lea.vmem %s1, 62
    %v1532 = vld [vmem:[%s1531] sm:$0x3]
    %v1534 = vlaneseq
    %v1535 = vshrl.u32 %v1534, 7
    %v1536 = vsub.s32 0, %v1535
    %v1537 = vrot.slane %v1532, %v1536
    %v1538 = vlaneseq
    %v1539 = vshrl.u32 %v1538, 7
    %v1540 = vsub.s32 1, %v1539
    %v1541 = vrot.slane %v1532, %v1540
    %v1544 = vmul.f32 %v1537, %v1529
    %v1545 = vmul.f32 %v1541, %v1530
    %s1546 = scalar_lea.vmem %s2, 496
    %v1547 = vld [vmem:[%s1546] sm:$0xff]
    %v1548 = vld [vmem:[%s1546 + $0x8] sm:$0xff]
    %1550 = vset.pattern.permute.xlu0 0
    %1551 = vperm.xlu0 %1550, %v1547
    %v1552 = vpop.permute.xlu0 %1551
    %v1554 = vmul.f32 %v1552, %v1544
    %v1555 = vmul.f32 %v1552, %v1545
    %v1556 = vadd.f32 %v1513, %v1554
    %v1557 = vadd.f32 %v1514, %v1555
    %1559 = vset.pattern.permute.xlu0 0
    %1560 = vperm.xlu0 %1559, %v1548
    %v1561 = vpop.permute.xlu0 %1560
    %v1563 = vmul.f32 %v1561, %v1544
    %v1564 = vmul.f32 %v1561, %v1545
    %v1565 = vadd.f32 %v1522, %v1563
    %v1566 = vadd.f32 %v1523, %v1564
    %1567 = vrot.lane.b32.xlu0 %v196, 111
    %v1568 = vpop.permute.xlu0 %1567
    %1569 = vrot.lane.b32.xlu0 %v197, 111
    %v1570 = vpop.permute.xlu0 %1569
    %vm1571 = vcmp.lt.s32.totalorder %v203, 111
    %v1572 = vsel %vm1571, %v1568, %v1570
    %v1573 = vsel %vm1571, %v1570, %v1568
    %s1574 = scalar_lea.vmem %s1, 64
    %v1575 = vld [vmem:[%s1574] sm:$0x3]
    %v1577 = vlaneseq
    %v1578 = vshrl.u32 %v1577, 7
    %v1579 = vsub.s32 0, %v1578
    %v1580 = vrot.slane %v1575, %v1579
    %v1581 = vlaneseq
    %v1582 = vshrl.u32 %v1581, 7
    %v1583 = vsub.s32 1, %v1582
    %v1584 = vrot.slane %v1575, %v1583
    %v1587 = vmul.f32 %v1580, %v1572
    %v1588 = vmul.f32 %v1584, %v1573
    %s1589 = scalar_lea.vmem %s2, 512
    %v1590 = vld [vmem:[%s1589] sm:$0xff]
    %v1591 = vld [vmem:[%s1589 + $0x8] sm:$0xff]
    %1593 = vset.pattern.permute.xlu0 0
    %1594 = vperm.xlu0 %1593, %v1590
    %v1595 = vpop.permute.xlu0 %1594
    %v1597 = vmul.f32 %v1595, %v1587
    %v1598 = vmul.f32 %v1595, %v1588
    %v1599 = vadd.f32 %v1556, %v1597
    %v1600 = vadd.f32 %v1557, %v1598
    %1602 = vset.pattern.permute.xlu0 0
    %1603 = vperm.xlu0 %1602, %v1591
    %v1604 = vpop.permute.xlu0 %1603
    %v1606 = vmul.f32 %v1604, %v1587
    %v1607 = vmul.f32 %v1604, %v1588
    %v1608 = vadd.f32 %v1565, %v1606
    %v1609 = vadd.f32 %v1566, %v1607
    %1610 = vrot.lane.b32.xlu0 %v196, 110
    %v1611 = vpop.permute.xlu0 %1610
    %1612 = vrot.lane.b32.xlu0 %v197, 110
    %v1613 = vpop.permute.xlu0 %1612
    %vm1614 = vcmp.lt.s32.totalorder %v203, 110
    %v1615 = vsel %vm1614, %v1611, %v1613
    %v1616 = vsel %vm1614, %v1613, %v1611
    %s1617 = scalar_lea.vmem %s1, 66
    %v1618 = vld [vmem:[%s1617] sm:$0x3]
    %v1620 = vlaneseq
    %v1621 = vshrl.u32 %v1620, 7
    %v1622 = vsub.s32 0, %v1621
    %v1623 = vrot.slane %v1618, %v1622
    %v1624 = vlaneseq
    %v1625 = vshrl.u32 %v1624, 7
    %v1626 = vsub.s32 1, %v1625
    %v1627 = vrot.slane %v1618, %v1626
    %v1630 = vmul.f32 %v1623, %v1615
    %v1631 = vmul.f32 %v1627, %v1616
    %s1632 = scalar_lea.vmem %s2, 528
    %v1633 = vld [vmem:[%s1632] sm:$0xff]
    %v1634 = vld [vmem:[%s1632 + $0x8] sm:$0xff]
    %1636 = vset.pattern.permute.xlu0 0
    %1637 = vperm.xlu0 %1636, %v1633
    %v1638 = vpop.permute.xlu0 %1637
    %v1640 = vmul.f32 %v1638, %v1630
    %v1641 = vmul.f32 %v1638, %v1631
    %v1642 = vadd.f32 %v1599, %v1640
    %v1643 = vadd.f32 %v1600, %v1641
    %1645 = vset.pattern.permute.xlu0 0
    %1646 = vperm.xlu0 %1645, %v1634
    %v1647 = vpop.permute.xlu0 %1646
    %v1649 = vmul.f32 %v1647, %v1630
    %v1650 = vmul.f32 %v1647, %v1631
    %v1651 = vadd.f32 %v1608, %v1649
    %v1652 = vadd.f32 %v1609, %v1650
    %1653 = vrot.lane.b32.xlu0 %v196, 109
    %v1654 = vpop.permute.xlu0 %1653
    %1655 = vrot.lane.b32.xlu0 %v197, 109
    %v1656 = vpop.permute.xlu0 %1655
    %vm1657 = vcmp.lt.s32.totalorder %v203, 109
    %v1658 = vsel %vm1657, %v1654, %v1656
    %v1659 = vsel %vm1657, %v1656, %v1654
    %s1660 = scalar_lea.vmem %s1, 68
    %v1661 = vld [vmem:[%s1660] sm:$0x3]
    %v1663 = vlaneseq
    %v1664 = vshrl.u32 %v1663, 7
    %v1665 = vsub.s32 0, %v1664
    %v1666 = vrot.slane %v1661, %v1665
    %v1667 = vlaneseq
    %v1668 = vshrl.u32 %v1667, 7
    %v1669 = vsub.s32 1, %v1668
    %v1670 = vrot.slane %v1661, %v1669
    %v1673 = vmul.f32 %v1666, %v1658
    %v1674 = vmul.f32 %v1670, %v1659
    %s1675 = scalar_lea.vmem %s2, 544
    %v1676 = vld [vmem:[%s1675] sm:$0xff]
    %v1677 = vld [vmem:[%s1675 + $0x8] sm:$0xff]
    %1679 = vset.pattern.permute.xlu0 0
    %1680 = vperm.xlu0 %1679, %v1676
    %v1681 = vpop.permute.xlu0 %1680
    %v1683 = vmul.f32 %v1681, %v1673
    %v1684 = vmul.f32 %v1681, %v1674
    %v1685 = vadd.f32 %v1642, %v1683
    %v1686 = vadd.f32 %v1643, %v1684
    %1688 = vset.pattern.permute.xlu0 0
    %1689 = vperm.xlu0 %1688, %v1677
    %v1690 = vpop.permute.xlu0 %1689
    %v1692 = vmul.f32 %v1690, %v1673
    %v1693 = vmul.f32 %v1690, %v1674
    %v1694 = vadd.f32 %v1651, %v1692
    %v1695 = vadd.f32 %v1652, %v1693
    %1696 = vrot.lane.b32.xlu0 %v196, 99
    %v1697 = vpop.permute.xlu0 %1696
    %1698 = vrot.lane.b32.xlu0 %v197, 99
    %v1699 = vpop.permute.xlu0 %1698
    %vm1700 = vcmp.lt.s32.totalorder %v203, 99
    %v1701 = vsel %vm1700, %v1697, %v1699
    %v1702 = vsel %vm1700, %v1699, %v1697
    %s1703 = scalar_lea.vmem %s1, 70
    %v1704 = vld [vmem:[%s1703] sm:$0x3]
    %v1706 = vlaneseq
    %v1707 = vshrl.u32 %v1706, 7
    %v1708 = vsub.s32 0, %v1707
    %v1709 = vrot.slane %v1704, %v1708
    %v1710 = vlaneseq
    %v1711 = vshrl.u32 %v1710, 7
    %v1712 = vsub.s32 1, %v1711
    %v1713 = vrot.slane %v1704, %v1712
    %v1716 = vmul.f32 %v1709, %v1701
    %v1717 = vmul.f32 %v1713, %v1702
    %s1718 = scalar_lea.vmem %s2, 560
    %v1719 = vld [vmem:[%s1718] sm:$0xff]
    %v1720 = vld [vmem:[%s1718 + $0x8] sm:$0xff]
    %1722 = vset.pattern.permute.xlu0 0
    %1723 = vperm.xlu0 %1722, %v1719
    %v1724 = vpop.permute.xlu0 %1723
    %v1726 = vmul.f32 %v1724, %v1716
    %v1727 = vmul.f32 %v1724, %v1717
    %v1728 = vadd.f32 %v1685, %v1726
    %v1729 = vadd.f32 %v1686, %v1727
    %1731 = vset.pattern.permute.xlu0 0
    %1732 = vperm.xlu0 %1731, %v1720
    %v1733 = vpop.permute.xlu0 %1732
    %v1735 = vmul.f32 %v1733, %v1716
    %v1736 = vmul.f32 %v1733, %v1717
    %v1737 = vadd.f32 %v1694, %v1735
    %v1738 = vadd.f32 %v1695, %v1736
    %1739 = vrot.lane.b32.xlu0 %v196, 98
    %v1740 = vpop.permute.xlu0 %1739
    %1741 = vrot.lane.b32.xlu0 %v197, 98
    %v1742 = vpop.permute.xlu0 %1741
    %vm1743 = vcmp.lt.s32.totalorder %v203, 98
    %v1744 = vsel %vm1743, %v1740, %v1742
    %v1745 = vsel %vm1743, %v1742, %v1740
    %s1746 = scalar_lea.vmem %s1, 72
    %v1747 = vld [vmem:[%s1746] sm:$0x3]
    %v1749 = vlaneseq
    %v1750 = vshrl.u32 %v1749, 7
    %v1751 = vsub.s32 0, %v1750
    %v1752 = vrot.slane %v1747, %v1751
    %v1753 = vlaneseq
    %v1754 = vshrl.u32 %v1753, 7
    %v1755 = vsub.s32 1, %v1754
    %v1756 = vrot.slane %v1747, %v1755
    %v1759 = vmul.f32 %v1752, %v1744
    %v1760 = vmul.f32 %v1756, %v1745
    %s1761 = scalar_lea.vmem %s2, 576
    %v1762 = vld [vmem:[%s1761] sm:$0xff]
    %v1763 = vld [vmem:[%s1761 + $0x8] sm:$0xff]
    %1765 = vset.pattern.permute.xlu0 0
    %1766 = vperm.xlu0 %1765, %v1762
    %v1767 = vpop.permute.xlu0 %1766
    %v1769 = vmul.f32 %v1767, %v1759
    %v1770 = vmul.f32 %v1767, %v1760
    %v1771 = vadd.f32 %v1728, %v1769
    %v1772 = vadd.f32 %v1729, %v1770
    %1774 = vset.pattern.permute.xlu0 0
    %1775 = vperm.xlu0 %1774, %v1763
    %v1776 = vpop.permute.xlu0 %1775
    %v1778 = vmul.f32 %v1776, %v1759
    %v1779 = vmul.f32 %v1776, %v1760
    %v1780 = vadd.f32 %v1737, %v1778
    %v1781 = vadd.f32 %v1738, %v1779
    %1782 = vrot.lane.b32.xlu0 %v196, 97
    %v1783 = vpop.permute.xlu0 %1782
    %1784 = vrot.lane.b32.xlu0 %v197, 97
    %v1785 = vpop.permute.xlu0 %1784
    %vm1786 = vcmp.lt.s32.totalorder %v203, 97
    %v1787 = vsel %vm1786, %v1783, %v1785
    %v1788 = vsel %vm1786, %v1785, %v1783
    %s1789 = scalar_lea.vmem %s1, 74
    %v1790 = vld [vmem:[%s1789] sm:$0x3]
    %v1792 = vlaneseq
    %v1793 = vshrl.u32 %v1792, 7
    %v1794 = vsub.s32 0, %v1793
    %v1795 = vrot.slane %v1790, %v1794
    %v1796 = vlaneseq
    %v1797 = vshrl.u32 %v1796, 7
    %v1798 = vsub.s32 1, %v1797
    %v1799 = vrot.slane %v1790, %v1798
    %v1802 = vmul.f32 %v1795, %v1787
    %v1803 = vmul.f32 %v1799, %v1788
    %s1804 = scalar_lea.vmem %s2, 592
    %v1805 = vld [vmem:[%s1804] sm:$0xff]
    %v1806 = vld [vmem:[%s1804 + $0x8] sm:$0xff]
    %1808 = vset.pattern.permute.xlu0 0
    %1809 = vperm.xlu0 %1808, %v1805
    %v1810 = vpop.permute.xlu0 %1809
    %v1812 = vmul.f32 %v1810, %v1802
    %v1813 = vmul.f32 %v1810, %v1803
    %v1814 = vadd.f32 %v1771, %v1812
    %v1815 = vadd.f32 %v1772, %v1813
    %1817 = vset.pattern.permute.xlu0 0
    %1818 = vperm.xlu0 %1817, %v1806
    %v1819 = vpop.permute.xlu0 %1818
    %v1821 = vmul.f32 %v1819, %v1802
    %v1822 = vmul.f32 %v1819, %v1803
    %v1823 = vadd.f32 %v1780, %v1821
    %v1824 = vadd.f32 %v1781, %v1822
    %1825 = vrot.lane.b32.xlu0 %v196, 96
    %v1826 = vpop.permute.xlu0 %1825
    %1827 = vrot.lane.b32.xlu0 %v197, 96
    %v1828 = vpop.permute.xlu0 %1827
    %vm1829 = vcmp.lt.s32.totalorder %v203, 96
    %v1830 = vsel %vm1829, %v1826, %v1828
    %v1831 = vsel %vm1829, %v1828, %v1826
    %s1832 = scalar_lea.vmem %s1, 76
    %v1833 = vld [vmem:[%s1832] sm:$0x3]
    %v1835 = vlaneseq
    %v1836 = vshrl.u32 %v1835, 7
    %v1837 = vsub.s32 0, %v1836
    %v1838 = vrot.slane %v1833, %v1837
    %v1839 = vlaneseq
    %v1840 = vshrl.u32 %v1839, 7
    %v1841 = vsub.s32 1, %v1840
    %v1842 = vrot.slane %v1833, %v1841
    %v1845 = vmul.f32 %v1838, %v1830
    %v1846 = vmul.f32 %v1842, %v1831
    %s1847 = scalar_lea.vmem %s2, 608
    %v1848 = vld [vmem:[%s1847] sm:$0xff]
    %v1849 = vld [vmem:[%s1847 + $0x8] sm:$0xff]
    %1851 = vset.pattern.permute.xlu0 0
    %1852 = vperm.xlu0 %1851, %v1848
    %v1853 = vpop.permute.xlu0 %1852
    %v1855 = vmul.f32 %v1853, %v1845
    %v1856 = vmul.f32 %v1853, %v1846
    %v1857 = vadd.f32 %v1814, %v1855
    %v1858 = vadd.f32 %v1815, %v1856
    %1860 = vset.pattern.permute.xlu0 0
    %1861 = vperm.xlu0 %1860, %v1849
    %v1862 = vpop.permute.xlu0 %1861
    %v1864 = vmul.f32 %v1862, %v1845
    %v1865 = vmul.f32 %v1862, %v1846
    %v1866 = vadd.f32 %v1823, %v1864
    %v1867 = vadd.f32 %v1824, %v1865
    %1868 = vrot.lane.b32.xlu0 %v196, 95
    %v1869 = vpop.permute.xlu0 %1868
    %1870 = vrot.lane.b32.xlu0 %v197, 95
    %v1871 = vpop.permute.xlu0 %1870
    %vm1872 = vcmp.lt.s32.totalorder %v203, 95
    %v1873 = vsel %vm1872, %v1869, %v1871
    %v1874 = vsel %vm1872, %v1871, %v1869
    %s1875 = scalar_lea.vmem %s1, 78
    %v1876 = vld [vmem:[%s1875] sm:$0x3]
    %v1878 = vlaneseq
    %v1879 = vshrl.u32 %v1878, 7
    %v1880 = vsub.s32 0, %v1879
    %v1881 = vrot.slane %v1876, %v1880
    %v1882 = vlaneseq
    %v1883 = vshrl.u32 %v1882, 7
    %v1884 = vsub.s32 1, %v1883
    %v1885 = vrot.slane %v1876, %v1884
    %v1888 = vmul.f32 %v1881, %v1873
    %v1889 = vmul.f32 %v1885, %v1874
    %s1890 = scalar_lea.vmem %s2, 624
    %v1891 = vld [vmem:[%s1890] sm:$0xff]
    %v1892 = vld [vmem:[%s1890 + $0x8] sm:$0xff]
    %1894 = vset.pattern.permute.xlu0 0
    %1895 = vperm.xlu0 %1894, %v1891
    %v1896 = vpop.permute.xlu0 %1895
    %v1898 = vmul.f32 %v1896, %v1888
    %v1899 = vmul.f32 %v1896, %v1889
    %v1900 = vadd.f32 %v1857, %v1898
    %v1901 = vadd.f32 %v1858, %v1899
    %1903 = vset.pattern.permute.xlu0 0
    %1904 = vperm.xlu0 %1903, %v1892
    %v1905 = vpop.permute.xlu0 %1904
    %v1907 = vmul.f32 %v1905, %v1888
    %v1908 = vmul.f32 %v1905, %v1889
    %v1909 = vadd.f32 %v1866, %v1907
    %v1910 = vadd.f32 %v1867, %v1908
    %1911 = vrot.lane.b32.xlu0 %v196, 94
    %v1912 = vpop.permute.xlu0 %1911
    %1913 = vrot.lane.b32.xlu0 %v197, 94
    %v1914 = vpop.permute.xlu0 %1913
    %vm1915 = vcmp.lt.s32.totalorder %v203, 94
    %v1916 = vsel %vm1915, %v1912, %v1914
    %v1917 = vsel %vm1915, %v1914, %v1912
    %s1918 = scalar_lea.vmem %s1, 80
    %v1919 = vld [vmem:[%s1918] sm:$0x3]
    %v1921 = vlaneseq
    %v1922 = vshrl.u32 %v1921, 7
    %v1923 = vsub.s32 0, %v1922
    %v1924 = vrot.slane %v1919, %v1923
    %v1925 = vlaneseq
    %v1926 = vshrl.u32 %v1925, 7
    %v1927 = vsub.s32 1, %v1926
    %v1928 = vrot.slane %v1919, %v1927
    %v1931 = vmul.f32 %v1924, %v1916
    %v1932 = vmul.f32 %v1928, %v1917
    %s1933 = scalar_lea.vmem %s2, 640
    %v1934 = vld [vmem:[%s1933] sm:$0xff]
    %v1935 = vld [vmem:[%s1933 + $0x8] sm:$0xff]
    %1937 = vset.pattern.permute.xlu0 0
    %1938 = vperm.xlu0 %1937, %v1934
    %v1939 = vpop.permute.xlu0 %1938
    %v1941 = vmul.f32 %v1939, %v1931
    %v1942 = vmul.f32 %v1939, %v1932
    %v1943 = vadd.f32 %v1900, %v1941
    %v1944 = vadd.f32 %v1901, %v1942
    %1946 = vset.pattern.permute.xlu0 0
    %1947 = vperm.xlu0 %1946, %v1935
    %v1948 = vpop.permute.xlu0 %1947
    %v1950 = vmul.f32 %v1948, %v1931
    %v1951 = vmul.f32 %v1948, %v1932
    %v1952 = vadd.f32 %v1909, %v1950
    %v1953 = vadd.f32 %v1910, %v1951
    %1954 = vrot.lane.b32.xlu0 %v196, 93
    %v1955 = vpop.permute.xlu0 %1954
    %1956 = vrot.lane.b32.xlu0 %v197, 93
    %v1957 = vpop.permute.xlu0 %1956
    %vm1958 = vcmp.lt.s32.totalorder %v203, 93
    %v1959 = vsel %vm1958, %v1955, %v1957
    %v1960 = vsel %vm1958, %v1957, %v1955
    %s1961 = scalar_lea.vmem %s1, 82
    %v1962 = vld [vmem:[%s1961] sm:$0x3]
    %v1964 = vlaneseq
    %v1965 = vshrl.u32 %v1964, 7
    %v1966 = vsub.s32 0, %v1965
    %v1967 = vrot.slane %v1962, %v1966
    %v1968 = vlaneseq
    %v1969 = vshrl.u32 %v1968, 7
    %v1970 = vsub.s32 1, %v1969
    %v1971 = vrot.slane %v1962, %v1970
    %v1974 = vmul.f32 %v1967, %v1959
    %v1975 = vmul.f32 %v1971, %v1960
    %s1976 = scalar_lea.vmem %s2, 656
    %v1977 = vld [vmem:[%s1976] sm:$0xff]
    %v1978 = vld [vmem:[%s1976 + $0x8] sm:$0xff]
    %1980 = vset.pattern.permute.xlu0 0
    %1981 = vperm.xlu0 %1980, %v1977
    %v1982 = vpop.permute.xlu0 %1981
    %v1984 = vmul.f32 %v1982, %v1974
    %v1985 = vmul.f32 %v1982, %v1975
    %v1986 = vadd.f32 %v1943, %v1984
    %v1987 = vadd.f32 %v1944, %v1985
    %1989 = vset.pattern.permute.xlu0 0
    %1990 = vperm.xlu0 %1989, %v1978
    %v1991 = vpop.permute.xlu0 %1990
    %v1993 = vmul.f32 %v1991, %v1974
    %v1994 = vmul.f32 %v1991, %v1975
    %v1995 = vadd.f32 %v1952, %v1993
    %v1996 = vadd.f32 %v1953, %v1994
    %1997 = vrot.lane.b32.xlu0 %v196, 83
    %v1998 = vpop.permute.xlu0 %1997
    %1999 = vrot.lane.b32.xlu0 %v197, 83
    %v2000 = vpop.permute.xlu0 %1999
    %vm2001 = vcmp.lt.s32.totalorder %v203, 83
    %v2002 = vsel %vm2001, %v1998, %v2000
    %v2003 = vsel %vm2001, %v2000, %v1998
    %s2004 = scalar_lea.vmem %s1, 84
    %v2005 = vld [vmem:[%s2004] sm:$0x3]
    %v2007 = vlaneseq
    %v2008 = vshrl.u32 %v2007, 7
    %v2009 = vsub.s32 0, %v2008
    %v2010 = vrot.slane %v2005, %v2009
    %v2011 = vlaneseq
    %v2012 = vshrl.u32 %v2011, 7
    %v2013 = vsub.s32 1, %v2012
    %v2014 = vrot.slane %v2005, %v2013
    %v2017 = vmul.f32 %v2010, %v2002
    %v2018 = vmul.f32 %v2014, %v2003
    %s2019 = scalar_lea.vmem %s2, 672
    %v2020 = vld [vmem:[%s2019] sm:$0xff]
    %v2021 = vld [vmem:[%s2019 + $0x8] sm:$0xff]
    %2023 = vset.pattern.permute.xlu0 0
    %2024 = vperm.xlu0 %2023, %v2020
    %v2025 = vpop.permute.xlu0 %2024
    %v2027 = vmul.f32 %v2025, %v2017
    %v2028 = vmul.f32 %v2025, %v2018
    %v2029 = vadd.f32 %v1986, %v2027
    %v2030 = vadd.f32 %v1987, %v2028
    %2032 = vset.pattern.permute.xlu0 0
    %2033 = vperm.xlu0 %2032, %v2021
    %v2034 = vpop.permute.xlu0 %2033
    %v2036 = vmul.f32 %v2034, %v2017
    %v2037 = vmul.f32 %v2034, %v2018
    %v2038 = vadd.f32 %v1995, %v2036
    %v2039 = vadd.f32 %v1996, %v2037
    %2040 = vrot.lane.b32.xlu0 %v196, 82
    %v2041 = vpop.permute.xlu0 %2040
    %2042 = vrot.lane.b32.xlu0 %v197, 82
    %v2043 = vpop.permute.xlu0 %2042
    %vm2044 = vcmp.lt.s32.totalorder %v203, 82
    %v2045 = vsel %vm2044, %v2041, %v2043
    %v2046 = vsel %vm2044, %v2043, %v2041
    %s2047 = scalar_lea.vmem %s1, 86
    %v2048 = vld [vmem:[%s2047] sm:$0x3]
    %v2050 = vlaneseq
    %v2051 = vshrl.u32 %v2050, 7
    %v2052 = vsub.s32 0, %v2051
    %v2053 = vrot.slane %v2048, %v2052
    %v2054 = vlaneseq
    %v2055 = vshrl.u32 %v2054, 7
    %v2056 = vsub.s32 1, %v2055
    %v2057 = vrot.slane %v2048, %v2056
    %v2060 = vmul.f32 %v2053, %v2045
    %v2061 = vmul.f32 %v2057, %v2046
    %s2062 = scalar_lea.vmem %s2, 688
    %v2063 = vld [vmem:[%s2062] sm:$0xff]
    %v2064 = vld [vmem:[%s2062 + $0x8] sm:$0xff]
    %2066 = vset.pattern.permute.xlu0 0
    %2067 = vperm.xlu0 %2066, %v2063
    %v2068 = vpop.permute.xlu0 %2067
    %v2070 = vmul.f32 %v2068, %v2060
    %v2071 = vmul.f32 %v2068, %v2061
    %v2072 = vadd.f32 %v2029, %v2070
    %v2073 = vadd.f32 %v2030, %v2071
    %2075 = vset.pattern.permute.xlu0 0
    %2076 = vperm.xlu0 %2075, %v2064
    %v2077 = vpop.permute.xlu0 %2076
    %v2079 = vmul.f32 %v2077, %v2060
    %v2080 = vmul.f32 %v2077, %v2061
    %v2081 = vadd.f32 %v2038, %v2079
    %v2082 = vadd.f32 %v2039, %v2080
    %2083 = vrot.lane.b32.xlu0 %v196, 81
    %v2084 = vpop.permute.xlu0 %2083
    %2085 = vrot.lane.b32.xlu0 %v197, 81
    %v2086 = vpop.permute.xlu0 %2085
    %vm2087 = vcmp.lt.s32.totalorder %v203, 81
    %v2088 = vsel %vm2087, %v2084, %v2086
    %v2089 = vsel %vm2087, %v2086, %v2084
    %s2090 = scalar_lea.vmem %s1, 88
    %v2091 = vld [vmem:[%s2090] sm:$0x3]
    %v2093 = vlaneseq
    %v2094 = vshrl.u32 %v2093, 7
    %v2095 = vsub.s32 0, %v2094
    %v2096 = vrot.slane %v2091, %v2095
    %v2097 = vlaneseq
    %v2098 = vshrl.u32 %v2097, 7
    %v2099 = vsub.s32 1, %v2098
    %v2100 = vrot.slane %v2091, %v2099
    %v2103 = vmul.f32 %v2096, %v2088
    %v2104 = vmul.f32 %v2100, %v2089
    %s2105 = scalar_lea.vmem %s2, 704
    %v2106 = vld [vmem:[%s2105] sm:$0xff]
    %v2107 = vld [vmem:[%s2105 + $0x8] sm:$0xff]
    %2109 = vset.pattern.permute.xlu0 0
    %2110 = vperm.xlu0 %2109, %v2106
    %v2111 = vpop.permute.xlu0 %2110
    %v2113 = vmul.f32 %v2111, %v2103
    %v2114 = vmul.f32 %v2111, %v2104
    %v2115 = vadd.f32 %v2072, %v2113
    %v2116 = vadd.f32 %v2073, %v2114
    %2118 = vset.pattern.permute.xlu0 0
    %2119 = vperm.xlu0 %2118, %v2107
    %v2120 = vpop.permute.xlu0 %2119
    %v2122 = vmul.f32 %v2120, %v2103
    %v2123 = vmul.f32 %v2120, %v2104
    %v2124 = vadd.f32 %v2081, %v2122
    %v2125 = vadd.f32 %v2082, %v2123
    %2126 = vrot.lane.b32.xlu0 %v196, 80
    %v2127 = vpop.permute.xlu0 %2126
    %2128 = vrot.lane.b32.xlu0 %v197, 80
    %v2129 = vpop.permute.xlu0 %2128
    %vm2130 = vcmp.lt.s32.totalorder %v203, 80
    %v2131 = vsel %vm2130, %v2127, %v2129
    %v2132 = vsel %vm2130, %v2129, %v2127
    %s2133 = scalar_lea.vmem %s1, 90
    %v2134 = vld [vmem:[%s2133] sm:$0x3]
    %v2136 = vlaneseq
    %v2137 = vshrl.u32 %v2136, 7
    %v2138 = vsub.s32 0, %v2137
    %v2139 = vrot.slane %v2134, %v2138
    %v2140 = vlaneseq
    %v2141 = vshrl.u32 %v2140, 7
    %v2142 = vsub.s32 1, %v2141
    %v2143 = vrot.slane %v2134, %v2142
    %v2146 = vmul.f32 %v2139, %v2131
    %v2147 = vmul.f32 %v2143, %v2132
    %s2148 = scalar_lea.vmem %s2, 720
    %v2149 = vld [vmem:[%s2148] sm:$0xff]
    %v2150 = vld [vmem:[%s2148 + $0x8] sm:$0xff]
    %2152 = vset.pattern.permute.xlu0 0
    %2153 = vperm.xlu0 %2152, %v2149
    %v2154 = vpop.permute.xlu0 %2153
    %v2156 = vmul.f32 %v2154, %v2146
    %v2157 = vmul.f32 %v2154, %v2147
    %v2158 = vadd.f32 %v2115, %v2156
    %v2159 = vadd.f32 %v2116, %v2157
    %2161 = vset.pattern.permute.xlu0 0
    %2162 = vperm.xlu0 %2161, %v2150
    %v2163 = vpop.permute.xlu0 %2162
    %v2165 = vmul.f32 %v2163, %v2146
    %v2166 = vmul.f32 %v2163, %v2147
    %v2167 = vadd.f32 %v2124, %v2165
    %v2168 = vadd.f32 %v2125, %v2166
    %2169 = vrot.lane.b32.xlu0 %v196, 79
    %v2170 = vpop.permute.xlu0 %2169
    %2171 = vrot.lane.b32.xlu0 %v197, 79
    %v2172 = vpop.permute.xlu0 %2171
    %vm2173 = vcmp.lt.s32.totalorder %v203, 79
    %v2174 = vsel %vm2173, %v2170, %v2172
    %v2175 = vsel %vm2173, %v2172, %v2170
    %s2176 = scalar_lea.vmem %s1, 92
    %v2177 = vld [vmem:[%s2176] sm:$0x3]
    %v2179 = vlaneseq
    %v2180 = vshrl.u32 %v2179, 7
    %v2181 = vsub.s32 0, %v2180
    %v2182 = vrot.slane %v2177, %v2181
    %v2183 = vlaneseq
    %v2184 = vshrl.u32 %v2183, 7
    %v2185 = vsub.s32 1, %v2184
    %v2186 = vrot.slane %v2177, %v2185
    %v2189 = vmul.f32 %v2182, %v2174
    %v2190 = vmul.f32 %v2186, %v2175
    %s2191 = scalar_lea.vmem %s2, 736
    %v2192 = vld [vmem:[%s2191] sm:$0xff]
    %v2193 = vld [vmem:[%s2191 + $0x8] sm:$0xff]
    %2195 = vset.pattern.permute.xlu0 0
    %2196 = vperm.xlu0 %2195, %v2192
    %v2197 = vpop.permute.xlu0 %2196
    %v2199 = vmul.f32 %v2197, %v2189
    %v2200 = vmul.f32 %v2197, %v2190
    %v2201 = vadd.f32 %v2158, %v2199
    %v2202 = vadd.f32 %v2159, %v2200
    %2204 = vset.pattern.permute.xlu0 0
    %2205 = vperm.xlu0 %2204, %v2193
    %v2206 = vpop.permute.xlu0 %2205
    %v2208 = vmul.f32 %v2206, %v2189
    %v2209 = vmul.f32 %v2206, %v2190
    %v2210 = vadd.f32 %v2167, %v2208
    %v2211 = vadd.f32 %v2168, %v2209
    %2212 = vrot.lane.b32.xlu0 %v196, 78
    %v2213 = vpop.permute.xlu0 %2212
    %2214 = vrot.lane.b32.xlu0 %v197, 78
    %v2215 = vpop.permute.xlu0 %2214
    %vm2216 = vcmp.lt.s32.totalorder %v203, 78
    %v2217 = vsel %vm2216, %v2213, %v2215
    %v2218 = vsel %vm2216, %v2215, %v2213
    %s2219 = scalar_lea.vmem %s1, 94
    %v2220 = vld [vmem:[%s2219] sm:$0x3]
    %v2222 = vlaneseq
    %v2223 = vshrl.u32 %v2222, 7
    %v2224 = vsub.s32 0, %v2223
    %v2225 = vrot.slane %v2220, %v2224
    %v2226 = vlaneseq
    %v2227 = vshrl.u32 %v2226, 7
    %v2228 = vsub.s32 1, %v2227
    %v2229 = vrot.slane %v2220, %v2228
    %v2232 = vmul.f32 %v2225, %v2217
    %v2233 = vmul.f32 %v2229, %v2218
    %s2234 = scalar_lea.vmem %s2, 752
    %v2235 = vld [vmem:[%s2234] sm:$0xff]
    %v2236 = vld [vmem:[%s2234 + $0x8] sm:$0xff]
    %2238 = vset.pattern.permute.xlu0 0
    %2239 = vperm.xlu0 %2238, %v2235
    %v2240 = vpop.permute.xlu0 %2239
    %v2242 = vmul.f32 %v2240, %v2232
    %v2243 = vmul.f32 %v2240, %v2233
    %v2244 = vadd.f32 %v2201, %v2242
    %v2245 = vadd.f32 %v2202, %v2243
    %2247 = vset.pattern.permute.xlu0 0
    %2248 = vperm.xlu0 %2247, %v2236
    %v2249 = vpop.permute.xlu0 %2248
    %v2251 = vmul.f32 %v2249, %v2232
    %v2252 = vmul.f32 %v2249, %v2233
    %v2253 = vadd.f32 %v2210, %v2251
    %v2254 = vadd.f32 %v2211, %v2252
    %2255 = vrot.lane.b32.xlu0 %v196, 77
    %v2256 = vpop.permute.xlu0 %2255
    %2257 = vrot.lane.b32.xlu0 %v197, 77
    %v2258 = vpop.permute.xlu0 %2257
    %vm2259 = vcmp.lt.s32.totalorder %v203, 77
    %v2260 = vsel %vm2259, %v2256, %v2258
    %v2261 = vsel %vm2259, %v2258, %v2256
    %s2262 = scalar_lea.vmem %s1, 96
    %v2263 = vld [vmem:[%s2262] sm:$0x3]
    %v2265 = vlaneseq
    %v2266 = vshrl.u32 %v2265, 7
    %v2267 = vsub.s32 0, %v2266
    %v2268 = vrot.slane %v2263, %v2267
    %v2269 = vlaneseq
    %v2270 = vshrl.u32 %v2269, 7
    %v2271 = vsub.s32 1, %v2270
    %v2272 = vrot.slane %v2263, %v2271
    %v2275 = vmul.f32 %v2268, %v2260
    %v2276 = vmul.f32 %v2272, %v2261
    %s2277 = scalar_lea.vmem %s2, 768
    %v2278 = vld [vmem:[%s2277] sm:$0xff]
    %v2279 = vld [vmem:[%s2277 + $0x8] sm:$0xff]
    %2281 = vset.pattern.permute.xlu0 0
    %2282 = vperm.xlu0 %2281, %v2278
    %v2283 = vpop.permute.xlu0 %2282
    %v2285 = vmul.f32 %v2283, %v2275
    %v2286 = vmul.f32 %v2283, %v2276
    %v2287 = vadd.f32 %v2244, %v2285
    %v2288 = vadd.f32 %v2245, %v2286
    %2290 = vset.pattern.permute.xlu0 0
    %2291 = vperm.xlu0 %2290, %v2279
    %v2292 = vpop.permute.xlu0 %2291
    %v2294 = vmul.f32 %v2292, %v2275
    %v2295 = vmul.f32 %v2292, %v2276
    %v2296 = vadd.f32 %v2253, %v2294
    %v2297 = vadd.f32 %v2254, %v2295
    %v2300 = vrot.slane %v2287, 2
    %v2301 = vrot.slane %v2288, 2
    %v2304 = vadd.f32 %v2287, %v2300
    %v2305 = vadd.f32 %v2288, %v2301
    %v2306 = vrot.slane %v2287, 4
    %v2307 = vrot.slane %v2288, 4
    %v2310 = vadd.f32 %v2304, %v2306
    %v2311 = vadd.f32 %v2305, %v2307
    %v2312 = vrot.slane %v2287, 6
    %v2313 = vrot.slane %v2288, 6
    %v2316 = vadd.f32 %v2310, %v2312
    %v2317 = vadd.f32 %v2311, %v2313
    %v2320 = vrot.slane %v2296, 2
    %v2321 = vrot.slane %v2297, 2
    %v2324 = vadd.f32 %v2296, %v2320
    %v2325 = vadd.f32 %v2297, %v2321
    %v2326 = vrot.slane %v2296, 4
    %v2327 = vrot.slane %v2297, 4
    %v2330 = vadd.f32 %v2324, %v2326
    %v2331 = vadd.f32 %v2325, %v2327
    %v2332 = vrot.slane %v2296, 6
    %v2333 = vrot.slane %v2297, 6
    %v2336 = vadd.f32 %v2330, %v2332
    %v2337 = vadd.f32 %v2331, %v2333
    %v2338 = vmax.f32 %v2316, 0.0
    %v2339 = vmax.f32 %v2317, 0.0
    %v2340 = vxor.u32 %v2338, 2147483648
    %v2341 = vxor.u32 %v2339, 2147483648
    %v2342 = vmul.f32 %v2340, 1.442695
    %v2343 = vpow.pop %v2342
    %v2344 = vmul.f32 %v2341, 1.442695
    %v2345 = vpow.pop %v2344
    %v2346 = vadd.f32 %v2343, 1.0
    %v2347 = vadd.f32 %v2345, 1.0
    %v2348 = vrcp.pop %v2346
    %v2349 = vmul.f32 1.0, %v2348
    %v2350 = vrcp.pop %v2347
    %v2351 = vmul.f32 1.0, %v2350
    %v2354 = vcombine.low %v2349, %v2351
    %v2356 = vunpack.c.l.s4 1966171168
    %v2357 = vunpack.c.0.s8 %v2356
    %v2358 = vlaneseq
    %v2359 = vshrl.u32 %v2358, 7
    %v2360 = vsub.s32 %v2357, %v2359
    %v2361 = vrot.slane %v2354, %v2360
    %v2362 = vcombine.high %v2361, %v2361
    %v2364 = vunpack.c.l.s4 1966171168
    %v2365 = vunpack.c.0.s8 %v2364
    %v2366 = vlaneseq
    %v2367 = vshrl.u32 %v2366, 7
    %v2368 = vsub.s32 %v2365, %v2367
    %v2369 = vrot.slane %v2361, %v2368
    %v2371 = vunpack.c.l.s4 1966171168
    %v2372 = vunpack.c.0.s8 %v2371
    %v2373 = vlaneseq
    %v2374 = vshrl.u32 %v2373, 7
    %v2375 = vsub.s32 %v2372, %v2374
    %v2376 = vrot.slane %v2362, %v2375
    %v2379 = vlaneseq
    %vm2380 = vcmp.ge.s32.totalorder %v2379, 0
    %vm2381 = vcmp.lt.s32.totalorder %v2379, 256
    %vm2382 = vmand %vm2380, %vm2381
    %2383 = vst.msk [vmem:[#allocation2] ss:$2 sm:$0x3] %vm2382, %v2369
    %s2384 = scalar_lea.vmem [#allocation2], 4
    %2385 = vst.msk [vmem:[%s2384] ss:$2 sm:$0x3] %vm2382, %v2376
    %v2386 = vmax.f32 %v2336, 0.0
    %v2387 = vmax.f32 %v2337, 0.0
    %v2388 = vxor.u32 %v2386, 2147483648
    %v2389 = vxor.u32 %v2387, 2147483648
    %v2390 = vmul.f32 %v2388, 1.442695
    %v2391 = vpow.pop %v2390
    %v2392 = vmul.f32 %v2389, 1.442695
    %v2393 = vpow.pop %v2392
    %v2394 = vadd.f32 %v2391, 1.0
    %v2395 = vadd.f32 %v2393, 1.0
    %v2396 = vrcp.pop %v2394
    %v2397 = vmul.f32 1.0, %v2396
    %v2398 = vrcp.pop %v2395
    %v2399 = vmul.f32 1.0, %v2398
    %v2402 = vcombine.low %v2397, %v2399
    %v2404 = vunpack.c.l.s4 1966171168
    %v2405 = vunpack.c.0.s8 %v2404
    %v2406 = vlaneseq
    %v2407 = vshrl.u32 %v2406, 7
    %v2408 = vsub.s32 %v2405, %v2407
    %v2409 = vrot.slane %v2402, %v2408
    %v2410 = vcombine.high %v2409, %v2409
    %v2412 = vunpack.c.l.s4 1966171168
    %v2413 = vunpack.c.0.s8 %v2412
    %v2414 = vlaneseq
    %v2415 = vshrl.u32 %v2414, 7
    %v2416 = vsub.s32 %v2413, %v2415
    %v2417 = vrot.slane %v2409, %v2416
    %v2419 = vunpack.c.l.s4 1966171168
    %v2420 = vunpack.c.0.s8 %v2419
    %v2421 = vlaneseq
    %v2422 = vshrl.u32 %v2421, 7
    %v2423 = vsub.s32 %v2420, %v2422
    %v2424 = vrot.slane %v2410, %v2423
    %s2427 = scalar_lea.vmem [#allocation2], 1
    %2428 = vst.msk [vmem:[%s2427] ss:$2 sm:$0x3] %vm2382, %v2417
    %s2429 = scalar_lea.vmem [#allocation2], 5
    %2430 = vst.msk [vmem:[%s2429] ss:$2 sm:$0x3] %vm2382, %v2424
    // Predicated region
    $region14: #{tpu_custom_call.1} parent=1 // pred_check
      _
    $region15: #{tpu_custom_call.1} parent=1 // pred_check_branch
      %2432 = sbr.rel (0) target = $region17
    $region16: #{tpu_custom_call.1} parent=1 // pred_region
      %s2434 = ssub.s32 128, 128
      %2435 = vsyncadd [#allocation3], %s2434
      %s2436 = sshll.u32 [#allocation2], 4
      %s2437 = int_to_ptr.vmem [resolvable:$true] %s2436
      %2442 = dma.vmem_to_hbm [thread:$0]  %s2437, 128, %s3, [#allocation3], 64, 64, 4
    $region17: #{tpu_custom_call.1} parent=1 // pred_fallthru
      _
    // Predicated region
    $region18: #{tpu_custom_call.1} parent=1 // pred_check
      _
    $region19: #{tpu_custom_call.1} parent=1 // pred_check_branch
      %2444 = sbr.rel (0) target = $region21
    $region20: #{tpu_custom_call.1} parent=1 // pred_region
      %2445 = dma.done [#allocation3], 128
    $region21: #{tpu_custom_call.1} parent=1 // pred_fallthru
      _
    %2446 = vsyncpa [#allocation3], 1

</llo_original>
